<compile_context>
chip_gen: v7x
topology: tpu7x:2x2x1
jax: 0.10.0
libtpu: 0.0.40
codegen_flags: <defaults>
</compile_context>

<pallas_src>
import functools
import math

import jax
import jax.numpy as jnp
from jax import lax
from jax.experimental import pallas as pl
from jax.experimental.pallas import tpu as pltpu

VMEM = pltpu.MemorySpace.VMEM


def _vmem_specs(n):
    return [pl.BlockSpec(memory_space=VMEM) for _ in range(n)]


def _dot(a, b):
    return jnp.dot(a, b, preferred_element_type=jnp.float32)


def _ln(x, gamma, beta, eps=1e-5):
    mu = jnp.mean(x, axis=-1, keepdims=True)
    var = jnp.mean((x - mu) ** 2, axis=-1, keepdims=True)
    return (x - mu) * lax.rsqrt(var + eps) * gamma + beta


# --------------------------------------------------------------------- relative tables
def make_rel_tables(Lq, Lk, head_dim):
    """Host/XLA precompute (outside kernels).  freq_m = 10000^(-2m/hd), matching the ref.

    rel[i,j] = sum_m qv[i,2m]*sin((i-j)f_m) + qv[i,2m+1]*cos((i-j)f_m)
             = (qv*Pa) @ C2^T + (qv*Pb) @ S2^T      (angle-addition identity)
    """
    m = jnp.arange(head_dim // 2, dtype=jnp.float32)
    freq = 10000.0 ** (-2.0 * m / head_dim)                    # (hd/2,)
    qi = jnp.arange(Lq, dtype=jnp.float32)[:, None] * freq     # (Lq, hd/2)
    kj = jnp.arange(Lk, dtype=jnp.float32)[:, None] * freq     # (Lk, hd/2)

    def interleave(a, b):                                      # columns [a0,b0,a1,b1,...]
        return jnp.stack([a, b], axis=-1).reshape(a.shape[0], -1)

    pa = interleave(jnp.sin(qi), jnp.cos(qi))                  # (Lq, hd)
    pb = interleave(-jnp.cos(qi), jnp.sin(qi))                 # (Lq, hd)
    c2 = interleave(jnp.cos(kj), jnp.cos(kj))                  # (Lk, hd)
    s2 = interleave(jnp.sin(kj), jnp.sin(kj))                  # (Lk, hd)
    return pa, pb, c2.T, s2.T                                  # c2t/s2t: (hd, Lk)


# ------------------------------------------------------------------- in-kernel attention
def _mha(value, key, query, wq, wk, wv, u, v, wo_ref, bo, pa, pb, c2t, s2t,
         *, heads, head_dim, scale, mask):
    """TENER relative multi-head attention; all operands already in VMEM/vregs."""
    Lq = query.shape[0]
    Lk = key.shape[0]
    D = wo_ref.shape[2]

    # fused full-width projections: one (L,D)@(D,D) each, MXU-friendly
    q_full = _dot(query, wq)
    k_full = _dot(key, wk)
    v_full = _dot(value, wv)
    qu = q_full + u          # u, v stored flattened (1, D) -> per-head bias via broadcast
    qv = q_full + v

    if mask:
        i_idx = lax.broadcasted_iota(jnp.int32, (Lq, Lk), 0)
        j_idx = lax.broadcasted_iota(jnp.int32, (Lq, Lk), 1)

    out = jnp.zeros((Lq, D), jnp.float32)
    for h in range(heads):                              # heads is a small static constant
        sl = slice(h * head_dim, (h + 1) * head_dim)
        k_h = k_full[:, sl]
        v_h = v_full[:, sl]
        qu_h = qu[:, sl]
        qv_h = qv[:, sl]

        # content term + global content bias:  (q + u) @ k^T
        att = jnp.dot(qu_h, k_h.T, preferred_element_type=jnp.float32)      # (Lq, Lk)
        # relative-position term: two MXU matmuls against precomputed trig tables
        att = att + _dot(qv_h * pa, c2t) + _dot(qv_h * pb, s2t)

        if mask:
            att = jnp.where(j_idx <= i_idx, att, jnp.float32(-1e18))
        if scale:
            att = att * (head_dim ** -0.5)

        att = att - jnp.max(att, axis=-1, keepdims=True)
        p = jnp.exp(att)
        p = p * pl.reciprocal(jnp.sum(p, axis=-1, keepdims=True), approx=True)

        head_out = _dot(p, v_h)                          # (Lq, hd)
        out = out + _dot(head_out, wo_ref[h])            # wo pre-split per head: (hd, D)
    return out + bo


# ------------------------------------------------------ fused transformer-block kernel
def _tblock_kernel(value_ref, key_ref, query_ref,
                   wq_ref, wk_ref, wv_ref, u_ref, v_ref, wo_ref, bo_ref,
                   pa_ref, pb_ref, c2t_ref, s2t_ref,
                   g0_ref, b0_ref, w1_ref, b1_ref, w2_ref, b2_ref, g1_ref, be1_ref,
                   out_ref, *, heads, head_dim, scale, mask):
    query = query_ref[...]
    att = _mha(value_ref[...], key_ref[...], query,
               wq_ref[...], wk_ref[...], wv_ref[...], u_ref[...], v_ref[...],
               wo_ref, bo_ref[...],
               pa_ref[...], pb_ref[...], c2t_ref[...], s2t_ref[...],
               heads=heads, head_dim=head_dim, scale=scale, mask=mask)
    x = _ln(att + query, g0_ref[...], b0_ref[...])
    h = _dot(x, w1_ref[...]) + b1_ref[...]
    h = jnp.where(h > 0, h, jnp.exp(jnp.minimum(h, 0.0)) - 1.0)     # ELU(alpha=1)
    ff = _dot(h, w2_ref[...]) + b2_ref[...]
    out_ref[...] = _ln(ff + x, g1_ref[...], be1_ref[...])


def transformer_block_call(value, key, query, p, tables, *, scale, mask):
    a = p['attn']
    heads, head_dim, D = a['wo'].shape
    Lq = query.shape[0]
    pa, pb, c2t, s2t = tables
    kern = functools.partial(_tblock_kernel, heads=heads, head_dim=head_dim,
                             scale=scale, mask=mask)
    return pl.pallas_call(
        kern,
        out_shape=jax.ShapeDtypeStruct((Lq, D), jnp.float32),
        in_specs=_vmem_specs(22),
        out_specs=pl.BlockSpec(memory_space=VMEM),
    )(value, key, query,
      a['wq'], a['wk'], a['wv'], a['u'], a['v'], a['wo'], a['bo'],
      pa, pb, c2t, s2t,
      p['ln0_g'], p['ln0_b'], p['w1'], p['b1'], p['w2'], p['b2'],
      p['ln1_g'], p['ln1_b'])


# --------------------------------------------- fused decoder self-attention + add & LN
def _attn_addnorm_kernel(x_ref, wq_ref, wk_ref, wv_ref, u_ref, v_ref, wo_ref, bo_ref,
                         pa_ref, pb_ref, c2t_ref, s2t_ref, g_ref, b_ref, out_ref,
                         *, heads, head_dim, scale, mask):
    x = x_ref[...]
    att = _mha(x, x, x,
               wq_ref[...], wk_ref[...], wv_ref[...], u_ref[...], v_ref[...],
               wo_ref, bo_ref[...],
               pa_ref[...], pb_ref[...], c2t_ref[...], s2t_ref[...],
               heads=heads, head_dim=head_dim, scale=scale, mask=mask)
    out_ref[...] = _ln(att + x, g_ref[...], b_ref[...])


def self_attn_addnorm_call(x, attn_p, tables, norm_g, norm_b, *, scale, mask):
    heads, head_dim, D = attn_p['wo'].shape
    L = x.shape[0]
    pa, pb, c2t, s2t = tables
    kern = functools.partial(_attn_addnorm_kernel, heads=heads, head_dim=head_dim,
                             scale=scale, mask=mask)
    return pl.pallas_call(
        kern,
        out_shape=jax.ShapeDtypeStruct((L, D), jnp.float32),
        in_specs=_vmem_specs(14),
        out_specs=pl.BlockSpec(memory_space=VMEM),
    )(x, attn_p['wq'], attn_p['wk'], attn_p['wv'], attn_p['u'], attn_p['v'],
      attn_p['wo'], attn_p['bo'], pa, pb, c2t, s2t, norm_g, norm_b)


# -------------------------------------------------------------- classification head
def _head_softmax_kernel(x_ref, w_ref, b_ref, out_ref):
    logits = _dot(x_ref[...], w_ref[...]) + b_ref[...]
    logits = logits - jnp.max(logits, axis=-1, keepdims=True)
    e = jnp.exp(logits)
    out_ref[...] = e * pl.reciprocal(jnp.sum(e, axis=-1, keepdims=True), approx=True)


def head_softmax_call(x, w, b):
    return pl.pallas_call(
        _head_softmax_kernel,
        out_shape=jax.ShapeDtypeStruct((x.shape[0], w.shape[1]), jnp.float32),
        in_specs=_vmem_specs(3),
        out_specs=pl.BlockSpec(memory_space=VMEM),
    )(x, w, b)


# ---------------------------------------------------------------------------- model glue
def encoder_fwd(x, enc_params, *, mask=False, scale=True):
    L, _ = x.shape
    _, hd, _ = enc_params[0]['attn']['wo'].shape
    tables = make_rel_tables(L, L, hd)          # shared by all encoder layers
    out = x
    for p in enc_params:
        out = transformer_block_call(out, out, out, p, tables, scale=scale, mask=mask)
    return out


def decoder_fwd_device(enc, dp, *, max_lengh):
    """Fixed-shape greedy decode: lax.while_loop on device, compiled once."""
    Lenc, D = enc.shape
    layers = dp['layers']
    _, hd, _ = layers[0]['attn']['wo'].shape
    self_tables = make_rel_tables(max_lengh, max_lengh, hd)
    cross_tables = make_rel_tables(max_lengh, Lenc, hd)

    EOS = dp['EOS']                              # (1, D)
    vocab = dp['vocab']                          # (C, D)
    C = vocab.shape[0]

    # Padded rows never influence valid rows: self-attention is causal and every other
    # op (cross-attn, LN, FFN) is row-wise, so row (cur-1) is exact regardless of padding.
    seq0 = jnp.zeros((max_lengh, D), jnp.float32).at[0].set(-EOS[0])     # BOS = -EOS
    idx0 = jnp.full((max_lengh,), -1, jnp.int32).at[0].set(C - 2)

    def dec_block(buf, lp):
        q = self_attn_addnorm_call(buf, lp['attn'], self_tables,
                                   lp['norm_g'], lp['norm_b'],
                                   scale=False, mask=True)
        return transformer_block_call(enc, enc, q, lp['tblock'], cross_tables,
                                      scale=False, mask=False)

    def cond(state):
        _, _, cur, done = state
        return jnp.logical_and(cur < max_lengh, jnp.logical_not(done))

    def body(state):
        seq, idxs, cur, done = state
        buf = seq
        for lp in layers:                                           # static layer loop
            buf = dec_block(buf, lp)
        last = lax.dynamic_slice_in_dim(buf, cur - 1, 1, axis=0)    # (1, D)
        probs = head_softmax_call(last, dp['w_out'], dp['b_out'])   # (1, C)
        out_idx = jnp.argmax(probs[0]).astype(jnp.int32)
        tok = lax.dynamic_slice_in_dim(vocab, out_idx, 1, axis=0)   # (1, D)
        seq = lax.dynamic_update_slice_in_dim(seq, tok, cur, axis=0)
        idxs = lax.dynamic_update_slice(idxs, out_idx[None], (cur,))
        done = jnp.all(jnp.isclose(tok, EOS))
        return seq, idxs, cur + 1, done

    # TODO(synk): reference decoder.forward references an undefined name `layers` and
    # compares a vector against EOS with `!=` (ambiguous); we use self.layers semantics
    # and "last token == EOS vector" as the stop condition.
    done0 = jnp.all(jnp.isclose(-EOS, EOS))
    seq, idxs, cur, _ = lax.while_loop(
        cond, body, (seq0, idx0, jnp.array(1, jnp.int32), done0))
    return seq, idxs, cur


@functools.partial(jax.jit, static_argnames=("enc_mask", "enc_scale", "max_lengh"))
def _tener_forward_device(x, params, *, enc_mask, enc_scale, max_lengh):
    enc = encoder_fwd(x, params['encoder'], mask=enc_mask, scale=enc_scale)
    return decoder_fwd_device(enc, params['decoder'], max_lengh=max_lengh)


def tener_forward(x, params, Enc_mask=False, Enc_scale=True, max_lengh=4):
    seq, idxs, cur = _tener_forward_device(
        x, params, enc_mask=bool(Enc_mask), enc_scale=bool(Enc_scale),
        max_lengh=int(max_lengh))
    n = int(cur)
    idx_host = jax.device_get(idxs)[:n]
    tokens = [f"token_{int(i)}" for i in idx_host]   # stands in for embedding.idx2token
    return tokens, seq[:n]


# ------------------------------------------------------------------- deterministic init
def _uniform(key, shape, bound):
    return jax.random.uniform(key, shape, jnp.float32, -bound, bound)


def init_attention_params(key, model_dim, heads):
    hd = model_dim // heads
    assert hd % 2 == 0, "head_dim must be even"
    ks = jax.random.split(key, 7)
    b = 1.0 / math.sqrt(model_dim)
    return dict(
        wq=_uniform(ks[0], (model_dim, model_dim), b),     # heads fused along columns
        wk=_uniform(ks[1], (model_dim, model_dim), b),
        wv=_uniform(ks[2], (model_dim, model_dim), b),
        u=jax.random.uniform(ks[3], (1, model_dim), jnp.float32),   # flattened (heads*hd)
        v=jax.random.uniform(ks[4], (1, model_dim), jnp.float32),
        wo=_uniform(ks[5], (heads, hd, model_dim), b),     # output proj pre-split per head
        bo=_uniform(ks[6], (1, model_dim), b),
    )


def init_tblock_params(key, model_dim, heads, expansion=4):
    ks = jax.random.split(key, 5)
    hidden = model_dim * expansion
    b1 = 1.0 / math.sqrt(model_dim)
    b2 = 1.0 / math.sqrt(hidden)
    return dict(
        attn=init_attention_params(ks[0], model_dim, heads),
        ln0_g=jnp.ones((1, model_dim), jnp.float32),
        ln0_b=jnp.zeros((1, model_dim), jnp.float32),
        w1=_uniform(ks[1], (model_dim, hidden), b1),
        b1=_uniform(ks[2], (1, hidden), b1),
        w2=_uniform(ks[3], (hidden, model_dim), b2),
        b2=_uniform(ks[4], (1, model_dim), b2),
        ln1_g=jnp.ones((1, model_dim), jnp.float32),
        ln1_b=jnp.zeros((1, model_dim), jnp.float32),
    )


def init_dblock_params(key, model_dim, heads):
    ks = jax.random.split(key, 2)
    return dict(
        attn=init_attention_params(ks[0], model_dim, heads),
        norm_g=jnp.ones((1, model_dim), jnp.float32),
        norm_b=jnp.zeros((1, model_dim), jnp.float32),
        tblock=init_tblock_params(ks[1], model_dim, heads),
    )


def init_tener_params(key, model_dim, heads_enc, heads_dec, n_enc, n_dec, num_class):
    ks = jax.random.split(key, n_enc + n_dec + 3)
    enc = [init_tblock_params(ks[i], model_dim, heads_enc) for i in range(n_enc)]
    dec = [init_dblock_params(ks[n_enc + i], model_dim, heads_dec) for i in range(n_dec)]
    b = 1.0 / math.sqrt(model_dim)
    w_out = _uniform(ks[-3], (model_dim, num_class), b)
    b_out = _uniform(ks[-2], (1, num_class), b)
    vocab = jax.random.normal(ks[-1], (num_class, model_dim), jnp.float32)
    EOS = vocab[num_class - 1:num_class, :]             # synthetic EOS_Vector, shape (1, D)
    return dict(encoder=enc,
                decoder=dict(layers=dec, w_out=w_out, b_out=b_out, vocab=vocab, EOS=EOS))


# -------------------------------------------------------------------------------- main
if __name__ == "__main__":
    model_dim = 32
    heads_enc = 2
    heads_dec = 2
    num_enc_layers = 2
    num_dec_layers = 1
    num_class = 8          # synthetic vocabulary / class count
    seq_len = 8
    max_lengh = 4

    root = jax.random.PRNGKey(0)
    k_params, k_x = jax.random.split(root)
    params = init_tener_params(k_params, model_dim, heads_enc, heads_dec,
                               num_enc_layers, num_dec_layers, num_class)
    x = jax.random.normal(k_x, (seq_len, model_dim), jnp.float32)

    tokens, sequence = tener_forward(x, params, Enc_mask=False, Enc_scale=True,
                                     max_lengh=max_lengh)
    jax.block_until_ready(sequence)
    print("KERNEL_OK")
</pallas_src>

<mosaic_0001>
module attributes {stable_mosaic.version = 11 : i64} {
  func.func @_tblock_kernel(%arg0: memref<8x32xf32, #tpu.memory_space<vmem>>, %arg1: memref<8x32xf32, #tpu.memory_space<vmem>>, %arg2: memref<8x32xf32, #tpu.memory_space<vmem>>, %arg3: memref<32x32xf32, #tpu.memory_space<vmem>>, %arg4: memref<32x32xf32, #tpu.memory_space<vmem>>, %arg5: memref<32x32xf32, #tpu.memory_space<vmem>>, %arg6: memref<1x32xf32, #tpu.memory_space<vmem>>, %arg7: memref<1x32xf32, #tpu.memory_space<vmem>>, %arg8: memref<2x16x32xf32, #tpu.memory_space<vmem>>, %arg9: memref<1x32xf32, #tpu.memory_space<vmem>>, %arg10: memref<8x16xf32, #tpu.memory_space<vmem>>, %arg11: memref<8x16xf32, #tpu.memory_space<vmem>>, %arg12: memref<16x8xf32, #tpu.memory_space<vmem>>, %arg13: memref<16x8xf32, #tpu.memory_space<vmem>>, %arg14: memref<1x32xf32, #tpu.memory_space<vmem>>, %arg15: memref<1x32xf32, #tpu.memory_space<vmem>>, %arg16: memref<32x128xf32, #tpu.memory_space<vmem>>, %arg17: memref<1x128xf32, #tpu.memory_space<vmem>>, %arg18: memref<128x32xf32, #tpu.memory_space<vmem>>, %arg19: memref<1x32xf32, #tpu.memory_space<vmem>>, %arg20: memref<1x32xf32, #tpu.memory_space<vmem>>, %arg21: memref<1x32xf32, #tpu.memory_space<vmem>>, %arg22: memref<8x32xf32, #tpu.memory_space<vmem>>) attributes {dimension_semantics = [], scalar_prefetch = 0 : i64, scratch_operands = 0 : i64, tpu.core_type = #tpu.core_type<tc>} {
    %c0 = arith.constant 0 : index
    %c0_0 = arith.constant 0 : index
    %0 = vector.load %arg2[%c0, %c0_0] : memref<8x32xf32, #tpu.memory_space<vmem>>, vector<8x32xf32>
    %c0_1 = arith.constant 0 : index
    %c0_2 = arith.constant 0 : index
    %1 = vector.load %arg0[%c0_1, %c0_2] : memref<8x32xf32, #tpu.memory_space<vmem>>, vector<8x32xf32>
    %c0_3 = arith.constant 0 : index
    %c0_4 = arith.constant 0 : index
    %2 = vector.load %arg1[%c0_3, %c0_4] : memref<8x32xf32, #tpu.memory_space<vmem>>, vector<8x32xf32>
    %c0_5 = arith.constant 0 : index
    %c0_6 = arith.constant 0 : index
    %3 = vector.load %arg3[%c0_5, %c0_6] : memref<32x32xf32, #tpu.memory_space<vmem>>, vector<32x32xf32>
    %c0_7 = arith.constant 0 : index
    %c0_8 = arith.constant 0 : index
    %4 = vector.load %arg4[%c0_7, %c0_8] : memref<32x32xf32, #tpu.memory_space<vmem>>, vector<32x32xf32>
    %c0_9 = arith.constant 0 : index
    %c0_10 = arith.constant 0 : index
    %5 = vector.load %arg5[%c0_9, %c0_10] : memref<32x32xf32, #tpu.memory_space<vmem>>, vector<32x32xf32>
    %c0_11 = arith.constant 0 : index
    %c0_12 = arith.constant 0 : index
    %6 = vector.load %arg6[%c0_11, %c0_12] : memref<1x32xf32, #tpu.memory_space<vmem>>, vector<1x32xf32>
    %c0_13 = arith.constant 0 : index
    %c0_14 = arith.constant 0 : index
    %7 = vector.load %arg7[%c0_13, %c0_14] : memref<1x32xf32, #tpu.memory_space<vmem>>, vector<1x32xf32>
    %c0_15 = arith.constant 0 : index
    %c0_16 = arith.constant 0 : index
    %8 = vector.load %arg9[%c0_15, %c0_16] : memref<1x32xf32, #tpu.memory_space<vmem>>, vector<1x32xf32>
    %c0_17 = arith.constant 0 : index
    %c0_18 = arith.constant 0 : index
    %9 = vector.load %arg10[%c0_17, %c0_18] : memref<8x16xf32, #tpu.memory_space<vmem>>, vector<8x16xf32>
    %c0_19 = arith.constant 0 : index
    %c0_20 = arith.constant 0 : index
    %10 = vector.load %arg11[%c0_19, %c0_20] : memref<8x16xf32, #tpu.memory_space<vmem>>, vector<8x16xf32>
    %c0_21 = arith.constant 0 : index
    %c0_22 = arith.constant 0 : index
    %11 = vector.load %arg12[%c0_21, %c0_22] : memref<16x8xf32, #tpu.memory_space<vmem>>, vector<16x8xf32>
    %c0_23 = arith.constant 0 : index
    %c0_24 = arith.constant 0 : index
    %12 = vector.load %arg13[%c0_23, %c0_24] : memref<16x8xf32, #tpu.memory_space<vmem>>, vector<16x8xf32>
    %cst = arith.constant dense<0.000000e+00> : vector<8x32xf32>
    %13 = tpu.matmul %0, %3, %cst {dimension_numbers = #tpu.dot_dimension_numbers<[1], [0], [0], [1], [0, 0, 1, 1], [], []>} : vector<8x32xf32>, vector<32x32xf32>, vector<8x32xf32> -> vector<8x32xf32>
    %cst_25 = arith.constant dense<0.000000e+00> : vector<8x32xf32>
    %14 = tpu.matmul %2, %4, %cst_25 {dimension_numbers = #tpu.dot_dimension_numbers<[1], [0], [0], [1], [0, 0, 1, 1], [], []>} : vector<8x32xf32>, vector<32x32xf32>, vector<8x32xf32> -> vector<8x32xf32>
    %cst_26 = arith.constant dense<0.000000e+00> : vector<8x32xf32>
    %15 = tpu.matmul %1, %5, %cst_26 {dimension_numbers = #tpu.dot_dimension_numbers<[1], [0], [0], [1], [0, 0, 1, 1], [], []>} : vector<8x32xf32>, vector<32x32xf32>, vector<8x32xf32> -> vector<8x32xf32>
    %16 = vector.broadcast %6 : vector<1x32xf32> to vector<8x32xf32>
    %17 = arith.addf %13, %16 : vector<8x32xf32>
    %18 = vector.broadcast %7 : vector<1x32xf32> to vector<8x32xf32>
    %19 = arith.addf %13, %18 : vector<8x32xf32>
    %cst_27 = arith.constant 0.000000e+00 : f32
    %20 = vector.broadcast %cst_27 : f32 to vector<8x32xf32>
    %21 = vector.extract_strided_slice %14 {offsets = [0, 0], sizes = [8, 16], strides = [1, 1]} : vector<8x32xf32> to vector<8x16xf32>
    %22 = vector.extract_strided_slice %15 {offsets = [0, 0], sizes = [8, 16], strides = [1, 1]} : vector<8x32xf32> to vector<8x16xf32>
    %23 = vector.extract_strided_slice %17 {offsets = [0, 0], sizes = [8, 16], strides = [1, 1]} : vector<8x32xf32> to vector<8x16xf32>
    %24 = vector.extract_strided_slice %19 {offsets = [0, 0], sizes = [8, 16], strides = [1, 1]} : vector<8x32xf32> to vector<8x16xf32>
    %25 = tpu.transpose %21, [1, 0] : vector<8x16xf32> -> vector<16x8xf32>
    %cst_28 = arith.constant dense<0.000000e+00> : vector<8x8xf32>
    %26 = tpu.matmul %23, %25, %cst_28 {dimension_numbers = #tpu.dot_dimension_numbers<[1], [0], [0], [1], [0, 0, 1, 1], [], []>} : vector<8x16xf32>, vector<16x8xf32>, vector<8x8xf32> -> vector<8x8xf32>
    %27 = arith.mulf %24, %9 : vector<8x16xf32>
    %cst_29 = arith.constant dense<0.000000e+00> : vector<8x8xf32>
    %28 = tpu.matmul %27, %11, %cst_29 {dimension_numbers = #tpu.dot_dimension_numbers<[1], [0], [0], [1], [0, 0, 1, 1], [], []>} : vector<8x16xf32>, vector<16x8xf32>, vector<8x8xf32> -> vector<8x8xf32>
    %29 = arith.addf %26, %28 : vector<8x8xf32>
    %30 = arith.mulf %24, %10 : vector<8x16xf32>
    %cst_30 = arith.constant dense<0.000000e+00> : vector<8x8xf32>
    %31 = tpu.matmul %30, %12, %cst_30 {dimension_numbers = #tpu.dot_dimension_numbers<[1], [0], [0], [1], [0, 0, 1, 1], [], []>} : vector<8x16xf32>, vector<16x8xf32>, vector<8x8xf32> -> vector<8x8xf32>
    %32 = arith.addf %29, %31 : vector<8x8xf32>
    %cst_31 = arith.constant 2.500000e-01 : f32
    %33 = vector.broadcast %cst_31 : f32 to vector<8x8xf32>
    %34 = arith.mulf %32, %33 : vector<8x8xf32>
    %cst_32 = arith.constant dense<0xFF800000> : vector<8xf32>
    %35 = vector.multi_reduction <maximumf>, %34, %cst_32 [1] : vector<8x8xf32> to vector<8xf32>
    %36 = vector.shape_cast %35 : vector<8xf32> to vector<8x1xf32>
    %37 = vector.broadcast %36 : vector<8x1xf32> to vector<8x8xf32>
    %38 = arith.subf %34, %37 : vector<8x8xf32>
    %39 = math.exp %38 : vector<8x8xf32>
    %cst_33 = arith.constant dense<0.000000e+00> : vector<8xf32>
    %40 = vector.multi_reduction <add>, %39, %cst_33 [1] : vector<8x8xf32> to vector<8xf32>
    %41 = vector.shape_cast %40 : vector<8xf32> to vector<8x1xf32>
    %42 = tpu.reciprocal %41 {approx = true} : vector<8x1xf32> -> vector<8x1xf32>
    %43 = vector.broadcast %42 : vector<8x1xf32> to vector<8x8xf32>
    %44 = arith.mulf %39, %43 : vector<8x8xf32>
    %cst_34 = arith.constant dense<0.000000e+00> : vector<8x16xf32>
    %45 = tpu.matmul %44, %22, %cst_34 {dimension_numbers = #tpu.dot_dimension_numbers<[1], [0], [0], [1], [0, 0, 1, 1], [], []>} : vector<8x8xf32>, vector<8x16xf32>, vector<8x16xf32> -> vector<8x16xf32>
    %c0_35 = arith.constant 0 : index
    %c0_36 = arith.constant 0 : index
    %c0_37 = arith.constant 0 : index
    %46 = vector.load %arg8[%c0_35, %c0_36, %c0_37] : memref<2x16x32xf32, #tpu.memory_space<vmem>>, vector<1x16x32xf32>
    %47 = vector.shape_cast %46 : vector<1x16x32xf32> to vector<16x32xf32>
    %cst_38 = arith.constant dense<0.000000e+00> : vector<8x32xf32>
    %48 = tpu.matmul %45, %47, %cst_38 {dimension_numbers = #tpu.dot_dimension_numbers<[1], [0], [0], [1], [0, 0, 1, 1], [], []>} : vector<8x16xf32>, vector<16x32xf32>, vector<8x32xf32> -> vector<8x32xf32>
    %49 = arith.addf %20, %48 : vector<8x32xf32>
    %50 = vector.extract_strided_slice %14 {offsets = [0, 16], sizes = [8, 16], strides = [1, 1]} : vector<8x32xf32> to vector<8x16xf32>
    %51 = vector.extract_strided_slice %15 {offsets = [0, 16], sizes = [8, 16], strides = [1, 1]} : vector<8x32xf32> to vector<8x16xf32>
    %52 = vector.extract_strided_slice %17 {offsets = [0, 16], sizes = [8, 16], strides = [1, 1]} : vector<8x32xf32> to vector<8x16xf32>
    %53 = vector.extract_strided_slice %19 {offsets = [0, 16], sizes = [8, 16], strides = [1, 1]} : vector<8x32xf32> to vector<8x16xf32>
    %54 = tpu.transpose %50, [1, 0] : vector<8x16xf32> -> vector<16x8xf32>
    %cst_39 = arith.constant dense<0.000000e+00> : vector<8x8xf32>
    %55 = tpu.matmul %52, %54, %cst_39 {dimension_numbers = #tpu.dot_dimension_numbers<[1], [0], [0], [1], [0, 0, 1, 1], [], []>} : vector<8x16xf32>, vector<16x8xf32>, vector<8x8xf32> -> vector<8x8xf32>
    %56 = arith.mulf %53, %9 : vector<8x16xf32>
    %cst_40 = arith.constant dense<0.000000e+00> : vector<8x8xf32>
    %57 = tpu.matmul %56, %11, %cst_40 {dimension_numbers = #tpu.dot_dimension_numbers<[1], [0], [0], [1], [0, 0, 1, 1], [], []>} : vector<8x16xf32>, vector<16x8xf32>, vector<8x8xf32> -> vector<8x8xf32>
    %58 = arith.addf %55, %57 : vector<8x8xf32>
    %59 = arith.mulf %53, %10 : vector<8x16xf32>
    %cst_41 = arith.constant dense<0.000000e+00> : vector<8x8xf32>
    %60 = tpu.matmul %59, %12, %cst_41 {dimension_numbers = #tpu.dot_dimension_numbers<[1], [0], [0], [1], [0, 0, 1, 1], [], []>} : vector<8x16xf32>, vector<16x8xf32>, vector<8x8xf32> -> vector<8x8xf32>
    %61 = arith.addf %58, %60 : vector<8x8xf32>
    %cst_42 = arith.constant 2.500000e-01 : f32
    %62 = vector.broadcast %cst_42 : f32 to vector<8x8xf32>
    %63 = arith.mulf %61, %62 : vector<8x8xf32>
    %cst_43 = arith.constant dense<0xFF800000> : vector<8xf32>
    %64 = vector.multi_reduction <maximumf>, %63, %cst_43 [1] : vector<8x8xf32> to vector<8xf32>
    %65 = vector.shape_cast %64 : vector<8xf32> to vector<8x1xf32>
    %66 = vector.broadcast %65 : vector<8x1xf32> to vector<8x8xf32>
    %67 = arith.subf %63, %66 : vector<8x8xf32>
    %68 = math.exp %67 : vector<8x8xf32>
    %cst_44 = arith.constant dense<0.000000e+00> : vector<8xf32>
    %69 = vector.multi_reduction <add>, %68, %cst_44 [1] : vector<8x8xf32> to vector<8xf32>
    %70 = vector.shape_cast %69 : vector<8xf32> to vector<8x1xf32>
    %71 = tpu.reciprocal %70 {approx = true} : vector<8x1xf32> -> vector<8x1xf32>
    %72 = vector.broadcast %71 : vector<8x1xf32> to vector<8x8xf32>
    %73 = arith.mulf %68, %72 : vector<8x8xf32>
    %cst_45 = arith.constant dense<0.000000e+00> : vector<8x16xf32>
    %74 = tpu.matmul %73, %51, %cst_45 {dimension_numbers = #tpu.dot_dimension_numbers<[1], [0], [0], [1], [0, 0, 1, 1], [], []>} : vector<8x8xf32>, vector<8x16xf32>, vector<8x16xf32> -> vector<8x16xf32>
    %c1 = arith.constant 1 : index
    %c0_46 = arith.constant 0 : index
    %c0_47 = arith.constant 0 : index
    %75 = vector.load %arg8[%c1, %c0_46, %c0_47] : memref<2x16x32xf32, #tpu.memory_space<vmem>>, vector<1x16x32xf32>
    %76 = vector.shape_cast %75 : vector<1x16x32xf32> to vector<16x32xf32>
    %cst_48 = arith.constant dense<0.000000e+00> : vector<8x32xf32>
    %77 = tpu.matmul %74, %76, %cst_48 {dimension_numbers = #tpu.dot_dimension_numbers<[1], [0], [0], [1], [0, 0, 1, 1], [], []>} : vector<8x16xf32>, vector<16x32xf32>, vector<8x32xf32> -> vector<8x32xf32>
    %78 = arith.addf %49, %77 : vector<8x32xf32>
    %79 = vector.broadcast %8 : vector<1x32xf32> to vector<8x32xf32>
    %80 = arith.addf %78, %79 : vector<8x32xf32>
    %81 = arith.addf %80, %0 : vector<8x32xf32>
    %c0_49 = arith.constant 0 : index
    %c0_50 = arith.constant 0 : index
    %82 = vector.load %arg14[%c0_49, %c0_50] : memref<1x32xf32, #tpu.memory_space<vmem>>, vector<1x32xf32>
    %c0_51 = arith.constant 0 : index
    %c0_52 = arith.constant 0 : index
    %83 = vector.load %arg15[%c0_51, %c0_52] : memref<1x32xf32, #tpu.memory_space<vmem>>, vector<1x32xf32>
    %cst_53 = arith.constant dense<0.000000e+00> : vector<8xf32>
    %84 = vector.multi_reduction <add>, %81, %cst_53 [1] : vector<8x32xf32> to vector<8xf32>
    %85 = vector.shape_cast %84 : vector<8xf32> to vector<8x1xf32>
    %cst_54 = arith.constant 3.200000e+01 : f32
    %86 = vector.broadcast %cst_54 : f32 to vector<8x1xf32>
    %87 = arith.divf %85, %86 : vector<8x1xf32>
    %88 = vector.broadcast %87 : vector<8x1xf32> to vector<8x32xf32>
    %89 = arith.subf %81, %88 : vector<8x32xf32>
    %90 = arith.mulf %89, %89 : vector<8x32xf32>
    %cst_55 = arith.constant dense<0.000000e+00> : vector<8xf32>
    %91 = vector.multi_reduction <add>, %90, %cst_55 [1] : vector<8x32xf32> to vector<8xf32>
    %92 = vector.shape_cast %91 : vector<8xf32> to vector<8x1xf32>
    %cst_56 = arith.constant 3.200000e+01 : f32
    %93 = vector.broadcast %cst_56 : f32 to vector<8x1xf32>
    %94 = arith.divf %92, %93 : vector<8x1xf32>
    %95 = vector.broadcast %87 : vector<8x1xf32> to vector<8x32xf32>
    %96 = arith.subf %81, %95 : vector<8x32xf32>
    %cst_57 = arith.constant 9.99999974E-6 : f32
    %97 = vector.broadcast %cst_57 : f32 to vector<8x1xf32>
    %98 = arith.addf %94, %97 : vector<8x1xf32>
    %99 = math.rsqrt %98 : vector<8x1xf32>
    %100 = vector.broadcast %99 : vector<8x1xf32> to vector<8x32xf32>
    %101 = arith.mulf %96, %100 : vector<8x32xf32>
    %102 = vector.broadcast %82 : vector<1x32xf32> to vector<8x32xf32>
    %103 = arith.mulf %101, %102 : vector<8x32xf32>
    %104 = vector.broadcast %83 : vector<1x32xf32> to vector<8x32xf32>
    %105 = arith.addf %103, %104 : vector<8x32xf32>
    %c0_58 = arith.constant 0 : index
    %c0_59 = arith.constant 0 : index
    %106 = vector.load %arg16[%c0_58, %c0_59] : memref<32x128xf32, #tpu.memory_space<vmem>>, vector<32x128xf32>
    %cst_60 = arith.constant dense<0.000000e+00> : vector<8x128xf32>
    %107 = tpu.matmul %105, %106, %cst_60 {dimension_numbers = #tpu.dot_dimension_numbers<[1], [0], [0], [1], [0, 0, 1, 1], [], []>} : vector<8x32xf32>, vector<32x128xf32>, vector<8x128xf32> -> vector<8x128xf32>
    %c0_61 = arith.constant 0 : index
    %c0_62 = arith.constant 0 : index
    %108 = vector.load %arg17[%c0_61, %c0_62] : memref<1x128xf32, #tpu.memory_space<vmem>>, vector<1x128xf32>
    %109 = vector.broadcast %108 : vector<1x128xf32> to vector<8x128xf32>
    %110 = arith.addf %107, %109 : vector<8x128xf32>
    %cst_63 = arith.constant 0.000000e+00 : f32
    %111 = vector.broadcast %cst_63 : f32 to vector<8x128xf32>
    %112 = arith.cmpf ogt, %110, %111 : vector<8x128xf32>
    %cst_64 = arith.constant 0.000000e+00 : f32
    %113 = vector.broadcast %cst_64 : f32 to vector<8x128xf32>
    %114 = arith.minimumf %110, %113 : vector<8x128xf32>
    %115 = math.exp %114 : vector<8x128xf32>
    %cst_65 = arith.constant 1.000000e+00 : f32
    %116 = vector.broadcast %cst_65 : f32 to vector<8x128xf32>
    %117 = arith.subf %115, %116 : vector<8x128xf32>
    %118 = arith.select %112, %110, %117 : vector<8x128xi1>, vector<8x128xf32>
    %c0_66 = arith.constant 0 : index
    %c0_67 = arith.constant 0 : index
    %119 = vector.load %arg18[%c0_66, %c0_67] : memref<128x32xf32, #tpu.memory_space<vmem>>, vector<128x32xf32>
    %cst_68 = arith.constant dense<0.000000e+00> : vector<8x32xf32>
    %120 = tpu.matmul %118, %119, %cst_68 {dimension_numbers = #tpu.dot_dimension_numbers<[1], [0], [0], [1], [0, 0, 1, 1], [], []>} : vector<8x128xf32>, vector<128x32xf32>, vector<8x32xf32> -> vector<8x32xf32>
    %c0_69 = arith.constant 0 : index
    %c0_70 = arith.constant 0 : index
    %121 = vector.load %arg19[%c0_69, %c0_70] : memref<1x32xf32, #tpu.memory_space<vmem>>, vector<1x32xf32>
    %122 = vector.broadcast %121 : vector<1x32xf32> to vector<8x32xf32>
    %123 = arith.addf %120, %122 : vector<8x32xf32>
    %124 = arith.addf %123, %105 : vector<8x32xf32>
    %c0_71 = arith.constant 0 : index
    %c0_72 = arith.constant 0 : index
    %125 = vector.load %arg20[%c0_71, %c0_72] : memref<1x32xf32, #tpu.memory_space<vmem>>, vector<1x32xf32>
    %c0_73 = arith.constant 0 : index
    %c0_74 = arith.constant 0 : index
    %126 = vector.load %arg21[%c0_73, %c0_74] : memref<1x32xf32, #tpu.memory_space<vmem>>, vector<1x32xf32>
    %cst_75 = arith.constant dense<0.000000e+00> : vector<8xf32>
    %127 = vector.multi_reduction <add>, %124, %cst_75 [1] : vector<8x32xf32> to vector<8xf32>
    %128 = vector.shape_cast %127 : vector<8xf32> to vector<8x1xf32>
    %cst_76 = arith.constant 3.200000e+01 : f32
    %129 = vector.broadcast %cst_76 : f32 to vector<8x1xf32>
    %130 = arith.divf %128, %129 : vector<8x1xf32>
    %131 = vector.broadcast %130 : vector<8x1xf32> to vector<8x32xf32>
    %132 = arith.subf %124, %131 : vector<8x32xf32>
    %133 = arith.mulf %132, %132 : vector<8x32xf32>
    %cst_77 = arith.constant dense<0.000000e+00> : vector<8xf32>
    %134 = vector.multi_reduction <add>, %133, %cst_77 [1] : vector<8x32xf32> to vector<8xf32>
    %135 = vector.shape_cast %134 : vector<8xf32> to vector<8x1xf32>
    %cst_78 = arith.constant 3.200000e+01 : f32
    %136 = vector.broadcast %cst_78 : f32 to vector<8x1xf32>
    %137 = arith.divf %135, %136 : vector<8x1xf32>
    %138 = vector.broadcast %130 : vector<8x1xf32> to vector<8x32xf32>
    %139 = arith.subf %124, %138 : vector<8x32xf32>
    %cst_79 = arith.constant 9.99999974E-6 : f32
    %140 = vector.broadcast %cst_79 : f32 to vector<8x1xf32>
    %141 = arith.addf %137, %140 : vector<8x1xf32>
    %142 = math.rsqrt %141 : vector<8x1xf32>
    %143 = vector.broadcast %142 : vector<8x1xf32> to vector<8x32xf32>
    %144 = arith.mulf %139, %143 : vector<8x32xf32>
    %145 = vector.broadcast %125 : vector<1x32xf32> to vector<8x32xf32>
    %146 = arith.mulf %144, %145 : vector<8x32xf32>
    %147 = vector.broadcast %126 : vector<1x32xf32> to vector<8x32xf32>
    %148 = arith.addf %146, %147 : vector<8x32xf32>
    %c0_80 = arith.constant 0 : index
    %c0_81 = arith.constant 0 : index
    %149 = vector.load %arg22[%c0_80, %c0_81] : memref<8x32xf32, #tpu.memory_space<vmem>>, vector<8x32xf32>
    tpu.vector_store %arg22[%c0_80, %c0_81], %148 {strides = array<i32>} : memref<8x32xf32, #tpu.memory_space<vmem>>, vector<8x32xf32>,
    return
  }
}

module attributes {stable_mosaic.version = 11 : i64} {
  func.func @_attn_addnorm_kernel(%arg0: memref<4x32xf32, #tpu.memory_space<vmem>>, %arg1: memref<32x32xf32, #tpu.memory_space<vmem>>, %arg2: memref<32x32xf32, #tpu.memory_space<vmem>>, %arg3: memref<32x32xf32, #tpu.memory_space<vmem>>, %arg4: memref<1x32xf32, #tpu.memory_space<vmem>>, %arg5: memref<1x32xf32, #tpu.memory_space<vmem>>, %arg6: memref<2x16x32xf32, #tpu.memory_space<vmem>>, %arg7: memref<1x32xf32, #tpu.memory_space<vmem>>, %arg8: memref<4x16xf32, #tpu.memory_space<vmem>>, %arg9: memref<4x16xf32, #tpu.memory_space<vmem>>, %arg10: memref<16x4xf32, #tpu.memory_space<vmem>>, %arg11: memref<16x4xf32, #tpu.memory_space<vmem>>, %arg12: memref<1x32xf32, #tpu.memory_space<vmem>>, %arg13: memref<1x32xf32, #tpu.memory_space<vmem>>, %arg14: memref<4x32xf32, #tpu.memory_space<vmem>>) attributes {dimension_semantics = [], scalar_prefetch = 0 : i64, scratch_operands = 0 : i64, tpu.core_type = #tpu.core_type<tc>} {
    %c0 = arith.constant 0 : index
    %c0_0 = arith.constant 0 : index
    %0 = vector.load %arg0[%c0, %c0_0] : memref<4x32xf32, #tpu.memory_space<vmem>>, vector<4x32xf32>
    %c0_1 = arith.constant 0 : index
    %c0_2 = arith.constant 0 : index
    %1 = vector.load %arg1[%c0_1, %c0_2] : memref<32x32xf32, #tpu.memory_space<vmem>>, vector<32x32xf32>
    %c0_3 = arith.constant 0 : index
    %c0_4 = arith.constant 0 : index
    %2 = vector.load %arg2[%c0_3, %c0_4] : memref<32x32xf32, #tpu.memory_space<vmem>>, vector<32x32xf32>
    %c0_5 = arith.constant 0 : index
    %c0_6 = arith.constant 0 : index
    %3 = vector.load %arg3[%c0_5, %c0_6] : memref<32x32xf32, #tpu.memory_space<vmem>>, vector<32x32xf32>
    %c0_7 = arith.constant 0 : index
    %c0_8 = arith.constant 0 : index
    %4 = vector.load %arg4[%c0_7, %c0_8] : memref<1x32xf32, #tpu.memory_space<vmem>>, vector<1x32xf32>
    %c0_9 = arith.constant 0 : index
    %c0_10 = arith.constant 0 : index
    %5 = vector.load %arg5[%c0_9, %c0_10] : memref<1x32xf32, #tpu.memory_space<vmem>>, vector<1x32xf32>
    %c0_11 = arith.constant 0 : index
    %c0_12 = arith.constant 0 : index
    %6 = vector.load %arg7[%c0_11, %c0_12] : memref<1x32xf32, #tpu.memory_space<vmem>>, vector<1x32xf32>
    %c0_13 = arith.constant 0 : index
    %c0_14 = arith.constant 0 : index
    %7 = vector.load %arg8[%c0_13, %c0_14] : memref<4x16xf32, #tpu.memory_space<vmem>>, vector<4x16xf32>
    %c0_15 = arith.constant 0 : index
    %c0_16 = arith.constant 0 : index
    %8 = vector.load %arg9[%c0_15, %c0_16] : memref<4x16xf32, #tpu.memory_space<vmem>>, vector<4x16xf32>
    %c0_17 = arith.constant 0 : index
    %c0_18 = arith.constant 0 : index
    %9 = vector.load %arg10[%c0_17, %c0_18] : memref<16x4xf32, #tpu.memory_space<vmem>>, vector<16x4xf32>
    %c0_19 = arith.constant 0 : index
    %c0_20 = arith.constant 0 : index
    %10 = vector.load %arg11[%c0_19, %c0_20] : memref<16x4xf32, #tpu.memory_space<vmem>>, vector<16x4xf32>
    %cst = arith.constant dense<0.000000e+00> : vector<4x32xf32>
    %11 = tpu.matmul %0, %1, %cst {dimension_numbers = #tpu.dot_dimension_numbers<[1], [0], [0], [1], [0, 0, 1, 1], [], []>} : vector<4x32xf32>, vector<32x32xf32>, vector<4x32xf32> -> vector<4x32xf32>
    %cst_21 = arith.constant dense<0.000000e+00> : vector<4x32xf32>
    %12 = tpu.matmul %0, %2, %cst_21 {dimension_numbers = #tpu.dot_dimension_numbers<[1], [0], [0], [1], [0, 0, 1, 1], [], []>} : vector<4x32xf32>, vector<32x32xf32>, vector<4x32xf32> -> vector<4x32xf32>
    %cst_22 = arith.constant dense<0.000000e+00> : vector<4x32xf32>
    %13 = tpu.matmul %0, %3, %cst_22 {dimension_numbers = #tpu.dot_dimension_numbers<[1], [0], [0], [1], [0, 0, 1, 1], [], []>} : vector<4x32xf32>, vector<32x32xf32>, vector<4x32xf32> -> vector<4x32xf32>
    %14 = vector.broadcast %4 : vector<1x32xf32> to vector<4x32xf32>
    %15 = arith.addf %11, %14 : vector<4x32xf32>
    %16 = vector.broadcast %5 : vector<1x32xf32> to vector<4x32xf32>
    %17 = arith.addf %11, %16 : vector<4x32xf32>
    %18 = tpu.iota {dimensions = array<i32: 0>} : vector<4x4xi32>
    %19 = tpu.iota {dimensions = array<i32: 1>} : vector<4x4xi32>
    %cst_23 = arith.constant 0.000000e+00 : f32
    %20 = vector.broadcast %cst_23 : f32 to vector<4x32xf32>
    %21 = vector.extract_strided_slice %12 {offsets = [0, 0], sizes = [4, 16], strides = [1, 1]} : vector<4x32xf32> to vector<4x16xf32>
    %22 = vector.extract_strided_slice %13 {offsets = [0, 0], sizes = [4, 16], strides = [1, 1]} : vector<4x32xf32> to vector<4x16xf32>
    %23 = vector.extract_strided_slice %15 {offsets = [0, 0], sizes = [4, 16], strides = [1, 1]} : vector<4x32xf32> to vector<4x16xf32>
    %24 = vector.extract_strided_slice %17 {offsets = [0, 0], sizes = [4, 16], strides = [1, 1]} : vector<4x32xf32> to vector<4x16xf32>
    %25 = tpu.transpose %21, [1, 0] : vector<4x16xf32> -> vector<16x4xf32>
    %cst_24 = arith.constant dense<0.000000e+00> : vector<4x4xf32>
    %26 = tpu.matmul %23, %25, %cst_24 {dimension_numbers = #tpu.dot_dimension_numbers<[1], [0], [0], [1], [0, 0, 1, 1], [], []>} : vector<4x16xf32>, vector<16x4xf32>, vector<4x4xf32> -> vector<4x4xf32>
    %27 = arith.mulf %24, %7 : vector<4x16xf32>
    %cst_25 = arith.constant dense<0.000000e+00> : vector<4x4xf32>
    %28 = tpu.matmul %27, %9, %cst_25 {dimension_numbers = #tpu.dot_dimension_numbers<[1], [0], [0], [1], [0, 0, 1, 1], [], []>} : vector<4x16xf32>, vector<16x4xf32>, vector<4x4xf32> -> vector<4x4xf32>
    %29 = arith.addf %26, %28 : vector<4x4xf32>
    %30 = arith.mulf %24, %8 : vector<4x16xf32>
    %cst_26 = arith.constant dense<0.000000e+00> : vector<4x4xf32>
    %31 = tpu.matmul %30, %10, %cst_26 {dimension_numbers = #tpu.dot_dimension_numbers<[1], [0], [0], [1], [0, 0, 1, 1], [], []>} : vector<4x16xf32>, vector<16x4xf32>, vector<4x4xf32> -> vector<4x4xf32>
    %32 = arith.addf %29, %31 : vector<4x4xf32>
    %33 = arith.cmpi sle, %19, %18 : vector<4x4xi32>
    %cst_27 = arith.constant -9.99999984E+17 : f32
    %34 = vector.broadcast %cst_27 : f32 to vector<4x4xf32>
    %35 = arith.select %33, %32, %34 : vector<4x4xi1>, vector<4x4xf32>
    %cst_28 = arith.constant dense<0xFF800000> : vector<4xf32>
    %36 = vector.multi_reduction <maximumf>, %35, %cst_28 [1] : vector<4x4xf32> to vector<4xf32>
    %37 = vector.shape_cast %36 : vector<4xf32> to vector<4x1xf32>
    %38 = vector.broadcast %37 : vector<4x1xf32> to vector<4x4xf32>
    %39 = arith.subf %35, %38 : vector<4x4xf32>
    %40 = math.exp %39 : vector<4x4xf32>
    %cst_29 = arith.constant dense<0.000000e+00> : vector<4xf32>
    %41 = vector.multi_reduction <add>, %40, %cst_29 [1] : vector<4x4xf32> to vector<4xf32>
    %42 = vector.shape_cast %41 : vector<4xf32> to vector<4x1xf32>
    %43 = tpu.reciprocal %42 {approx = true} : vector<4x1xf32> -> vector<4x1xf32>
    %44 = vector.broadcast %43 : vector<4x1xf32> to vector<4x4xf32>
    %45 = arith.mulf %40, %44 : vector<4x4xf32>
    %cst_30 = arith.constant dense<0.000000e+00> : vector<4x16xf32>
    %46 = tpu.matmul %45, %22, %cst_30 {dimension_numbers = #tpu.dot_dimension_numbers<[1], [0], [0], [1], [0, 0, 1, 1], [], []>} : vector<4x4xf32>, vector<4x16xf32>, vector<4x16xf32> -> vector<4x16xf32>
    %c0_31 = arith.constant 0 : index
    %c0_32 = arith.constant 0 : index
    %c0_33 = arith.constant 0 : index
    %47 = vector.load %arg6[%c0_31, %c0_32, %c0_33] : memref<2x16x32xf32, #tpu.memory_space<vmem>>, vector<1x16x32xf32>
    %48 = vector.shape_cast %47 : vector<1x16x32xf32> to vector<16x32xf32>
    %cst_34 = arith.constant dense<0.000000e+00> : vector<4x32xf32>
    %49 = tpu.matmul %46, %48, %cst_34 {dimension_numbers = #tpu.dot_dimension_numbers<[1], [0], [0], [1], [0, 0, 1, 1], [], []>} : vector<4x16xf32>, vector<16x32xf32>, vector<4x32xf32> -> vector<4x32xf32>
    %50 = arith.addf %20, %49 : vector<4x32xf32>
    %51 = vector.extract_strided_slice %12 {offsets = [0, 16], sizes = [4, 16], strides = [1, 1]} : vector<4x32xf32> to vector<4x16xf32>
    %52 = vector.extract_strided_slice %13 {offsets = [0, 16], sizes = [4, 16], strides = [1, 1]} : vector<4x32xf32> to vector<4x16xf32>
    %53 = vector.extract_strided_slice %15 {offsets = [0, 16], sizes = [4, 16], strides = [1, 1]} : vector<4x32xf32> to vector<4x16xf32>
    %54 = vector.extract_strided_slice %17 {offsets = [0, 16], sizes = [4, 16], strides = [1, 1]} : vector<4x32xf32> to vector<4x16xf32>
    %55 = tpu.transpose %51, [1, 0] : vector<4x16xf32> -> vector<16x4xf32>
    %cst_35 = arith.constant dense<0.000000e+00> : vector<4x4xf32>
    %56 = tpu.matmul %53, %55, %cst_35 {dimension_numbers = #tpu.dot_dimension_numbers<[1], [0], [0], [1], [0, 0, 1, 1], [], []>} : vector<4x16xf32>, vector<16x4xf32>, vector<4x4xf32> -> vector<4x4xf32>
    %57 = arith.mulf %54, %7 : vector<4x16xf32>
    %cst_36 = arith.constant dense<0.000000e+00> : vector<4x4xf32>
    %58 = tpu.matmul %57, %9, %cst_36 {dimension_numbers = #tpu.dot_dimension_numbers<[1], [0], [0], [1], [0, 0, 1, 1], [], []>} : vector<4x16xf32>, vector<16x4xf32>, vector<4x4xf32> -> vector<4x4xf32>
    %59 = arith.addf %56, %58 : vector<4x4xf32>
    %60 = arith.mulf %54, %8 : vector<4x16xf32>
    %cst_37 = arith.constant dense<0.000000e+00> : vector<4x4xf32>
    %61 = tpu.matmul %60, %10, %cst_37 {dimension_numbers = #tpu.dot_dimension_numbers<[1], [0], [0], [1], [0, 0, 1, 1], [], []>} : vector<4x16xf32>, vector<16x4xf32>, vector<4x4xf32> -> vector<4x4xf32>
    %62 = arith.addf %59, %61 : vector<4x4xf32>
    %63 = arith.cmpi sle, %19, %18 : vector<4x4xi32>
    %cst_38 = arith.constant -9.99999984E+17 : f32
    %64 = vector.broadcast %cst_38 : f32 to vector<4x4xf32>
    %65 = arith.select %63, %62, %64 : vector<4x4xi1>, vector<4x4xf32>
    %cst_39 = arith.constant dense<0xFF800000> : vector<4xf32>
    %66 = vector.multi_reduction <maximumf>, %65, %cst_39 [1] : vector<4x4xf32> to vector<4xf32>
    %67 = vector.shape_cast %66 : vector<4xf32> to vector<4x1xf32>
    %68 = vector.broadcast %67 : vector<4x1xf32> to vector<4x4xf32>
    %69 = arith.subf %65, %68 : vector<4x4xf32>
    %70 = math.exp %69 : vector<4x4xf32>
    %cst_40 = arith.constant dense<0.000000e+00> : vector<4xf32>
    %71 = vector.multi_reduction <add>, %70, %cst_40 [1] : vector<4x4xf32> to vector<4xf32>
    %72 = vector.shape_cast %71 : vector<4xf32> to vector<4x1xf32>
    %73 = tpu.reciprocal %72 {approx = true} : vector<4x1xf32> -> vector<4x1xf32>
    %74 = vector.broadcast %73 : vector<4x1xf32> to vector<4x4xf32>
    %75 = arith.mulf %70, %74 : vector<4x4xf32>
    %cst_41 = arith.constant dense<0.000000e+00> : vector<4x16xf32>
    %76 = tpu.matmul %75, %52, %cst_41 {dimension_numbers = #tpu.dot_dimension_numbers<[1], [0], [0], [1], [0, 0, 1, 1], [], []>} : vector<4x4xf32>, vector<4x16xf32>, vector<4x16xf32> -> vector<4x16xf32>
    %c1 = arith.constant 1 : index
    %c0_42 = arith.constant 0 : index
    %c0_43 = arith.constant 0 : index
    %77 = vector.load %arg6[%c1, %c0_42, %c0_43] : memref<2x16x32xf32, #tpu.memory_space<vmem>>, vector<1x16x32xf32>
    %78 = vector.shape_cast %77 : vector<1x16x32xf32> to vector<16x32xf32>
    %cst_44 = arith.constant dense<0.000000e+00> : vector<4x32xf32>
    %79 = tpu.matmul %76, %78, %cst_44 {dimension_numbers = #tpu.dot_dimension_numbers<[1], [0], [0], [1], [0, 0, 1, 1], [], []>} : vector<4x16xf32>, vector<16x32xf32>, vector<4x32xf32> -> vector<4x32xf32>
    %80 = arith.addf %50, %79 : vector<4x32xf32>
    %81 = vector.broadcast %6 : vector<1x32xf32> to vector<4x32xf32>
    %82 = arith.addf %80, %81 : vector<4x32xf32>
    %83 = arith.addf %82, %0 : vector<4x32xf32>
    %c0_45 = arith.constant 0 : index
    %c0_46 = arith.constant 0 : index
    %84 = vector.load %arg12[%c0_45, %c0_46] : memref<1x32xf32, #tpu.memory_space<vmem>>, vector<1x32xf32>
    %c0_47 = arith.constant 0 : index
    %c0_48 = arith.constant 0 : index
    %85 = vector.load %arg13[%c0_47, %c0_48] : memref<1x32xf32, #tpu.memory_space<vmem>>, vector<1x32xf32>
    %cst_49 = arith.constant dense<0.000000e+00> : vector<4xf32>
    %86 = vector.multi_reduction <add>, %83, %cst_49 [1] : vector<4x32xf32> to vector<4xf32>
    %87 = vector.shape_cast %86 : vector<4xf32> to vector<4x1xf32>
    %cst_50 = arith.constant 3.200000e+01 : f32
    %88 = vector.broadcast %cst_50 : f32 to vector<4x1xf32>
    %89 = arith.divf %87, %88 : vector<4x1xf32>
    %90 = vector.broadcast %89 : vector<4x1xf32> to vector<4x32xf32>
    %91 = arith.subf %83, %90 : vector<4x32xf32>
    %92 = arith.mulf %91, %91 : vector<4x32xf32>
    %cst_51 = arith.constant dense<0.000000e+00> : vector<4xf32>
    %93 = vector.multi_reduction <add>, %92, %cst_51 [1] : vector<4x32xf32> to vector<4xf32>
    %94 = vector.shape_cast %93 : vector<4xf32> to vector<4x1xf32>
    %cst_52 = arith.constant 3.200000e+01 : f32
    %95 = vector.broadcast %cst_52 : f32 to vector<4x1xf32>
    %96 = arith.divf %94, %95 : vector<4x1xf32>
    %97 = vector.broadcast %89 : vector<4x1xf32> to vector<4x32xf32>
    %98 = arith.subf %83, %97 : vector<4x32xf32>
    %cst_53 = arith.constant 9.99999974E-6 : f32
    %99 = vector.broadcast %cst_53 : f32 to vector<4x1xf32>
    %100 = arith.addf %96, %99 : vector<4x1xf32>
    %101 = math.rsqrt %100 : vector<4x1xf32>
    %102 = vector.broadcast %101 : vector<4x1xf32> to vector<4x32xf32>
    %103 = arith.mulf %98, %102 : vector<4x32xf32>
    %104 = vector.broadcast %84 : vector<1x32xf32> to vector<4x32xf32>
    %105 = arith.mulf %103, %104 : vector<4x32xf32>
    %106 = vector.broadcast %85 : vector<1x32xf32> to vector<4x32xf32>
    %107 = arith.addf %105, %106 : vector<4x32xf32>
    %c0_54 = arith.constant 0 : index
    %c0_55 = arith.constant 0 : index
    %108 = vector.load %arg14[%c0_54, %c0_55] : memref<4x32xf32, #tpu.memory_space<vmem>>, vector<4x32xf32>
    tpu.vector_store %arg14[%c0_54, %c0_55], %107 {strides = array<i32>} : memref<4x32xf32, #tpu.memory_space<vmem>>, vector<4x32xf32>,
    return
  }
}

module attributes {stable_mosaic.version = 11 : i64} {
  func.func @_tblock_kernel(%arg0: memref<8x32xf32, #tpu.memory_space<vmem>>, %arg1: memref<8x32xf32, #tpu.memory_space<vmem>>, %arg2: memref<4x32xf32, #tpu.memory_space<vmem>>, %arg3: memref<32x32xf32, #tpu.memory_space<vmem>>, %arg4: memref<32x32xf32, #tpu.memory_space<vmem>>, %arg5: memref<32x32xf32, #tpu.memory_space<vmem>>, %arg6: memref<1x32xf32, #tpu.memory_space<vmem>>, %arg7: memref<1x32xf32, #tpu.memory_space<vmem>>, %arg8: memref<2x16x32xf32, #tpu.memory_space<vmem>>, %arg9: memref<1x32xf32, #tpu.memory_space<vmem>>, %arg10: memref<4x16xf32, #tpu.memory_space<vmem>>, %arg11: memref<4x16xf32, #tpu.memory_space<vmem>>, %arg12: memref<16x8xf32, #tpu.memory_space<vmem>>, %arg13: memref<16x8xf32, #tpu.memory_space<vmem>>, %arg14: memref<1x32xf32, #tpu.memory_space<vmem>>, %arg15: memref<1x32xf32, #tpu.memory_space<vmem>>, %arg16: memref<32x128xf32, #tpu.memory_space<vmem>>, %arg17: memref<1x128xf32, #tpu.memory_space<vmem>>, %arg18: memref<128x32xf32, #tpu.memory_space<vmem>>, %arg19: memref<1x32xf32, #tpu.memory_space<vmem>>, %arg20: memref<1x32xf32, #tpu.memory_space<vmem>>, %arg21: memref<1x32xf32, #tpu.memory_space<vmem>>, %arg22: memref<4x32xf32, #tpu.memory_space<vmem>>) attributes {dimension_semantics = [], scalar_prefetch = 0 : i64, scratch_operands = 0 : i64, tpu.core_type = #tpu.core_type<tc>} {
    %c0 = arith.constant 0 : index
    %c0_0 = arith.constant 0 : index
    %0 = vector.load %arg2[%c0, %c0_0] : memref<4x32xf32, #tpu.memory_space<vmem>>, vector<4x32xf32>
    %c0_1 = arith.constant 0 : index
    %c0_2 = arith.constant 0 : index
    %1 = vector.load %arg0[%c0_1, %c0_2] : memref<8x32xf32, #tpu.memory_space<vmem>>, vector<8x32xf32>
    %c0_3 = arith.constant 0 : index
    %c0_4 = arith.constant 0 : index
    %2 = vector.load %arg1[%c0_3, %c0_4] : memref<8x32xf32, #tpu.memory_space<vmem>>, vector<8x32xf32>
    %c0_5 = arith.constant 0 : index
    %c0_6 = arith.constant 0 : index
    %3 = vector.load %arg3[%c0_5, %c0_6] : memref<32x32xf32, #tpu.memory_space<vmem>>, vector<32x32xf32>
    %c0_7 = arith.constant 0 : index
    %c0_8 = arith.constant 0 : index
    %4 = vector.load %arg4[%c0_7, %c0_8] : memref<32x32xf32, #tpu.memory_space<vmem>>, vector<32x32xf32>
    %c0_9 = arith.constant 0 : index
    %c0_10 = arith.constant 0 : index
    %5 = vector.load %arg5[%c0_9, %c0_10] : memref<32x32xf32, #tpu.memory_space<vmem>>, vector<32x32xf32>
    %c0_11 = arith.constant 0 : index
    %c0_12 = arith.constant 0 : index
    %6 = vector.load %arg6[%c0_11, %c0_12] : memref<1x32xf32, #tpu.memory_space<vmem>>, vector<1x32xf32>
    %c0_13 = arith.constant 0 : index
    %c0_14 = arith.constant 0 : index
    %7 = vector.load %arg7[%c0_13, %c0_14] : memref<1x32xf32, #tpu.memory_space<vmem>>, vector<1x32xf32>
    %c0_15 = arith.constant 0 : index
    %c0_16 = arith.constant 0 : index
    %8 = vector.load %arg9[%c0_15, %c0_16] : memref<1x32xf32, #tpu.memory_space<vmem>>, vector<1x32xf32>
    %c0_17 = arith.constant 0 : index
    %c0_18 = arith.constant 0 : index
    %9 = vector.load %arg10[%c0_17, %c0_18] : memref<4x16xf32, #tpu.memory_space<vmem>>, vector<4x16xf32>
    %c0_19 = arith.constant 0 : index
    %c0_20 = arith.constant 0 : index
    %10 = vector.load %arg11[%c0_19, %c0_20] : memref<4x16xf32, #tpu.memory_space<vmem>>, vector<4x16xf32>
    %c0_21 = arith.constant 0 : index
    %c0_22 = arith.constant 0 : index
    %11 = vector.load %arg12[%c0_21, %c0_22] : memref<16x8xf32, #tpu.memory_space<vmem>>, vector<16x8xf32>
    %c0_23 = arith.constant 0 : index
    %c0_24 = arith.constant 0 : index
    %12 = vector.load %arg13[%c0_23, %c0_24] : memref<16x8xf32, #tpu.memory_space<vmem>>, vector<16x8xf32>
    %cst = arith.constant dense<0.000000e+00> : vector<4x32xf32>
    %13 = tpu.matmul %0, %3, %cst {dimension_numbers = #tpu.dot_dimension_numbers<[1], [0], [0], [1], [0, 0, 1, 1], [], []>} : vector<4x32xf32>, vector<32x32xf32>, vector<4x32xf32> -> vector<4x32xf32>
    %cst_25 = arith.constant dense<0.000000e+00> : vector<8x32xf32>
    %14 = tpu.matmul %2, %4, %cst_25 {dimension_numbers = #tpu.dot_dimension_numbers<[1], [0], [0], [1], [0, 0, 1, 1], [], []>} : vector<8x32xf32>, vector<32x32xf32>, vector<8x32xf32> -> vector<8x32xf32>
    %cst_26 = arith.constant dense<0.000000e+00> : vector<8x32xf32>
    %15 = tpu.matmul %1, %5, %cst_26 {dimension_numbers = #tpu.dot_dimension_numbers<[1], [0], [0], [1], [0, 0, 1, 1], [], []>} : vector<8x32xf32>, vector<32x32xf32>, vector<8x32xf32> -> vector<8x32xf32>
    %16 = vector.broadcast %6 : vector<1x32xf32> to vector<4x32xf32>
    %17 = arith.addf %13, %16 : vector<4x32xf32>
    %18 = vector.broadcast %7 : vector<1x32xf32> to vector<4x32xf32>
    %19 = arith.addf %13, %18 : vector<4x32xf32>
    %cst_27 = arith.constant 0.000000e+00 : f32
    %20 = vector.broadcast %cst_27 : f32 to vector<4x32xf32>
    %21 = vector.extract_strided_slice %14 {offsets = [0, 0], sizes = [8, 16], strides = [1, 1]} : vector<8x32xf32> to vector<8x16xf32>
    %22 = vector.extract_strided_slice %15 {offsets = [0, 0], sizes = [8, 16], strides = [1, 1]} : vector<8x32xf32> to vector<8x16xf32>
    %23 = vector.extract_strided_slice %17 {offsets = [0, 0], sizes = [4, 16], strides = [1, 1]} : vector<4x32xf32> to vector<4x16xf32>
    %24 = vector.extract_strided_slice %19 {offsets = [0, 0], sizes = [4, 16], strides = [1, 1]} : vector<4x32xf32> to vector<4x16xf32>
    %25 = tpu.transpose %21, [1, 0] : vector<8x16xf32> -> vector<16x8xf32>
    %cst_28 = arith.constant dense<0.000000e+00> : vector<4x8xf32>
    %26 = tpu.matmul %23, %25, %cst_28 {dimension_numbers = #tpu.dot_dimension_numbers<[1], [0], [0], [1], [0, 0, 1, 1], [], []>} : vector<4x16xf32>, vector<16x8xf32>, vector<4x8xf32> -> vector<4x8xf32>
    %27 = arith.mulf %24, %9 : vector<4x16xf32>
    %cst_29 = arith.constant dense<0.000000e+00> : vector<4x8xf32>
    %28 = tpu.matmul %27, %11, %cst_29 {dimension_numbers = #tpu.dot_dimension_numbers<[1], [0], [0], [1], [0, 0, 1, 1], [], []>} : vector<4x16xf32>, vector<16x8xf32>, vector<4x8xf32> -> vector<4x8xf32>
    %29 = arith.addf %26, %28 : vector<4x8xf32>
    %30 = arith.mulf %24, %10 : vector<4x16xf32>
    %cst_30 = arith.constant dense<0.000000e+00> : vector<4x8xf32>
    %31 = tpu.matmul %30, %12, %cst_30 {dimension_numbers = #tpu.dot_dimension_numbers<[1], [0], [0], [1], [0, 0, 1, 1], [], []>} : vector<4x16xf32>, vector<16x8xf32>, vector<4x8xf32> -> vector<4x8xf32>
    %32 = arith.addf %29, %31 : vector<4x8xf32>
    %cst_31 = arith.constant dense<0xFF800000> : vector<4xf32>
    %33 = vector.multi_reduction <maximumf>, %32, %cst_31 [1] : vector<4x8xf32> to vector<4xf32>
    %34 = vector.shape_cast %33 : vector<4xf32> to vector<4x1xf32>
    %35 = vector.broadcast %34 : vector<4x1xf32> to vector<4x8xf32>
    %36 = arith.subf %32, %35 : vector<4x8xf32>
    %37 = math.exp %36 : vector<4x8xf32>
    %cst_32 = arith.constant dense<0.000000e+00> : vector<4xf32>
    %38 = vector.multi_reduction <add>, %37, %cst_32 [1] : vector<4x8xf32> to vector<4xf32>
    %39 = vector.shape_cast %38 : vector<4xf32> to vector<4x1xf32>
    %40 = tpu.reciprocal %39 {approx = true} : vector<4x1xf32> -> vector<4x1xf32>
    %41 = vector.broadcast %40 : vector<4x1xf32> to vector<4x8xf32>
    %42 = arith.mulf %37, %41 : vector<4x8xf32>
    %cst_33 = arith.constant dense<0.000000e+00> : vector<4x16xf32>
    %43 = tpu.matmul %42, %22, %cst_33 {dimension_numbers = #tpu.dot_dimension_numbers<[1], [0], [0], [1], [0, 0, 1, 1], [], []>} : vector<4x8xf32>, vector<8x16xf32>, vector<4x16xf32> -> vector<4x16xf32>
    %c0_34 = arith.constant 0 : index
    %c0_35 = arith.constant 0 : index
    %c0_36 = arith.constant 0 : index
    %44 = vector.load %arg8[%c0_34, %c0_35, %c0_36] : memref<2x16x32xf32, #tpu.memory_space<vmem>>, vector<1x16x32xf32>
    %45 = vector.shape_cast %44 : vector<1x16x32xf32> to vector<16x32xf32>
    %cst_37 = arith.constant dense<0.000000e+00> : vector<4x32xf32>
    %46 = tpu.matmul %43, %45, %cst_37 {dimension_numbers = #tpu.dot_dimension_numbers<[1], [0], [0], [1], [0, 0, 1, 1], [], []>} : vector<4x16xf32>, vector<16x32xf32>, vector<4x32xf32> -> vector<4x32xf32>
    %47 = arith.addf %20, %46 : vector<4x32xf32>
    %48 = vector.extract_strided_slice %14 {offsets = [0, 16], sizes = [8, 16], strides = [1, 1]} : vector<8x32xf32> to vector<8x16xf32>
    %49 = vector.extract_strided_slice %15 {offsets = [0, 16], sizes = [8, 16], strides = [1, 1]} : vector<8x32xf32> to vector<8x16xf32>
    %50 = vector.extract_strided_slice %17 {offsets = [0, 16], sizes = [4, 16], strides = [1, 1]} : vector<4x32xf32> to vector<4x16xf32>
    %51 = vector.extract_strided_slice %19 {offsets = [0, 16], sizes = [4, 16], strides = [1, 1]} : vector<4x32xf32> to vector<4x16xf32>
    %52 = tpu.transpose %48, [1, 0] : vector<8x16xf32> -> vector<16x8xf32>
    %cst_38 = arith.constant dense<0.000000e+00> : vector<4x8xf32>
    %53 = tpu.matmul %50, %52, %cst_38 {dimension_numbers = #tpu.dot_dimension_numbers<[1], [0], [0], [1], [0, 0, 1, 1], [], []>} : vector<4x16xf32>, vector<16x8xf32>, vector<4x8xf32> -> vector<4x8xf32>
    %54 = arith.mulf %51, %9 : vector<4x16xf32>
    %cst_39 = arith.constant dense<0.000000e+00> : vector<4x8xf32>
    %55 = tpu.matmul %54, %11, %cst_39 {dimension_numbers = #tpu.dot_dimension_numbers<[1], [0], [0], [1], [0, 0, 1, 1], [], []>} : vector<4x16xf32>, vector<16x8xf32>, vector<4x8xf32> -> vector<4x8xf32>
    %56 = arith.addf %53, %55 : vector<4x8xf32>
    %57 = arith.mulf %51, %10 : vector<4x16xf32>
    %cst_40 = arith.constant dense<0.000000e+00> : vector<4x8xf32>
    %58 = tpu.matmul %57, %12, %cst_40 {dimension_numbers = #tpu.dot_dimension_numbers<[1], [0], [0], [1], [0, 0, 1, 1], [], []>} : vector<4x16xf32>, vector<16x8xf32>, vector<4x8xf32> -> vector<4x8xf32>
    %59 = arith.addf %56, %58 : vector<4x8xf32>
    %cst_41 = arith.constant dense<0xFF800000> : vector<4xf32>
    %60 = vector.multi_reduction <maximumf>, %59, %cst_41 [1] : vector<4x8xf32> to vector<4xf32>
    %61 = vector.shape_cast %60 : vector<4xf32> to vector<4x1xf32>
    %62 = vector.broadcast %61 : vector<4x1xf32> to vector<4x8xf32>
    %63 = arith.subf %59, %62 : vector<4x8xf32>
    %64 = math.exp %63 : vector<4x8xf32>
    %cst_42 = arith.constant dense<0.000000e+00> : vector<4xf32>
    %65 = vector.multi_reduction <add>, %64, %cst_42 [1] : vector<4x8xf32> to vector<4xf32>
    %66 = vector.shape_cast %65 : vector<4xf32> to vector<4x1xf32>
    %67 = tpu.reciprocal %66 {approx = true} : vector<4x1xf32> -> vector<4x1xf32>
    %68 = vector.broadcast %67 : vector<4x1xf32> to vector<4x8xf32>
    %69 = arith.mulf %64, %68 : vector<4x8xf32>
    %cst_43 = arith.constant dense<0.000000e+00> : vector<4x16xf32>
    %70 = tpu.matmul %69, %49, %cst_43 {dimension_numbers = #tpu.dot_dimension_numbers<[1], [0], [0], [1], [0, 0, 1, 1], [], []>} : vector<4x8xf32>, vector<8x16xf32>, vector<4x16xf32> -> vector<4x16xf32>
    %c1 = arith.constant 1 : index
    %c0_44 = arith.constant 0 : index
    %c0_45 = arith.constant 0 : index
    %71 = vector.load %arg8[%c1, %c0_44, %c0_45] : memref<2x16x32xf32, #tpu.memory_space<vmem>>, vector<1x16x32xf32>
    %72 = vector.shape_cast %71 : vector<1x16x32xf32> to vector<16x32xf32>
    %cst_46 = arith.constant dense<0.000000e+00> : vector<4x32xf32>
    %73 = tpu.matmul %70, %72, %cst_46 {dimension_numbers = #tpu.dot_dimension_numbers<[1], [0], [0], [1], [0, 0, 1, 1], [], []>} : vector<4x16xf32>, vector<16x32xf32>, vector<4x32xf32> -> vector<4x32xf32>
    %74 = arith.addf %47, %73 : vector<4x32xf32>
    %75 = vector.broadcast %8 : vector<1x32xf32> to vector<4x32xf32>
    %76 = arith.addf %74, %75 : vector<4x32xf32>
    %77 = arith.addf %76, %0 : vector<4x32xf32>
    %c0_47 = arith.constant 0 : index
    %c0_48 = arith.constant 0 : index
    %78 = vector.load %arg14[%c0_47, %c0_48] : memref<1x32xf32, #tpu.memory_space<vmem>>, vector<1x32xf32>
    %c0_49 = arith.constant 0 : index
    %c0_50 = arith.constant 0 : index
    %79 = vector.load %arg15[%c0_49, %c0_50] : memref<1x32xf32, #tpu.memory_space<vmem>>, vector<1x32xf32>
    %cst_51 = arith.constant dense<0.000000e+00> : vector<4xf32>
    %80 = vector.multi_reduction <add>, %77, %cst_51 [1] : vector<4x32xf32> to vector<4xf32>
    %81 = vector.shape_cast %80 : vector<4xf32> to vector<4x1xf32>
    %cst_52 = arith.constant 3.200000e+01 : f32
    %82 = vector.broadcast %cst_52 : f32 to vector<4x1xf32>
    %83 = arith.divf %81, %82 : vector<4x1xf32>
    %84 = vector.broadcast %83 : vector<4x1xf32> to vector<4x32xf32>
    %85 = arith.subf %77, %84 : vector<4x32xf32>
    %86 = arith.mulf %85, %85 : vector<4x32xf32>
    %cst_53 = arith.constant dense<0.000000e+00> : vector<4xf32>
    %87 = vector.multi_reduction <add>, %86, %cst_53 [1] : vector<4x32xf32> to vector<4xf32>
    %88 = vector.shape_cast %87 : vector<4xf32> to vector<4x1xf32>
    %cst_54 = arith.constant 3.200000e+01 : f32
    %89 = vector.broadcast %cst_54 : f32 to vector<4x1xf32>
    %90 = arith.divf %88, %89 : vector<4x1xf32>
    %91 = vector.broadcast %83 : vector<4x1xf32> to vector<4x32xf32>
    %92 = arith.subf %77, %91 : vector<4x32xf32>
    %cst_55 = arith.constant 9.99999974E-6 : f32
    %93 = vector.broadcast %cst_55 : f32 to vector<4x1xf32>
    %94 = arith.addf %90, %93 : vector<4x1xf32>
    %95 = math.rsqrt %94 : vector<4x1xf32>
    %96 = vector.broadcast %95 : vector<4x1xf32> to vector<4x32xf32>
    %97 = arith.mulf %92, %96 : vector<4x32xf32>
    %98 = vector.broadcast %78 : vector<1x32xf32> to vector<4x32xf32>
    %99 = arith.mulf %97, %98 : vector<4x32xf32>
    %100 = vector.broadcast %79 : vector<1x32xf32> to vector<4x32xf32>
    %101 = arith.addf %99, %100 : vector<4x32xf32>
    %c0_56 = arith.constant 0 : index
    %c0_57 = arith.constant 0 : index
    %102 = vector.load %arg16[%c0_56, %c0_57] : memref<32x128xf32, #tpu.memory_space<vmem>>, vector<32x128xf32>
    %cst_58 = arith.constant dense<0.000000e+00> : vector<4x128xf32>
    %103 = tpu.matmul %101, %102, %cst_58 {dimension_numbers = #tpu.dot_dimension_numbers<[1], [0], [0], [1], [0, 0, 1, 1], [], []>} : vector<4x32xf32>, vector<32x128xf32>, vector<4x128xf32> -> vector<4x128xf32>
    %c0_59 = arith.constant 0 : index
    %c0_60 = arith.constant 0 : index
    %104 = vector.load %arg17[%c0_59, %c0_60] : memref<1x128xf32, #tpu.memory_space<vmem>>, vector<1x128xf32>
    %105 = vector.broadcast %104 : vector<1x128xf32> to vector<4x128xf32>
    %106 = arith.addf %103, %105 : vector<4x128xf32>
    %cst_61 = arith.constant 0.000000e+00 : f32
    %107 = vector.broadcast %cst_61 : f32 to vector<4x128xf32>
    %108 = arith.cmpf ogt, %106, %107 : vector<4x128xf32>
    %cst_62 = arith.constant 0.000000e+00 : f32
    %109 = vector.broadcast %cst_62 : f32 to vector<4x128xf32>
    %110 = arith.minimumf %106, %109 : vector<4x128xf32>
    %111 = math.exp %110 : vector<4x128xf32>
    %cst_63 = arith.constant 1.000000e+00 : f32
    %112 = vector.broadcast %cst_63 : f32 to vector<4x128xf32>
    %113 = arith.subf %111, %112 : vector<4x128xf32>
    %114 = arith.select %108, %106, %113 : vector<4x128xi1>, vector<4x128xf32>
    %c0_64 = arith.constant 0 : index
    %c0_65 = arith.constant 0 : index
    %115 = vector.load %arg18[%c0_64, %c0_65] : memref<128x32xf32, #tpu.memory_space<vmem>>, vector<128x32xf32>
    %cst_66 = arith.constant dense<0.000000e+00> : vector<4x32xf32>
    %116 = tpu.matmul %114, %115, %cst_66 {dimension_numbers = #tpu.dot_dimension_numbers<[1], [0], [0], [1], [0, 0, 1, 1], [], []>} : vector<4x128xf32>, vector<128x32xf32>, vector<4x32xf32> -> vector<4x32xf32>
    %c0_67 = arith.constant 0 : index
    %c0_68 = arith.constant 0 : index
    %117 = vector.load %arg19[%c0_67, %c0_68] : memref<1x32xf32, #tpu.memory_space<vmem>>, vector<1x32xf32>
    %118 = vector.broadcast %117 : vector<1x32xf32> to vector<4x32xf32>
    %119 = arith.addf %116, %118 : vector<4x32xf32>
    %120 = arith.addf %119, %101 : vector<4x32xf32>
    %c0_69 = arith.constant 0 : index
    %c0_70 = arith.constant 0 : index
    %121 = vector.load %arg20[%c0_69, %c0_70] : memref<1x32xf32, #tpu.memory_space<vmem>>, vector<1x32xf32>
    %c0_71 = arith.constant 0 : index
    %c0_72 = arith.constant 0 : index
    %122 = vector.load %arg21[%c0_71, %c0_72] : memref<1x32xf32, #tpu.memory_space<vmem>>, vector<1x32xf32>
    %cst_73 = arith.constant dense<0.000000e+00> : vector<4xf32>
    %123 = vector.multi_reduction <add>, %120, %cst_73 [1] : vector<4x32xf32> to vector<4xf32>
    %124 = vector.shape_cast %123 : vector<4xf32> to vector<4x1xf32>
    %cst_74 = arith.constant 3.200000e+01 : f32
    %125 = vector.broadcast %cst_74 : f32 to vector<4x1xf32>
    %126 = arith.divf %124, %125 : vector<4x1xf32>
    %127 = vector.broadcast %126 : vector<4x1xf32> to vector<4x32xf32>
    %128 = arith.subf %120, %127 : vector<4x32xf32>
    %129 = arith.mulf %128, %128 : vector<4x32xf32>
    %cst_75 = arith.constant dense<0.000000e+00> : vector<4xf32>
    %130 = vector.multi_reduction <add>, %129, %cst_75 [1] : vector<4x32xf32> to vector<4xf32>
    %131 = vector.shape_cast %130 : vector<4xf32> to vector<4x1xf32>
    %cst_76 = arith.constant 3.200000e+01 : f32
    %132 = vector.broadcast %cst_76 : f32 to vector<4x1xf32>
    %133 = arith.divf %131, %132 : vector<4x1xf32>
    %134 = vector.broadcast %126 : vector<4x1xf32> to vector<4x32xf32>
    %135 = arith.subf %120, %134 : vector<4x32xf32>
    %cst_77 = arith.constant 9.99999974E-6 : f32
    %136 = vector.broadcast %cst_77 : f32 to vector<4x1xf32>
    %137 = arith.addf %133, %136 : vector<4x1xf32>
    %138 = math.rsqrt %137 : vector<4x1xf32>
    %139 = vector.broadcast %138 : vector<4x1xf32> to vector<4x32xf32>
    %140 = arith.mulf %135, %139 : vector<4x32xf32>
    %141 = vector.broadcast %121 : vector<1x32xf32> to vector<4x32xf32>
    %142 = arith.mulf %140, %141 : vector<4x32xf32>
    %143 = vector.broadcast %122 : vector<1x32xf32> to vector<4x32xf32>
    %144 = arith.addf %142, %143 : vector<4x32xf32>
    %c0_78 = arith.constant 0 : index
    %c0_79 = arith.constant 0 : index
    %145 = vector.load %arg22[%c0_78, %c0_79] : memref<4x32xf32, #tpu.memory_space<vmem>>, vector<4x32xf32>
    tpu.vector_store %arg22[%c0_78, %c0_79], %144 {strides = array<i32>} : memref<4x32xf32, #tpu.memory_space<vmem>>, vector<4x32xf32>,
    return
  }
}

module attributes {stable_mosaic.version = 11 : i64} {
  func.func @_head_softmax_kernel(%arg0: memref<1x32xf32, #tpu.memory_space<vmem>>, %arg1: memref<32x8xf32, #tpu.memory_space<vmem>>, %arg2: memref<1x8xf32, #tpu.memory_space<vmem>>, %arg3: memref<1x8xf32, #tpu.memory_space<vmem>>) attributes {dimension_semantics = [], scalar_prefetch = 0 : i64, scratch_operands = 0 : i64, tpu.core_type = #tpu.core_type<tc>} {
    %c0 = arith.constant 0 : index
    %c0_0 = arith.constant 0 : index
    %0 = vector.load %arg0[%c0, %c0_0] : memref<1x32xf32, #tpu.memory_space<vmem>>, vector<1x32xf32>
    %c0_1 = arith.constant 0 : index
    %c0_2 = arith.constant 0 : index
    %1 = vector.load %arg1[%c0_1, %c0_2] : memref<32x8xf32, #tpu.memory_space<vmem>>, vector<32x8xf32>
    %cst = arith.constant dense<0.000000e+00> : vector<1x8xf32>
    %2 = tpu.matmul %0, %1, %cst {dimension_numbers = #tpu.dot_dimension_numbers<[1], [0], [0], [1], [0, 0, 1, 1], [], []>} : vector<1x32xf32>, vector<32x8xf32>, vector<1x8xf32> -> vector<1x8xf32>
    %c0_3 = arith.constant 0 : index
    %c0_4 = arith.constant 0 : index
    %3 = vector.load %arg2[%c0_3, %c0_4] : memref<1x8xf32, #tpu.memory_space<vmem>>, vector<1x8xf32>
    %4 = arith.addf %2, %3 : vector<1x8xf32>
    %cst_5 = arith.constant dense<0xFF800000> : vector<1xf32>
    %5 = vector.multi_reduction <maximumf>, %4, %cst_5 [1] : vector<1x8xf32> to vector<1xf32>
    %6 = vector.shape_cast %5 : vector<1xf32> to vector<1x1xf32>
    %7 = vector.broadcast %6 : vector<1x1xf32> to vector<1x8xf32>
    %8 = arith.subf %4, %7 : vector<1x8xf32>
    %9 = math.exp %8 : vector<1x8xf32>
    %cst_6 = arith.constant dense<0.000000e+00> : vector<1xf32>
    %10 = vector.multi_reduction <add>, %9, %cst_6 [1] : vector<1x8xf32> to vector<1xf32>
    %11 = vector.shape_cast %10 : vector<1xf32> to vector<1x1xf32>
    %12 = tpu.reciprocal %11 {approx = true} : vector<1x1xf32> -> vector<1x1xf32>
    %13 = vector.broadcast %12 : vector<1x1xf32> to vector<1x8xf32>
    %14 = arith.mulf %9, %13 : vector<1x8xf32>
    %c0_7 = arith.constant 0 : index
    %c0_8 = arith.constant 0 : index
    %15 = vector.load %arg3[%c0_7, %c0_8] : memref<1x8xf32, #tpu.memory_space<vmem>>, vector<1x8xf32>
    tpu.vector_store %arg3[%c0_7, %c0_8], %14 {strides = array<i32>} : memref<1x8xf32, #tpu.memory_space<vmem>>, vector<1x8xf32>,
    return
  }
}

</mosaic_0001>

<llo_original>
// kernel: body.34
$region0: #{body.34}
  #allocation0 [shape = 'u32[]', space=smem, size = 0x4, offset = 0x4, fixed_abs, tag = 'smem constant byte address 0x4 - core index']
  #allocation1 [shape = 'u32[144,128]{1,0:T(1,128)}', space=vmem, size = 0x12000, scoped, tag = 'internal scratch']
  %s0 = inlined_call_operand.vmem [shape: f32[1,32], index: 0, kind: input, shape index: {}]
  %s1 = inlined_call_operand.vmem [shape: f32[32,8], index: 1, kind: input, shape index: {}]
  %s2 = inlined_call_operand.vmem [shape: f32[1,8], index: 2, kind: input, shape index: {}]
  %s3 = inlined_call_operand.vmem [shape: f32[1,8], index: 3, kind: output, shape index: {}]
  %s4 = sld [smem:[#allocation0]]
  $region22: #{body.34} parent=0
    _
  %s6 = ssub.s32 1, %s4
  %s7 = scalar_select 0, %s6, %s4
  // Predicated region
  $region2: #{body.34} parent=0 // pred_check
    _
  $region3: #{body.34} parent=0 // pred_check_branch
    %9 = sbr.rel (0) target = $region5
  $region4: #{body.34} parent=0 // pred_region
    _
  $region5: #{body.34} parent=0 // pred_fallthru
    _
  // Predicated region
  $region6: #{body.34} parent=0 // pred_check
    _
  $region7: #{body.34} parent=0 // pred_check_branch
    %11 = sbr.rel (0) target = $region9
  $region8: #{body.34} parent=0 // pred_region
    _
  $region9: #{body.34} parent=0 // pred_fallthru
    _
  // Predicated region
  $region10: #{body.34} parent=0 // pred_check
    _
  $region11: #{body.34} parent=0 // pred_check_branch
    %13 = sbr.rel (0) target = $region13
  $region12: #{body.34} parent=0 // pred_region
    _
  $region13: #{body.34} parent=0 // pred_fallthru
    _
  %v14 = vld [vmem:[%s0] sm:$0x1]
  %v15 = vld [vmem:[%s1] sm:$0xff]
  %v16 = vld [vmem:[%s1 + $0x8] sm:$0xff]
  %v17 = vld [vmem:[%s1 + $0x10] sm:$0xff]
  %v18 = vld [vmem:[%s1 + $0x18] sm:$0xff]
  %v19 = vld [vmem:[%s2] sm:$0x1]
  %vm20 = vcmask 261120
  %v22 = vsel %vm20, %v14, 0
  %24 = vmatprep.subr.mxu0 0.0
  %25 = vmatpush1.msra.mxu0 %v15
  %26 = vmatprep.subr.mxu0 0.0
  %27 = vmatpush1.msra.mxu0 %v16
  %28 = vmatprep.subr.mxu0 0.0
  %29 = vmatpush1.msra.mxu0 %v17
  %30 = vmatprep.subr.mxu0 0.0
  %31 = vmatpush1.msra.mxu0 %v18
  %32 = vmatprep.subr.mxu0 0.0
  %33 = vmatpush1.msra.mxu0 0.0
  %34 = vmatprep.subr.mxu0 0.0
  %35 = vmatpush1.msra.mxu0 0.0
  %36 = vmatprep.subr.mxu0 0.0
  %37 = vmatpush1.msra.mxu0 0.0
  %38 = vmatprep.subr.mxu0 0.0
  %39 = vmatpush1.msra.mxu0 0.0
  %40 = vmatprep.subr.mxu0 0.0
  %41 = vmatpush1.msra.mxu0 0.0
  %42 = vmatprep.subr.mxu0 0.0
  %43 = vmatpush1.msra.mxu0 0.0
  %44 = vmatprep.subr.mxu0 0.0
  %45 = vmatpush1.msra.mxu0 0.0
  %46 = vmatprep.subr.mxu0 0.0
  %47 = vmatpush1.msra.mxu0 0.0
  %48 = vmatprep.subr.mxu0 0.0
  %49 = vmatpush1.msra.mxu0 0.0
  %50 = vmatprep.subr.mxu0 0.0
  %51 = vmatpush1.msra.mxu0 0.0
  %52 = vmatprep.subr.mxu0 0.0
  %53 = vmatpush1.msra.mxu0 0.0
  %54 = vmatprep.subr.mxu0 0.0
  %55 = vmatpush1.msra.mxu0 0.0
  %56 = vmatprep.subr.mxu0 0.0
  %57 = vmatpush1.msra.mxu0 0.0
  %58 = vmatprep.subr.mxu0 0.0
  %59 = vmatpush1.msra.mxu0 0.0
  %60 = vmatprep.subr.mxu0 0.0
  %61 = vmatpush1.msra.mxu0 0.0
  %62 = vmatprep.subr.mxu0 0.0
  %63 = vmatpush1.msra.mxu0 0.0
  %64 = vmatprep.subr.mxu0 0.0
  %65 = vmatpush1.msra.mxu0 0.0
  %66 = vmatprep.subr.mxu0 0.0
  %67 = vmatpush1.msra.mxu0 0.0
  %68 = vmatprep.subr.mxu0 0.0
  %69 = vmatpush1.msra.mxu0 0.0
  %70 = vmatprep.subr.mxu0 0.0
  %71 = vmatpush1.msra.mxu0 0.0
  %72 = vmatprep.subr.mxu0 0.0
  %73 = vmatpush1.msra.mxu0 0.0
  %74 = vmatprep.subr.mxu0 0.0
  %75 = vmatpush1.msra.mxu0 0.0
  %76 = vmatprep.subr.mxu0 0.0
  %77 = vmatpush1.msra.mxu0 0.0
  %78 = vmatprep.subr.mxu0 0.0
  %79 = vmatpush1.msra.mxu0 0.0
  %80 = vmatprep.subr.mxu0 0.0
  %81 = vmatpush1.msra.mxu0 0.0
  %82 = vmatprep.subr.mxu0 0.0
  %83 = vmatpush1.msra.mxu0 0.0
  %84 = vmatprep.subr.mxu0 0.0
  %85 = vmatpush1.msra.mxu0 0.0
  %86 = vmatprep.subr.mxu0 0.0
  %87 = vmatpush1.msra.mxu0 0.0
  %88 = vmatprep.mubr.f32.mxu0 0.0
  %89 = vmatmul.mubr.f32.gmra.mrb[0].mxu0 %v22
  %v90 = vpop.f32.mrb[0].mxu0
  %v91 = vadd.f32 %v19, %v90
  %v92 = vpop.f32.mrb[0].mxu0
  %93 = vdwg.mxu0
  %vm94 = vcmask 57344
  %v95 = vsel %vm94, %v91, -inf
  %96 = vmax.xlane.f32.xlu0 %v95
  %v97 = vpop.xlane.xlu0 %96
  %v98 = vsub.f32 %v91, %v97
  %v99 = vmul.f32 %v98, 1.442695
  %v100 = vpow.pop %v99
  %v101 = vsel %vm94, %v100, 0.0
  %102 = vadd.xlane.f32.xlu0 %v101
  %v103 = vpop.xlane.xlu0 %102
  %v104 = vrcp.pop %v103
  %v105 = vmul.f32 %v100, %v104
  %106 = vst.msk [vmem:[%s3] sm:$0x1] %vm94, %v105
  // Predicated region
  $region14: #{body.34} parent=0 // pred_check
    _
  $region15: #{body.34} parent=0 // pred_check_branch
    %108 = sbr.rel (0) target = $region17
  $region16: #{body.34} parent=0 // pred_region
    _
  $region17: #{body.34} parent=0 // pred_fallthru
    _
  // Predicated region
  $region18: #{body.34} parent=0 // pred_check
    _
  $region19: #{body.34} parent=0 // pred_check_branch
    %110 = sbr.rel (0) target = $region21
  $region20: #{body.34} parent=0 // pred_region
    _
  $region21: #{body.34} parent=0 // pred_fallthru
    _

// kernel: _tener_forward_device.2
$region0: #{_tener_forward_device.2}
  #allocation0 [shape = 'u32[]', space=smem, size = 0x4, offset = 0x4, fixed_abs, tag = 'smem constant byte address 0x4 - core index']
  #allocation1 [shape = 'u32[144,128]{1,0:T(1,128)}', space=vmem, size = 0x12000, scoped, tag = 'internal scratch']
  %s0 = inlined_call_operand.vmem [shape: f32[8,32], index: 0, kind: input, shape index: {}, may-alias: {0,1,2}]
  %s1 = inlined_call_operand.vmem [shape: f32[8,32], index: 1, kind: input, shape index: {}, may-alias: {0,1,2}]
  %s2 = inlined_call_operand.vmem [shape: f32[8,32], index: 2, kind: input, shape index: {}, may-alias: {0,1,2}]
  %s3 = inlined_call_operand.vmem [shape: f32[32,32], index: 3, kind: input, shape index: {}]
  %s4 = inlined_call_operand.vmem [shape: f32[32,32], index: 4, kind: input, shape index: {}]
  %s5 = inlined_call_operand.vmem [shape: f32[32,32], index: 5, kind: input, shape index: {}]
  %s6 = inlined_call_operand.vmem [shape: f32[1,32], index: 6, kind: input, shape index: {}]
  %s7 = inlined_call_operand.vmem [shape: f32[1,32], index: 7, kind: input, shape index: {}]
  %s8 = inlined_call_operand.vmem [shape: f32[2,16,32], index: 8, kind: input, shape index: {}]
  %s9 = inlined_call_operand.vmem [shape: f32[1,32], index: 9, kind: input, shape index: {}]
  %s10 = inlined_call_operand.vmem [shape: f32[8,16], index: 10, kind: input, shape index: {}]
  %s11 = inlined_call_operand.vmem [shape: f32[8,16], index: 11, kind: input, shape index: {}]
  %s12 = inlined_call_operand.vmem [shape: f32[16,8], index: 12, kind: input, shape index: {}]
  %s13 = inlined_call_operand.vmem [shape: f32[16,8], index: 13, kind: input, shape index: {}]
  %s14 = inlined_call_operand.vmem [shape: f32[1,32], index: 14, kind: input, shape index: {}]
  %s15 = inlined_call_operand.vmem [shape: f32[1,32], index: 15, kind: input, shape index: {}]
  %s16 = inlined_call_operand.vmem [shape: f32[32,128], index: 16, kind: input, shape index: {}]
  %s17 = inlined_call_operand.vmem [shape: f32[1,128], index: 17, kind: input, shape index: {}]
  %s18 = inlined_call_operand.vmem [shape: f32[128,32], index: 18, kind: input, shape index: {}]
  %s19 = inlined_call_operand.vmem [shape: f32[1,32], index: 19, kind: input, shape index: {}]
  %s20 = inlined_call_operand.vmem [shape: f32[1,32], index: 20, kind: input, shape index: {}]
  %s21 = inlined_call_operand.vmem [shape: f32[1,32], index: 21, kind: input, shape index: {}]
  %s22 = inlined_call_operand.vmem [shape: f32[8,32], index: 22, kind: output, shape index: {}]
  %s23 = sld [smem:[#allocation0]]
  $region98: #{_tener_forward_device.2} parent=0
    _
  %s25 = ssub.s32 1, %s23
  %s26 = scalar_select 0, %s25, %s23
  // Predicated region
  $region2: #{_tener_forward_device.2} parent=0 // pred_check
    _
  $region3: #{_tener_forward_device.2} parent=0 // pred_check_branch
    %28 = sbr.rel (0) target = $region5
  $region4: #{_tener_forward_device.2} parent=0 // pred_region
    _
  $region5: #{_tener_forward_device.2} parent=0 // pred_fallthru
    _
  // Predicated region
  $region6: #{_tener_forward_device.2} parent=0 // pred_check
    _
  $region7: #{_tener_forward_device.2} parent=0 // pred_check_branch
    %30 = sbr.rel (0) target = $region9
  $region8: #{_tener_forward_device.2} parent=0 // pred_region
    _
  $region9: #{_tener_forward_device.2} parent=0 // pred_fallthru
    _
  // Predicated region
  $region10: #{_tener_forward_device.2} parent=0 // pred_check
    _
  $region11: #{_tener_forward_device.2} parent=0 // pred_check_branch
    %32 = sbr.rel (0) target = $region13
  $region12: #{_tener_forward_device.2} parent=0 // pred_region
    _
  $region13: #{_tener_forward_device.2} parent=0 // pred_fallthru
    _
  // Predicated region
  $region14: #{_tener_forward_device.2} parent=0 // pred_check
    _
  $region15: #{_tener_forward_device.2} parent=0 // pred_check_branch
    %34 = sbr.rel (0) target = $region17
  $region16: #{_tener_forward_device.2} parent=0 // pred_region
    _
  $region17: #{_tener_forward_device.2} parent=0 // pred_fallthru
    _
  // Predicated region
  $region18: #{_tener_forward_device.2} parent=0 // pred_check
    _
  $region19: #{_tener_forward_device.2} parent=0 // pred_check_branch
    %36 = sbr.rel (0) target = $region21
  $region20: #{_tener_forward_device.2} parent=0 // pred_region
    _
  $region21: #{_tener_forward_device.2} parent=0 // pred_fallthru
    _
  // Predicated region
  $region22: #{_tener_forward_device.2} parent=0 // pred_check
    _
  $region23: #{_tener_forward_device.2} parent=0 // pred_check_branch
    %38 = sbr.rel (0) target = $region25
  $region24: #{_tener_forward_device.2} parent=0 // pred_region
    _
  $region25: #{_tener_forward_device.2} parent=0 // pred_fallthru
    _
  // Predicated region
  $region26: #{_tener_forward_device.2} parent=0 // pred_check
    _
  $region27: #{_tener_forward_device.2} parent=0 // pred_check_branch
    %40 = sbr.rel (0) target = $region29
  $region28: #{_tener_forward_device.2} parent=0 // pred_region
    _
  $region29: #{_tener_forward_device.2} parent=0 // pred_fallthru
    _
  // Predicated region
  $region30: #{_tener_forward_device.2} parent=0 // pred_check
    _
  $region31: #{_tener_forward_device.2} parent=0 // pred_check_branch
    %42 = sbr.rel (0) target = $region33
  $region32: #{_tener_forward_device.2} parent=0 // pred_region
    _
  $region33: #{_tener_forward_device.2} parent=0 // pred_fallthru
    _
  // Predicated region
  $region34: #{_tener_forward_device.2} parent=0 // pred_check
    _
  $region35: #{_tener_forward_device.2} parent=0 // pred_check_branch
    %44 = sbr.rel (0) target = $region37
  $region36: #{_tener_forward_device.2} parent=0 // pred_region
    _
  $region37: #{_tener_forward_device.2} parent=0 // pred_fallthru
    _
  // Predicated region
  $region38: #{_tener_forward_device.2} parent=0 // pred_check
    _
  $region39: #{_tener_forward_device.2} parent=0 // pred_check_branch
    %46 = sbr.rel (0) target = $region41
  $region40: #{_tener_forward_device.2} parent=0 // pred_region
    _
  $region41: #{_tener_forward_device.2} parent=0 // pred_fallthru
    _
  // Predicated region
  $region42: #{_tener_forward_device.2} parent=0 // pred_check
    _
  $region43: #{_tener_forward_device.2} parent=0 // pred_check_branch
    %48 = sbr.rel (0) target = $region45
  $region44: #{_tener_forward_device.2} parent=0 // pred_region
    _
  $region45: #{_tener_forward_device.2} parent=0 // pred_fallthru
    _
  // Predicated region
  $region46: #{_tener_forward_device.2} parent=0 // pred_check
    _
  $region47: #{_tener_forward_device.2} parent=0 // pred_check_branch
    %50 = sbr.rel (0) target = $region49
  $region48: #{_tener_forward_device.2} parent=0 // pred_region
    _
  $region49: #{_tener_forward_device.2} parent=0 // pred_fallthru
    _
  // Predicated region
  $region50: #{_tener_forward_device.2} parent=0 // pred_check
    _
  $region51: #{_tener_forward_device.2} parent=0 // pred_check_branch
    %52 = sbr.rel (0) target = $region53
  $region52: #{_tener_forward_device.2} parent=0 // pred_region
    _
  $region53: #{_tener_forward_device.2} parent=0 // pred_fallthru
    _
  // Predicated region
  $region54: #{_tener_forward_device.2} parent=0 // pred_check
    _
  $region55: #{_tener_forward_device.2} parent=0 // pred_check_branch
    %54 = sbr.rel (0) target = $region57
  $region56: #{_tener_forward_device.2} parent=0 // pred_region
    _
  $region57: #{_tener_forward_device.2} parent=0 // pred_fallthru
    _
  // Predicated region
  $region58: #{_tener_forward_device.2} parent=0 // pred_check
    _
  $region59: #{_tener_forward_device.2} parent=0 // pred_check_branch
    %56 = sbr.rel (0) target = $region61
  $region60: #{_tener_forward_device.2} parent=0 // pred_region
    _
  $region61: #{_tener_forward_device.2} parent=0 // pred_fallthru
    _
  // Predicated region
  $region62: #{_tener_forward_device.2} parent=0 // pred_check
    _
  $region63: #{_tener_forward_device.2} parent=0 // pred_check_branch
    %58 = sbr.rel (0) target = $region65
  $region64: #{_tener_forward_device.2} parent=0 // pred_region
    _
  $region65: #{_tener_forward_device.2} parent=0 // pred_fallthru
    _
  // Predicated region
  $region66: #{_tener_forward_device.2} parent=0 // pred_check
    _
  $region67: #{_tener_forward_device.2} parent=0 // pred_check_branch
    %60 = sbr.rel (0) target = $region69
  $region68: #{_tener_forward_device.2} parent=0 // pred_region
    _
  $region69: #{_tener_forward_device.2} parent=0 // pred_fallthru
    _
  // Predicated region
  $region70: #{_tener_forward_device.2} parent=0 // pred_check
    _
  $region71: #{_tener_forward_device.2} parent=0 // pred_check_branch
    %62 = sbr.rel (0) target = $region73
  $region72: #{_tener_forward_device.2} parent=0 // pred_region
    _
  $region73: #{_tener_forward_device.2} parent=0 // pred_fallthru
    _
  // Predicated region
  $region74: #{_tener_forward_device.2} parent=0 // pred_check
    _
  $region75: #{_tener_forward_device.2} parent=0 // pred_check_branch
    %64 = sbr.rel (0) target = $region77
  $region76: #{_tener_forward_device.2} parent=0 // pred_region
    _
  $region77: #{_tener_forward_device.2} parent=0 // pred_fallthru
    _
  // Predicated region
  $region78: #{_tener_forward_device.2} parent=0 // pred_check
    _
  $region79: #{_tener_forward_device.2} parent=0 // pred_check_branch
    %66 = sbr.rel (0) target = $region81
  $region80: #{_tener_forward_device.2} parent=0 // pred_region
    _
  $region81: #{_tener_forward_device.2} parent=0 // pred_fallthru
    _
  // Predicated region
  $region82: #{_tener_forward_device.2} parent=0 // pred_check
    _
  $region83: #{_tener_forward_device.2} parent=0 // pred_check_branch
    %68 = sbr.rel (0) target = $region85
  $region84: #{_tener_forward_device.2} parent=0 // pred_region
    _
  $region85: #{_tener_forward_device.2} parent=0 // pred_fallthru
    _
  // Predicated region
  $region86: #{_tener_forward_device.2} parent=0 // pred_check
    _
  $region87: #{_tener_forward_device.2} parent=0 // pred_check_branch
    %70 = sbr.rel (0) target = $region89
  $region88: #{_tener_forward_device.2} parent=0 // pred_region
    _
  $region89: #{_tener_forward_device.2} parent=0 // pred_fallthru
    _
  %v71 = vld [vmem:[%s2] sm:$0xff]
  %v72 = vld [vmem:[%s0] sm:$0xff]
  %v73 = vld [vmem:[%s1] sm:$0xff]
  %v74 = vld [vmem:[%s3] sm:$0xff]
  %v75 = vld [vmem:[%s3 + $0x8] sm:$0xff]
  %v76 = vld [vmem:[%s3 + $0x10] sm:$0xff]
  %v77 = vld [vmem:[%s3 + $0x18] sm:$0xff]
  %v78 = vld [vmem:[%s4] sm:$0xff]
  %v79 = vld [vmem:[%s4 + $0x8] sm:$0xff]
  %v80 = vld [vmem:[%s4 + $0x10] sm:$0xff]
  %v81 = vld [vmem:[%s4 + $0x18] sm:$0xff]
  %v82 = vld [vmem:[%s5] sm:$0xff]
  %v83 = vld [vmem:[%s5 + $0x8] sm:$0xff]
  %v84 = vld [vmem:[%s5 + $0x10] sm:$0xff]
  %v85 = vld [vmem:[%s5 + $0x18] sm:$0xff]
  %v86 = vld [vmem:[%s6] sm:$0x1]
  %v87 = vld [vmem:[%s7] sm:$0x1]
  %v88 = vld [vmem:[%s9] sm:$0x1]
  %v89 = vld [vmem:[%s10] sm:$0xff]
  %v90 = vld [vmem:[%s11] sm:$0xff]
  %v91 = vld [vmem:[%s12] sm:$0xff]
  %v92 = vld [vmem:[%s12 + $0x8] sm:$0xff]
  %v93 = vld [vmem:[%s13] sm:$0xff]
  %v94 = vld [vmem:[%s13 + $0x8] sm:$0xff]
  %vm95 = vcmask 261120
  %v97 = vsel %vm95, %v71, 0
  %99 = vmatprep.subr.mxu0 0.0
  %100 = vmatpush1.msra.mxu0 %v74
  %101 = vmatprep.subr.mxu0 0.0
  %102 = vmatpush1.msra.mxu0 %v75
  %103 = vmatprep.subr.mxu0 0.0
  %104 = vmatpush1.msra.mxu0 %v76
  %105 = vmatprep.subr.mxu0 0.0
  %106 = vmatpush1.msra.mxu0 %v77
  %107 = vmatprep.subr.mxu0 0.0
  %108 = vmatpush1.msra.mxu0 0.0
  %109 = vmatprep.subr.mxu0 0.0
  %110 = vmatpush1.msra.mxu0 0.0
  %111 = vmatprep.subr.mxu0 0.0
  %112 = vmatpush1.msra.mxu0 0.0
  %113 = vmatprep.subr.mxu0 0.0
  %114 = vmatpush1.msra.mxu0 0.0
  %115 = vmatprep.subr.mxu0 0.0
  %116 = vmatpush1.msra.mxu0 0.0
  %117 = vmatprep.subr.mxu0 0.0
  %118 = vmatpush1.msra.mxu0 0.0
  %119 = vmatprep.subr.mxu0 0.0
  %120 = vmatpush1.msra.mxu0 0.0
  %121 = vmatprep.subr.mxu0 0.0
  %122 = vmatpush1.msra.mxu0 0.0
  %123 = vmatprep.subr.mxu0 0.0
  %124 = vmatpush1.msra.mxu0 0.0
  %125 = vmatprep.subr.mxu0 0.0
  %126 = vmatpush1.msra.mxu0 0.0
  %127 = vmatprep.subr.mxu0 0.0
  %128 = vmatpush1.msra.mxu0 0.0
  %129 = vmatprep.subr.mxu0 0.0
  %130 = vmatpush1.msra.mxu0 0.0
  %131 = vmatprep.subr.mxu0 0.0
  %132 = vmatpush1.msra.mxu0 0.0
  %133 = vmatprep.subr.mxu0 0.0
  %134 = vmatpush1.msra.mxu0 0.0
  %135 = vmatprep.subr.mxu0 0.0
  %136 = vmatpush1.msra.mxu0 0.0
  %137 = vmatprep.subr.mxu0 0.0
  %138 = vmatpush1.msra.mxu0 0.0
  %139 = vmatprep.subr.mxu0 0.0
  %140 = vmatpush1.msra.mxu0 0.0
  %141 = vmatprep.subr.mxu0 0.0
  %142 = vmatpush1.msra.mxu0 0.0
  %143 = vmatprep.subr.mxu0 0.0
  %144 = vmatpush1.msra.mxu0 0.0
  %145 = vmatprep.subr.mxu0 0.0
  %146 = vmatpush1.msra.mxu0 0.0
  %147 = vmatprep.subr.mxu0 0.0
  %148 = vmatpush1.msra.mxu0 0.0
  %149 = vmatprep.subr.mxu0 0.0
  %150 = vmatpush1.msra.mxu0 0.0
  %151 = vmatprep.subr.mxu0 0.0
  %152 = vmatpush1.msra.mxu0 0.0
  %153 = vmatprep.subr.mxu0 0.0
  %154 = vmatpush1.msra.mxu0 0.0
  %155 = vmatprep.subr.mxu0 0.0
  %156 = vmatpush1.msra.mxu0 0.0
  %157 = vmatprep.subr.mxu0 0.0
  %158 = vmatpush1.msra.mxu0 0.0
  %159 = vmatprep.subr.mxu0 0.0
  %160 = vmatpush1.msra.mxu0 0.0
  %161 = vmatprep.subr.mxu0 0.0
  %162 = vmatpush1.msra.mxu0 0.0
  %163 = vmatprep.mubr.f32.mxu0 0.0
  %164 = vmatmul.mubr.f32.gmra.mrb[0].mxu0 %v97
  %v165 = vpop.f32.mrb[0].mxu0
  %v166 = vadd.f32 0.0, %v165
  %v167 = vpop.f32.mrb[0].mxu0
  %168 = vdwg.mxu0
  %v170 = vsel %vm95, %v73, 0
  %172 = vmatprep.subr.mxu0 0.0
  %173 = vmatpush1.msra.mxu0 %v78
  %174 = vmatprep.subr.mxu0 0.0
  %175 = vmatpush1.msra.mxu0 %v79
  %176 = vmatprep.subr.mxu0 0.0
  %177 = vmatpush1.msra.mxu0 %v80
  %178 = vmatprep.subr.mxu0 0.0
  %179 = vmatpush1.msra.mxu0 %v81
  %180 = vmatprep.subr.mxu0 0.0
  %181 = vmatpush1.msra.mxu0 0.0
  %182 = vmatprep.subr.mxu0 0.0
  %183 = vmatpush1.msra.mxu0 0.0
  %184 = vmatprep.subr.mxu0 0.0
  %185 = vmatpush1.msra.mxu0 0.0
  %186 = vmatprep.subr.mxu0 0.0
  %187 = vmatpush1.msra.mxu0 0.0
  %188 = vmatprep.subr.mxu0 0.0
  %189 = vmatpush1.msra.mxu0 0.0
  %190 = vmatprep.subr.mxu0 0.0
  %191 = vmatpush1.msra.mxu0 0.0
  %192 = vmatprep.subr.mxu0 0.0
  %193 = vmatpush1.msra.mxu0 0.0
  %194 = vmatprep.subr.mxu0 0.0
  %195 = vmatpush1.msra.mxu0 0.0
  %196 = vmatprep.subr.mxu0 0.0
  %197 = vmatpush1.msra.mxu0 0.0
  %198 = vmatprep.subr.mxu0 0.0
  %199 = vmatpush1.msra.mxu0 0.0
  %200 = vmatprep.subr.mxu0 0.0
  %201 = vmatpush1.msra.mxu0 0.0
  %202 = vmatprep.subr.mxu0 0.0
  %203 = vmatpush1.msra.mxu0 0.0
  %204 = vmatprep.subr.mxu0 0.0
  %205 = vmatpush1.msra.mxu0 0.0
  %206 = vmatprep.subr.mxu0 0.0
  %207 = vmatpush1.msra.mxu0 0.0
  %208 = vmatprep.subr.mxu0 0.0
  %209 = vmatpush1.msra.mxu0 0.0
  %210 = vmatprep.subr.mxu0 0.0
  %211 = vmatpush1.msra.mxu0 0.0
  %212 = vmatprep.subr.mxu0 0.0
  %213 = vmatpush1.msra.mxu0 0.0
  %214 = vmatprep.subr.mxu0 0.0
  %215 = vmatpush1.msra.mxu0 0.0
  %216 = vmatprep.subr.mxu0 0.0
  %217 = vmatpush1.msra.mxu0 0.0
  %218 = vmatprep.subr.mxu0 0.0
  %219 = vmatpush1.msra.mxu0 0.0
  %220 = vmatprep.subr.mxu0 0.0
  %221 = vmatpush1.msra.mxu0 0.0
  %222 = vmatprep.subr.mxu0 0.0
  %223 = vmatpush1.msra.mxu0 0.0
  %224 = vmatprep.subr.mxu0 0.0
  %225 = vmatpush1.msra.mxu0 0.0
  %226 = vmatprep.subr.mxu0 0.0
  %227 = vmatpush1.msra.mxu0 0.0
  %228 = vmatprep.subr.mxu0 0.0
  %229 = vmatpush1.msra.mxu0 0.0
  %230 = vmatprep.subr.mxu0 0.0
  %231 = vmatpush1.msra.mxu0 0.0
  %232 = vmatprep.subr.mxu0 0.0
  %233 = vmatpush1.msra.mxu0 0.0
  %234 = vmatprep.subr.mxu0 0.0
  %235 = vmatpush1.msra.mxu0 0.0
  %236 = vmatprep.mubr.f32.mxu0 0.0
  %237 = vmatmul.mubr.f32.gmra.mrb[0].mxu0 %v170
  %v238 = vpop.f32.mrb[0].mxu0
  %v239 = vadd.f32 0.0, %v238
  %v240 = vpop.f32.mrb[0].mxu0
  %241 = vdwg.mxu0
  %v243 = vsel %vm95, %v72, 0
  %245 = vmatprep.subr.mxu0 0.0
  %246 = vmatpush1.msra.mxu0 %v82
  %247 = vmatprep.subr.mxu0 0.0
  %248 = vmatpush1.msra.mxu0 %v83
  %249 = vmatprep.subr.mxu0 0.0
  %250 = vmatpush1.msra.mxu0 %v84
  %251 = vmatprep.subr.mxu0 0.0
  %252 = vmatpush1.msra.mxu0 %v85
  %253 = vmatprep.subr.mxu0 0.0
  %254 = vmatpush1.msra.mxu0 0.0
  %255 = vmatprep.subr.mxu0 0.0
  %256 = vmatpush1.msra.mxu0 0.0
  %257 = vmatprep.subr.mxu0 0.0
  %258 = vmatpush1.msra.mxu0 0.0
  %259 = vmatprep.subr.mxu0 0.0
  %260 = vmatpush1.msra.mxu0 0.0
  %261 = vmatprep.subr.mxu0 0.0
  %262 = vmatpush1.msra.mxu0 0.0
  %263 = vmatprep.subr.mxu0 0.0
  %264 = vmatpush1.msra.mxu0 0.0
  %265 = vmatprep.subr.mxu0 0.0
  %266 = vmatpush1.msra.mxu0 0.0
  %267 = vmatprep.subr.mxu0 0.0
  %268 = vmatpush1.msra.mxu0 0.0
  %269 = vmatprep.subr.mxu0 0.0
  %270 = vmatpush1.msra.mxu0 0.0
  %271 = vmatprep.subr.mxu0 0.0
  %272 = vmatpush1.msra.mxu0 0.0
  %273 = vmatprep.subr.mxu0 0.0
  %274 = vmatpush1.msra.mxu0 0.0
  %275 = vmatprep.subr.mxu0 0.0
  %276 = vmatpush1.msra.mxu0 0.0
  %277 = vmatprep.subr.mxu0 0.0
  %278 = vmatpush1.msra.mxu0 0.0
  %279 = vmatprep.subr.mxu0 0.0
  %280 = vmatpush1.msra.mxu0 0.0
  %281 = vmatprep.subr.mxu0 0.0
  %282 = vmatpush1.msra.mxu0 0.0
  %283 = vmatprep.subr.mxu0 0.0
  %284 = vmatpush1.msra.mxu0 0.0
  %285 = vmatprep.subr.mxu0 0.0
  %286 = vmatpush1.msra.mxu0 0.0
  %287 = vmatprep.subr.mxu0 0.0
  %288 = vmatpush1.msra.mxu0 0.0
  %289 = vmatprep.subr.mxu0 0.0
  %290 = vmatpush1.msra.mxu0 0.0
  %291 = vmatprep.subr.mxu0 0.0
  %292 = vmatpush1.msra.mxu0 0.0
  %293 = vmatprep.subr.mxu0 0.0
  %294 = vmatpush1.msra.mxu0 0.0
  %295 = vmatprep.subr.mxu0 0.0
  %296 = vmatpush1.msra.mxu0 0.0
  %297 = vmatprep.subr.mxu0 0.0
  %298 = vmatpush1.msra.mxu0 0.0
  %299 = vmatprep.subr.mxu0 0.0
  %300 = vmatpush1.msra.mxu0 0.0
  %301 = vmatprep.subr.mxu0 0.0
  %302 = vmatpush1.msra.mxu0 0.0
  %303 = vmatprep.subr.mxu0 0.0
  %304 = vmatpush1.msra.mxu0 0.0
  %305 = vmatprep.subr.mxu0 0.0
  %306 = vmatpush1.msra.mxu0 0.0
  %307 = vmatprep.subr.mxu0 0.0
  %308 = vmatpush1.msra.mxu0 0.0
  %309 = vmatprep.mubr.f32.mxu0 0.0
  %310 = vmatmul.mubr.f32.gmra.mrb[0].mxu0 %v243
  %v311 = vpop.f32.mrb[0].mxu0
  %v312 = vadd.f32 0.0, %v311
  %v313 = vpop.f32.mrb[0].mxu0
  %314 = vdwg.mxu0
  %v316 = vlaneseq
  %v317 = vshrl.u32 %v316, 7
  %v318 = vsub.s32 0, %v317
  %v319 = vrot.slane %v86, %v318
  %v321 = vadd.f32 %v166, %v319
  %v323 = vlaneseq
  %v324 = vshrl.u32 %v323, 7
  %v325 = vsub.s32 0, %v324
  %v326 = vrot.slane %v87, %v325
  %v328 = vadd.f32 %v166, %v326
  %v329 = vmul.f32 %v328, %v89
  %vm330 = vcmask 130048
  %v332 = vsel %vm330, %v329, 0
  %334 = vmatprep.subr.mxu0 0.0
  %335 = vmatpush1.msra.mxu0 %v91
  %336 = vmatprep.subr.mxu0 0.0
  %337 = vmatpush1.msra.mxu0 %v92
  %338 = vmatprep.subr.mxu0 0.0
  %339 = vmatpush1.msra.mxu0 0.0
  %340 = vmatprep.subr.mxu0 0.0
  %341 = vmatpush1.msra.mxu0 0.0
  %342 = vmatprep.subr.mxu0 0.0
  %343 = vmatpush1.msra.mxu0 0.0
  %344 = vmatprep.subr.mxu0 0.0
  %345 = vmatpush1.msra.mxu0 0.0
  %346 = vmatprep.subr.mxu0 0.0
  %347 = vmatpush1.msra.mxu0 0.0
  %348 = vmatprep.subr.mxu0 0.0
  %349 = vmatpush1.msra.mxu0 0.0
  %350 = vmatprep.subr.mxu0 0.0
  %351 = vmatpush1.msra.mxu0 0.0
  %352 = vmatprep.subr.mxu0 0.0
  %353 = vmatpush1.msra.mxu0 0.0
  %354 = vmatprep.subr.mxu0 0.0
  %355 = vmatpush1.msra.mxu0 0.0
  %356 = vmatprep.subr.mxu0 0.0
  %357 = vmatpush1.msra.mxu0 0.0
  %358 = vmatprep.subr.mxu0 0.0
  %359 = vmatpush1.msra.mxu0 0.0
  %360 = vmatprep.subr.mxu0 0.0
  %361 = vmatpush1.msra.mxu0 0.0
  %362 = vmatprep.subr.mxu0 0.0
  %363 = vmatpush1.msra.mxu0 0.0
  %364 = vmatprep.subr.mxu0 0.0
  %365 = vmatpush1.msra.mxu0 0.0
  %366 = vmatprep.subr.mxu0 0.0
  %367 = vmatpush1.msra.mxu0 0.0
  %368 = vmatprep.subr.mxu0 0.0
  %369 = vmatpush1.msra.mxu0 0.0
  %370 = vmatprep.subr.mxu0 0.0
  %371 = vmatpush1.msra.mxu0 0.0
  %372 = vmatprep.subr.mxu0 0.0
  %373 = vmatpush1.msra.mxu0 0.0
  %374 = vmatprep.subr.mxu0 0.0
  %375 = vmatpush1.msra.mxu0 0.0
  %376 = vmatprep.subr.mxu0 0.0
  %377 = vmatpush1.msra.mxu0 0.0
  %378 = vmatprep.subr.mxu0 0.0
  %379 = vmatpush1.msra.mxu0 0.0
  %380 = vmatprep.subr.mxu0 0.0
  %381 = vmatpush1.msra.mxu0 0.0
  %382 = vmatprep.subr.mxu0 0.0
  %383 = vmatpush1.msra.mxu0 0.0
  %384 = vmatprep.subr.mxu0 0.0
  %385 = vmatpush1.msra.mxu0 0.0
  %386 = vmatprep.subr.mxu0 0.0
  %387 = vmatpush1.msra.mxu0 0.0
  %388 = vmatprep.subr.mxu0 0.0
  %389 = vmatpush1.msra.mxu0 0.0
  %390 = vmatprep.subr.mxu0 0.0
  %391 = vmatpush1.msra.mxu0 0.0
  %392 = vmatprep.subr.mxu0 0.0
  %393 = vmatpush1.msra.mxu0 0.0
  %394 = vmatprep.subr.mxu0 0.0
  %395 = vmatpush1.msra.mxu0 0.0
  %396 = vmatprep.subr.mxu0 0.0
  %397 = vmatpush1.msra.mxu0 0.0
  %398 = vmatprep.mubr.f32.mxu0 0.0
  %399 = vmatmul.mubr.f32.gmra.mrb[0].mxu0 %v332
  %v400 = vpop.f32.mrb[0].mxu0
  %v401 = vadd.f32 0.0, %v400
  %v402 = vpop.f32.mrb[0].mxu0
  %403 = vdwg.mxu0
  %v405 = vsel %vm330, %v321, 0
  %v408 = vsel %vm330, %v239, 0
  %410 = vmatprep.subr.mxu0 0.0
  %411 = vmatpush1.xpose.msra.mxu0 %v408
  %412 = vmatprep.subr.mxu0 0.0
  %413 = vmatpush1.xpose.msra.mxu0 0.0
  %414 = vmatprep.subr.mxu0 0.0
  %415 = vmatpush1.xpose.msra.mxu0 0.0
  %416 = vmatprep.subr.mxu0 0.0
  %417 = vmatpush1.xpose.msra.mxu0 0.0
  %418 = vmatprep.subr.mxu0 0.0
  %419 = vmatpush1.xpose.msra.mxu0 0.0
  %420 = vmatprep.subr.mxu0 0.0
  %421 = vmatpush1.xpose.msra.mxu0 0.0
  %422 = vmatprep.subr.mxu0 0.0
  %423 = vmatpush1.xpose.msra.mxu0 0.0
  %424 = vmatprep.subr.mxu0 0.0
  %425 = vmatpush1.xpose.msra.mxu0 0.0
  %426 = vmatprep.subr.mxu0 0.0
  %427 = vmatpush1.xpose.msra.mxu0 0.0
  %428 = vmatprep.subr.mxu0 0.0
  %429 = vmatpush1.xpose.msra.mxu0 0.0
  %430 = vmatprep.subr.mxu0 0.0
  %431 = vmatpush1.xpose.msra.mxu0 0.0
  %432 = vmatprep.subr.mxu0 0.0
  %433 = vmatpush1.xpose.msra.mxu0 0.0
  %434 = vmatprep.subr.mxu0 0.0
  %435 = vmatpush1.xpose.msra.mxu0 0.0
  %436 = vmatprep.subr.mxu0 0.0
  %437 = vmatpush1.xpose.msra.mxu0 0.0
  %438 = vmatprep.subr.mxu0 0.0
  %439 = vmatpush1.xpose.msra.mxu0 0.0
  %440 = vmatprep.subr.mxu0 0.0
  %441 = vmatpush1.xpose.msra.mxu0 0.0
  %442 = vmatprep.subr.mxu0 0.0
  %443 = vmatpush1.xpose.msra.mxu0 0.0
  %444 = vmatprep.subr.mxu0 0.0
  %445 = vmatpush1.xpose.msra.mxu0 0.0
  %446 = vmatprep.subr.mxu0 0.0
  %447 = vmatpush1.xpose.msra.mxu0 0.0
  %448 = vmatprep.subr.mxu0 0.0
  %449 = vmatpush1.xpose.msra.mxu0 0.0
  %450 = vmatprep.subr.mxu0 0.0
  %451 = vmatpush1.xpose.msra.mxu0 0.0
  %452 = vmatprep.subr.mxu0 0.0
  %453 = vmatpush1.xpose.msra.mxu0 0.0
  %454 = vmatprep.subr.mxu0 0.0
  %455 = vmatpush1.xpose.msra.mxu0 0.0
  %456 = vmatprep.subr.mxu0 0.0
  %457 = vmatpush1.xpose.msra.mxu0 0.0
  %458 = vmatprep.subr.mxu0 0.0
  %459 = vmatpush1.xpose.msra.mxu0 0.0
  %460 = vmatprep.subr.mxu0 0.0
  %461 = vmatpush1.xpose.msra.mxu0 0.0
  %462 = vmatprep.subr.mxu0 0.0
  %463 = vmatpush1.xpose.msra.mxu0 0.0
  %464 = vmatprep.subr.mxu0 0.0
  %465 = vmatpush1.xpose.msra.mxu0 0.0
  %466 = vmatprep.subr.mxu0 0.0
  %467 = vmatpush1.xpose.msra.mxu0 0.0
  %468 = vmatprep.subr.mxu0 0.0
  %469 = vmatpush1.xpose.msra.mxu0 0.0
  %470 = vmatprep.subr.mxu0 0.0
  %471 = vmatpush1.xpose.msra.mxu0 0.0
  %472 = vmatprep.subr.mxu0 0.0
  %473 = vmatpush1.xpose.msra.mxu0 0.0
  %474 = vmatprep.mubr.f32.mxu0 0.0
  %475 = vmatmul.mubr.f32.gmra.mrb[0].mxu0 %v405
  %v476 = vpop.f32.mrb[0].mxu0
  %v477 = vadd.f32 %v401, %v476
  %v478 = vpop.f32.mrb[0].mxu0
  %479 = vdwg.mxu0
  %v480 = vmul.f32 %v328, %v90
  %v482 = vsel %vm330, %v480, 0
  %484 = vmatprep.subr.mxu0 0.0
  %485 = vmatpush1.msra.mxu0 %v93
  %486 = vmatprep.subr.mxu0 0.0
  %487 = vmatpush1.msra.mxu0 %v94
  %488 = vmatprep.subr.mxu0 0.0
  %489 = vmatpush1.msra.mxu0 0.0
  %490 = vmatprep.subr.mxu0 0.0
  %491 = vmatpush1.msra.mxu0 0.0
  %492 = vmatprep.subr.mxu0 0.0
  %493 = vmatpush1.msra.mxu0 0.0
  %494 = vmatprep.subr.mxu0 0.0
  %495 = vmatpush1.msra.mxu0 0.0
  %496 = vmatprep.subr.mxu0 0.0
  %497 = vmatpush1.msra.mxu0 0.0
  %498 = vmatprep.subr.mxu0 0.0
  %499 = vmatpush1.msra.mxu0 0.0
  %500 = vmatprep.subr.mxu0 0.0
  %501 = vmatpush1.msra.mxu0 0.0
  %502 = vmatprep.subr.mxu0 0.0
  %503 = vmatpush1.msra.mxu0 0.0
  %504 = vmatprep.subr.mxu0 0.0
  %505 = vmatpush1.msra.mxu0 0.0
  %506 = vmatprep.subr.mxu0 0.0
  %507 = vmatpush1.msra.mxu0 0.0
  %508 = vmatprep.subr.mxu0 0.0
  %509 = vmatpush1.msra.mxu0 0.0
  %510 = vmatprep.subr.mxu0 0.0
  %511 = vmatpush1.msra.mxu0 0.0
  %512 = vmatprep.subr.mxu0 0.0
  %513 = vmatpush1.msra.mxu0 0.0
  %514 = vmatprep.subr.mxu0 0.0
  %515 = vmatpush1.msra.mxu0 0.0
  %516 = vmatprep.subr.mxu0 0.0
  %517 = vmatpush1.msra.mxu0 0.0
  %518 = vmatprep.subr.mxu0 0.0
  %519 = vmatpush1.msra.mxu0 0.0
  %520 = vmatprep.subr.mxu0 0.0
  %521 = vmatpush1.msra.mxu0 0.0
  %522 = vmatprep.subr.mxu0 0.0
  %523 = vmatpush1.msra.mxu0 0.0
  %524 = vmatprep.subr.mxu0 0.0
  %525 = vmatpush1.msra.mxu0 0.0
  %526 = vmatprep.subr.mxu0 0.0
  %527 = vmatpush1.msra.mxu0 0.0
  %528 = vmatprep.subr.mxu0 0.0
  %529 = vmatpush1.msra.mxu0 0.0
  %530 = vmatprep.subr.mxu0 0.0
  %531 = vmatpush1.msra.mxu0 0.0
  %532 = vmatprep.subr.mxu0 0.0
  %533 = vmatpush1.msra.mxu0 0.0
  %534 = vmatprep.subr.mxu0 0.0
  %535 = vmatpush1.msra.mxu0 0.0
  %536 = vmatprep.subr.mxu0 0.0
  %537 = vmatpush1.msra.mxu0 0.0
  %538 = vmatprep.subr.mxu0 0.0
  %539 = vmatpush1.msra.mxu0 0.0
  %540 = vmatprep.subr.mxu0 0.0
  %541 = vmatpush1.msra.mxu0 0.0
  %542 = vmatprep.subr.mxu0 0.0
  %543 = vmatpush1.msra.mxu0 0.0
  %544 = vmatprep.subr.mxu0 0.0
  %545 = vmatpush1.msra.mxu0 0.0
  %546 = vmatprep.subr.mxu0 0.0
  %547 = vmatpush1.msra.mxu0 0.0
  %548 = vmatprep.mubr.f32.mxu0 0.0
  %549 = vmatmul.mubr.f32.gmra.mrb[0].mxu0 %v482
  %v550 = vpop.f32.mrb[0].mxu0
  %v551 = vadd.f32 0.0, %v550
  %v552 = vpop.f32.mrb[0].mxu0
  %553 = vdwg.mxu0
  %v554 = vadd.f32 %v477, %v551
  %v555 = vmul.f32 %v554, 0.25
  %vm556 = vcmask 64512
  %v557 = vsel %vm556, %v555, -inf
  %558 = vmax.xlane.f32.xlu0 %v557
  %v559 = vpop.xlane.xlu0 %558
  %v560 = vsub.f32 %v555, %v559
  %v561 = vmul.f32 %v560, 1.442695
  %v562 = vpow.pop %v561
  %v563 = vsel %vm556, %v562, 0.0
  %564 = vadd.xlane.f32.xlu0 %v563
  %v565 = vpop.xlane.xlu0 %564
  %v566 = vrcp.pop %v565
  %v567 = vmul.f32 %v562, %v566
  %v569 = vsel %vm556, %v567, 0
  %571 = vmatprep.subr.mxu0 0.0
  %572 = vmatpush1.msra.mxu0 %v312
  %573 = vmatprep.subr.mxu0 0.0
  %574 = vmatpush1.msra.mxu0 0.0
  %575 = vmatprep.subr.mxu0 0.0
  %576 = vmatpush1.msra.mxu0 0.0
  %577 = vmatprep.subr.mxu0 0.0
  %578 = vmatpush1.msra.mxu0 0.0
  %579 = vmatprep.subr.mxu0 0.0
  %580 = vmatpush1.msra.mxu0 0.0
  %581 = vmatprep.subr.mxu0 0.0
  %582 = vmatpush1.msra.mxu0 0.0
  %583 = vmatprep.subr.mxu0 0.0
  %584 = vmatpush1.msra.mxu0 0.0
  %585 = vmatprep.subr.mxu0 0.0
  %586 = vmatpush1.msra.mxu0 0.0
  %587 = vmatprep.subr.mxu0 0.0
  %588 = vmatpush1.msra.mxu0 0.0
  %589 = vmatprep.subr.mxu0 0.0
  %590 = vmatpush1.msra.mxu0 0.0
  %591 = vmatprep.subr.mxu0 0.0
  %592 = vmatpush1.msra.mxu0 0.0
  %593 = vmatprep.subr.mxu0 0.0
  %594 = vmatpush1.msra.mxu0 0.0
  %595 = vmatprep.subr.mxu0 0.0
  %596 = vmatpush1.msra.mxu0 0.0
  %597 = vmatprep.subr.mxu0 0.0
  %598 = vmatpush1.msra.mxu0 0.0
  %599 = vmatprep.subr.mxu0 0.0
  %600 = vmatpush1.msra.mxu0 0.0
  %601 = vmatprep.subr.mxu0 0.0
  %602 = vmatpush1.msra.mxu0 0.0
  %603 = vmatprep.subr.mxu0 0.0
  %604 = vmatpush1.msra.mxu0 0.0
  %605 = vmatprep.subr.mxu0 0.0
  %606 = vmatpush1.msra.mxu0 0.0
  %607 = vmatprep.subr.mxu0 0.0
  %608 = vmatpush1.msra.mxu0 0.0
  %609 = vmatprep.subr.mxu0 0.0
  %610 = vmatpush1.msra.mxu0 0.0
  %611 = vmatprep.subr.mxu0 0.0
  %612 = vmatpush1.msra.mxu0 0.0
  %613 = vmatprep.subr.mxu0 0.0
  %614 = vmatpush1.msra.mxu0 0.0
  %615 = vmatprep.subr.mxu0 0.0
  %616 = vmatpush1.msra.mxu0 0.0
  %617 = vmatprep.subr.mxu0 0.0
  %618 = vmatpush1.msra.mxu0 0.0
  %619 = vmatprep.subr.mxu0 0.0
  %620 = vmatpush1.msra.mxu0 0.0
  %621 = vmatprep.subr.mxu0 0.0
  %622 = vmatpush1.msra.mxu0 0.0
  %623 = vmatprep.subr.mxu0 0.0
  %624 = vmatpush1.msra.mxu0 0.0
  %625 = vmatprep.subr.mxu0 0.0
  %626 = vmatpush1.msra.mxu0 0.0
  %627 = vmatprep.subr.mxu0 0.0
  %628 = vmatpush1.msra.mxu0 0.0
  %629 = vmatprep.subr.mxu0 0.0
  %630 = vmatpush1.msra.mxu0 0.0
  %631 = vmatprep.subr.mxu0 0.0
  %632 = vmatpush1.msra.mxu0 0.0
  %633 = vmatprep.subr.mxu0 0.0
  %634 = vmatpush1.msra.mxu0 0.0
  %635 = vmatprep.mubr.f32.mxu0 0.0
  %636 = vmatmul.mubr.f32.gmra.mrb[0].mxu0 %v569
  %v637 = vpop.f32.mrb[0].mxu0
  %v638 = vadd.f32 0.0, %v637
  %v639 = vpop.f32.mrb[0].mxu0
  %640 = vdwg.mxu0
  %v641 = vld [vmem:[%s8] sm:$0xff]
  %v642 = vld [vmem:[%s8 + $0x8] sm:$0xff]
  %644 = vrot.lane.b32.xlu0 %v89, 16
  %v645 = vpop.permute.xlu0 %644
  %v647 = vmul.f32 %v328, %v645
  %649 = vrot.lane.b32.xlu0 %v647, 112
  %v650 = vpop.permute.xlu0 %649
  %v651 = vsel %vm330, %v650, 0
  %653 = vmatprep.subr.mxu0 0.0
  %654 = vmatpush1.msra.mxu0 %v91
  %655 = vmatprep.subr.mxu0 0.0
  %656 = vmatpush1.msra.mxu0 %v92
  %657 = vmatprep.subr.mxu0 0.0
  %658 = vmatpush1.msra.mxu0 0.0
  %659 = vmatprep.subr.mxu0 0.0
  %660 = vmatpush1.msra.mxu0 0.0
  %661 = vmatprep.subr.mxu0 0.0
  %662 = vmatpush1.msra.mxu0 0.0
  %663 = vmatprep.subr.mxu0 0.0
  %664 = vmatpush1.msra.mxu0 0.0
  %665 = vmatprep.subr.mxu0 0.0
  %666 = vmatpush1.msra.mxu0 0.0
  %667 = vmatprep.subr.mxu0 0.0
  %668 = vmatpush1.msra.mxu0 0.0
  %669 = vmatprep.subr.mxu0 0.0
  %670 = vmatpush1.msra.mxu0 0.0
  %671 = vmatprep.subr.mxu0 0.0
  %672 = vmatpush1.msra.mxu0 0.0
  %673 = vmatprep.subr.mxu0 0.0
  %674 = vmatpush1.msra.mxu0 0.0
  %675 = vmatprep.subr.mxu0 0.0
  %676 = vmatpush1.msra.mxu0 0.0
  %677 = vmatprep.subr.mxu0 0.0
  %678 = vmatpush1.msra.mxu0 0.0
  %679 = vmatprep.subr.mxu0 0.0
  %680 = vmatpush1.msra.mxu0 0.0
  %681 = vmatprep.subr.mxu0 0.0
  %682 = vmatpush1.msra.mxu0 0.0
  %683 = vmatprep.subr.mxu0 0.0
  %684 = vmatpush1.msra.mxu0 0.0
  %685 = vmatprep.subr.mxu0 0.0
  %686 = vmatpush1.msra.mxu0 0.0
  %687 = vmatprep.subr.mxu0 0.0
  %688 = vmatpush1.msra.mxu0 0.0
  %689 = vmatprep.subr.mxu0 0.0
  %690 = vmatpush1.msra.mxu0 0.0
  %691 = vmatprep.subr.mxu0 0.0
  %692 = vmatpush1.msra.mxu0 0.0
  %693 = vmatprep.subr.mxu0 0.0
  %694 = vmatpush1.msra.mxu0 0.0
  %695 = vmatprep.subr.mxu0 0.0
  %696 = vmatpush1.msra.mxu0 0.0
  %697 = vmatprep.subr.mxu0 0.0
  %698 = vmatpush1.msra.mxu0 0.0
  %699 = vmatprep.subr.mxu0 0.0
  %700 = vmatpush1.msra.mxu0 0.0
  %701 = vmatprep.subr.mxu0 0.0
  %702 = vmatpush1.msra.mxu0 0.0
  %703 = vmatprep.subr.mxu0 0.0
  %704 = vmatpush1.msra.mxu0 0.0
  %705 = vmatprep.subr.mxu0 0.0
  %706 = vmatpush1.msra.mxu0 0.0
  %707 = vmatprep.subr.mxu0 0.0
  %708 = vmatpush1.msra.mxu0 0.0
  %709 = vmatprep.subr.mxu0 0.0
  %710 = vmatpush1.msra.mxu0 0.0
  %711 = vmatprep.subr.mxu0 0.0
  %712 = vmatpush1.msra.mxu0 0.0
  %713 = vmatprep.subr.mxu0 0.0
  %714 = vmatpush1.msra.mxu0 0.0
  %715 = vmatprep.subr.mxu0 0.0
  %716 = vmatpush1.msra.mxu0 0.0
  %717 = vmatprep.mubr.f32.mxu0 0.0
  %718 = vmatmul.mubr.f32.gmra.mrb[0].mxu0 %v651
  %v719 = vpop.f32.mrb[0].mxu0
  %v720 = vadd.f32 0.0, %v719
  %v721 = vpop.f32.mrb[0].mxu0
  %722 = vdwg.mxu0
  %723 = vrot.lane.b32.xlu0 %v321, 112
  %v724 = vpop.permute.xlu0 %723
  %725 = vrot.lane.b32.xlu0 %v239, 112
  %v726 = vpop.permute.xlu0 %725
  %v727 = vsel %vm330, %v724, 0
  %v729 = vsel %vm330, %v726, 0
  %731 = vmatprep.subr.mxu0 0.0
  %732 = vmatpush1.xpose.msra.mxu0 %v729
  %733 = vmatprep.subr.mxu0 0.0
  %734 = vmatpush1.xpose.msra.mxu0 0.0
  %735 = vmatprep.subr.mxu0 0.0
  %736 = vmatpush1.xpose.msra.mxu0 0.0
  %737 = vmatprep.subr.mxu0 0.0
  %738 = vmatpush1.xpose.msra.mxu0 0.0
  %739 = vmatprep.subr.mxu0 0.0
  %740 = vmatpush1.xpose.msra.mxu0 0.0
  %741 = vmatprep.subr.mxu0 0.0
  %742 = vmatpush1.xpose.msra.mxu0 0.0
  %743 = vmatprep.subr.mxu0 0.0
  %744 = vmatpush1.xpose.msra.mxu0 0.0
  %745 = vmatprep.subr.mxu0 0.0
  %746 = vmatpush1.xpose.msra.mxu0 0.0
  %747 = vmatprep.subr.mxu0 0.0
  %748 = vmatpush1.xpose.msra.mxu0 0.0
  %749 = vmatprep.subr.mxu0 0.0
  %750 = vmatpush1.xpose.msra.mxu0 0.0
  %751 = vmatprep.subr.mxu0 0.0
  %752 = vmatpush1.xpose.msra.mxu0 0.0
  %753 = vmatprep.subr.mxu0 0.0
  %754 = vmatpush1.xpose.msra.mxu0 0.0
  %755 = vmatprep.subr.mxu0 0.0
  %756 = vmatpush1.xpose.msra.mxu0 0.0
  %757 = vmatprep.subr.mxu0 0.0
  %758 = vmatpush1.xpose.msra.mxu0 0.0
  %759 = vmatprep.subr.mxu0 0.0
  %760 = vmatpush1.xpose.msra.mxu0 0.0
  %761 = vmatprep.subr.mxu0 0.0
  %762 = vmatpush1.xpose.msra.mxu0 0.0
  %763 = vmatprep.subr.mxu0 0.0
  %764 = vmatpush1.xpose.msra.mxu0 0.0
  %765 = vmatprep.subr.mxu0 0.0
  %766 = vmatpush1.xpose.msra.mxu0 0.0
  %767 = vmatprep.subr.mxu0 0.0
  %768 = vmatpush1.xpose.msra.mxu0 0.0
  %769 = vmatprep.subr.mxu0 0.0
  %770 = vmatpush1.xpose.msra.mxu0 0.0
  %771 = vmatprep.subr.mxu0 0.0
  %772 = vmatpush1.xpose.msra.mxu0 0.0
  %773 = vmatprep.subr.mxu0 0.0
  %774 = vmatpush1.xpose.msra.mxu0 0.0
  %775 = vmatprep.subr.mxu0 0.0
  %776 = vmatpush1.xpose.msra.mxu0 0.0
  %777 = vmatprep.subr.mxu0 0.0
  %778 = vmatpush1.xpose.msra.mxu0 0.0
  %779 = vmatprep.subr.mxu0 0.0
  %780 = vmatpush1.xpose.msra.mxu0 0.0
  %781 = vmatprep.subr.mxu0 0.0
  %782 = vmatpush1.xpose.msra.mxu0 0.0
  %783 = vmatprep.subr.mxu0 0.0
  %784 = vmatpush1.xpose.msra.mxu0 0.0
  %785 = vmatprep.subr.mxu0 0.0
  %786 = vmatpush1.xpose.msra.mxu0 0.0
  %787 = vmatprep.subr.mxu0 0.0
  %788 = vmatpush1.xpose.msra.mxu0 0.0
  %789 = vmatprep.subr.mxu0 0.0
  %790 = vmatpush1.xpose.msra.mxu0 0.0
  %791 = vmatprep.subr.mxu0 0.0
  %792 = vmatpush1.xpose.msra.mxu0 0.0
  %793 = vmatprep.subr.mxu0 0.0
  %794 = vmatpush1.xpose.msra.mxu0 0.0
  %795 = vmatprep.mubr.f32.mxu0 0.0
  %796 = vmatmul.mubr.f32.gmra.mrb[0].mxu0 %v727
  %v797 = vpop.f32.mrb[0].mxu0
  %v798 = vadd.f32 %v720, %v797
  %v799 = vpop.f32.mrb[0].mxu0
  %800 = vdwg.mxu0
  %802 = vrot.lane.b32.xlu0 %v90, 16
  %v803 = vpop.permute.xlu0 %802
  %v805 = vmul.f32 %v328, %v803
  %807 = vrot.lane.b32.xlu0 %v805, 112
  %v808 = vpop.permute.xlu0 %807
  %v809 = vsel %vm330, %v808, 0
  %811 = vmatprep.subr.mxu0 0.0
  %812 = vmatpush1.msra.mxu0 %v93
  %813 = vmatprep.subr.mxu0 0.0
  %814 = vmatpush1.msra.mxu0 %v94
  %815 = vmatprep.subr.mxu0 0.0
  %816 = vmatpush1.msra.mxu0 0.0
  %817 = vmatprep.subr.mxu0 0.0
  %818 = vmatpush1.msra.mxu0 0.0
  %819 = vmatprep.subr.mxu0 0.0
  %820 = vmatpush1.msra.mxu0 0.0
  %821 = vmatprep.subr.mxu0 0.0
  %822 = vmatpush1.msra.mxu0 0.0
  %823 = vmatprep.subr.mxu0 0.0
  %824 = vmatpush1.msra.mxu0 0.0
  %825 = vmatprep.subr.mxu0 0.0
  %826 = vmatpush1.msra.mxu0 0.0
  %827 = vmatprep.subr.mxu0 0.0
  %828 = vmatpush1.msra.mxu0 0.0
  %829 = vmatprep.subr.mxu0 0.0
  %830 = vmatpush1.msra.mxu0 0.0
  %831 = vmatprep.subr.mxu0 0.0
  %832 = vmatpush1.msra.mxu0 0.0
  %833 = vmatprep.subr.mxu0 0.0
  %834 = vmatpush1.msra.mxu0 0.0
  %835 = vmatprep.subr.mxu0 0.0
  %836 = vmatpush1.msra.mxu0 0.0
  %837 = vmatprep.subr.mxu0 0.0
  %838 = vmatpush1.msra.mxu0 0.0
  %839 = vmatprep.subr.mxu0 0.0
  %840 = vmatpush1.msra.mxu0 0.0
  %841 = vmatprep.subr.mxu0 0.0
  %842 = vmatpush1.msra.mxu0 0.0
  %843 = vmatprep.subr.mxu0 0.0
  %844 = vmatpush1.msra.mxu0 0.0
  %845 = vmatprep.subr.mxu0 0.0
  %846 = vmatpush1.msra.mxu0 0.0
  %847 = vmatprep.subr.mxu0 0.0
  %848 = vmatpush1.msra.mxu0 0.0
  %849 = vmatprep.subr.mxu0 0.0
  %850 = vmatpush1.msra.mxu0 0.0
  %851 = vmatprep.subr.mxu0 0.0
  %852 = vmatpush1.msra.mxu0 0.0
  %853 = vmatprep.subr.mxu0 0.0
  %854 = vmatpush1.msra.mxu0 0.0
  %855 = vmatprep.subr.mxu0 0.0
  %856 = vmatpush1.msra.mxu0 0.0
  %857 = vmatprep.subr.mxu0 0.0
  %858 = vmatpush1.msra.mxu0 0.0
  %859 = vmatprep.subr.mxu0 0.0
  %860 = vmatpush1.msra.mxu0 0.0
  %861 = vmatprep.subr.mxu0 0.0
  %862 = vmatpush1.msra.mxu0 0.0
  %863 = vmatprep.subr.mxu0 0.0
  %864 = vmatpush1.msra.mxu0 0.0
  %865 = vmatprep.subr.mxu0 0.0
  %866 = vmatpush1.msra.mxu0 0.0
  %867 = vmatprep.subr.mxu0 0.0
  %868 = vmatpush1.msra.mxu0 0.0
  %869 = vmatprep.subr.mxu0 0.0
  %870 = vmatpush1.msra.mxu0 0.0
  %871 = vmatprep.subr.mxu0 0.0
  %872 = vmatpush1.msra.mxu0 0.0
  %873 = vmatprep.subr.mxu0 0.0
  %874 = vmatpush1.msra.mxu0 0.0
  %875 = vmatprep.mubr.f32.mxu0 0.0
  %876 = vmatmul.mubr.f32.gmra.mrb[0].mxu0 %v809
  %v877 = vpop.f32.mrb[0].mxu0
  %v878 = vadd.f32 0.0, %v877
  %v879 = vpop.f32.mrb[0].mxu0
  %880 = vdwg.mxu0
  %v881 = vadd.f32 %v798, %v878
  %v882 = vmul.f32 %v881, 0.25
  %v883 = vsel %vm556, %v882, -inf
  %884 = vmax.xlane.f32.xlu0 %v883
  %v885 = vpop.xlane.xlu0 %884
  %v886 = vsub.f32 %v882, %v885
  %v887 = vmul.f32 %v886, 1.442695
  %v888 = vpow.pop %v887
  %v889 = vsel %vm556, %v888, 0.0
  %890 = vadd.xlane.f32.xlu0 %v889
  %v891 = vpop.xlane.xlu0 %890
  %v892 = vrcp.pop %v891
  %v893 = vmul.f32 %v888, %v892
  %895 = vrot.lane.b32.xlu0 %v312, 112
  %v896 = vpop.permute.xlu0 %895
  %v899 = vsel %vm556, %v893, 0
  %901 = vmatprep.subr.mxu0 0.0
  %902 = vmatpush1.msra.mxu0 %v896
  %903 = vmatprep.subr.mxu0 0.0
  %904 = vmatpush1.msra.mxu0 0.0
  %905 = vmatprep.subr.mxu0 0.0
  %906 = vmatpush1.msra.mxu0 0.0
  %907 = vmatprep.subr.mxu0 0.0
  %908 = vmatpush1.msra.mxu0 0.0
  %909 = vmatprep.subr.mxu0 0.0
  %910 = vmatpush1.msra.mxu0 0.0
  %911 = vmatprep.subr.mxu0 0.0
  %912 = vmatpush1.msra.mxu0 0.0
  %913 = vmatprep.subr.mxu0 0.0
  %914 = vmatpush1.msra.mxu0 0.0
  %915 = vmatprep.subr.mxu0 0.0
  %916 = vmatpush1.msra.mxu0 0.0
  %917 = vmatprep.subr.mxu0 0.0
  %918 = vmatpush1.msra.mxu0 0.0
  %919 = vmatprep.subr.mxu0 0.0
  %920 = vmatpush1.msra.mxu0 0.0
  %921 = vmatprep.subr.mxu0 0.0
  %922 = vmatpush1.msra.mxu0 0.0
  %923 = vmatprep.subr.mxu0 0.0
  %924 = vmatpush1.msra.mxu0 0.0
  %925 = vmatprep.subr.mxu0 0.0
  %926 = vmatpush1.msra.mxu0 0.0
  %927 = vmatprep.subr.mxu0 0.0
  %928 = vmatpush1.msra.mxu0 0.0
  %929 = vmatprep.subr.mxu0 0.0
  %930 = vmatpush1.msra.mxu0 0.0
  %931 = vmatprep.subr.mxu0 0.0
  %932 = vmatpush1.msra.mxu0 0.0
  %933 = vmatprep.subr.mxu0 0.0
  %934 = vmatpush1.msra.mxu0 0.0
  %935 = vmatprep.subr.mxu0 0.0
  %936 = vmatpush1.msra.mxu0 0.0
  %937 = vmatprep.subr.mxu0 0.0
  %938 = vmatpush1.msra.mxu0 0.0
  %939 = vmatprep.subr.mxu0 0.0
  %940 = vmatpush1.msra.mxu0 0.0
  %941 = vmatprep.subr.mxu0 0.0
  %942 = vmatpush1.msra.mxu0 0.0
  %943 = vmatprep.subr.mxu0 0.0
  %944 = vmatpush1.msra.mxu0 0.0
  %945 = vmatprep.subr.mxu0 0.0
  %946 = vmatpush1.msra.mxu0 0.0
  %947 = vmatprep.subr.mxu0 0.0
  %948 = vmatpush1.msra.mxu0 0.0
  %949 = vmatprep.subr.mxu0 0.0
  %950 = vmatpush1.msra.mxu0 0.0
  %951 = vmatprep.subr.mxu0 0.0
  %952 = vmatpush1.msra.mxu0 0.0
  %953 = vmatprep.subr.mxu0 0.0
  %954 = vmatpush1.msra.mxu0 0.0
  %955 = vmatprep.subr.mxu0 0.0
  %956 = vmatpush1.msra.mxu0 0.0
  %957 = vmatprep.subr.mxu0 0.0
  %958 = vmatpush1.msra.mxu0 0.0
  %959 = vmatprep.subr.mxu0 0.0
  %960 = vmatpush1.msra.mxu0 0.0
  %961 = vmatprep.subr.mxu0 0.0
  %962 = vmatpush1.msra.mxu0 0.0
  %963 = vmatprep.subr.mxu0 0.0
  %964 = vmatpush1.msra.mxu0 0.0
  %965 = vmatprep.mubr.f32.mxu0 0.0
  %966 = vmatmul.mubr.f32.gmra.mrb[0].mxu0 %v899
  %v967 = vpop.f32.mrb[0].mxu0
  %v968 = vadd.f32 0.0, %v967
  %v969 = vpop.f32.mrb[0].mxu0
  %970 = vdwg.mxu0
  %s971 = scalar_lea.vmem %s8, 16
  %v972 = vld [vmem:[%s971] sm:$0xff]
  %v973 = vld [vmem:[%s971 + $0x8] sm:$0xff]
  %v975 = vsel %vm330, %v968, 0
  %977 = vmatprep.subr.mxu0 0.0
  %978 = vmatpush1.msra.mxu0 %v972
  %979 = vmatprep.subr.mxu0 0.0
  %980 = vmatpush1.msra.mxu0 %v973
  %981 = vmatprep.subr.mxu0 0.0
  %982 = vmatpush1.msra.mxu0 0.0
  %983 = vmatprep.subr.mxu0 0.0
  %984 = vmatpush1.msra.mxu0 0.0
  %985 = vmatprep.subr.mxu0 0.0
  %986 = vmatpush1.msra.mxu0 0.0
  %987 = vmatprep.subr.mxu0 0.0
  %988 = vmatpush1.msra.mxu0 0.0
  %989 = vmatprep.subr.mxu0 0.0
  %990 = vmatpush1.msra.mxu0 0.0
  %991 = vmatprep.subr.mxu0 0.0
  %992 = vmatpush1.msra.mxu0 0.0
  %993 = vmatprep.subr.mxu0 0.0
  %994 = vmatpush1.msra.mxu0 0.0
  %995 = vmatprep.subr.mxu0 0.0
  %996 = vmatpush1.msra.mxu0 0.0
  %997 = vmatprep.subr.mxu0 0.0
  %998 = vmatpush1.msra.mxu0 0.0
  %999 = vmatprep.subr.mxu0 0.0
  %1000 = vmatpush1.msra.mxu0 0.0
  %1001 = vmatprep.subr.mxu0 0.0
  %1002 = vmatpush1.msra.mxu0 0.0
  %1003 = vmatprep.subr.mxu0 0.0
  %1004 = vmatpush1.msra.mxu0 0.0
  %1005 = vmatprep.subr.mxu0 0.0
  %1006 = vmatpush1.msra.mxu0 0.0
  %1007 = vmatprep.subr.mxu0 0.0
  %1008 = vmatpush1.msra.mxu0 0.0
  %1009 = vmatprep.subr.mxu0 0.0
  %1010 = vmatpush1.msra.mxu0 0.0
  %1011 = vmatprep.subr.mxu0 0.0
  %1012 = vmatpush1.msra.mxu0 0.0
  %1013 = vmatprep.subr.mxu0 0.0
  %1014 = vmatpush1.msra.mxu0 0.0
  %1015 = vmatprep.subr.mxu0 0.0
  %1016 = vmatpush1.msra.mxu0 0.0
  %1017 = vmatprep.subr.mxu0 0.0
  %1018 = vmatpush1.msra.mxu0 0.0
  %1019 = vmatprep.subr.mxu0 0.0
  %1020 = vmatpush1.msra.mxu0 0.0
  %1021 = vmatprep.subr.mxu0 0.0
  %1022 = vmatpush1.msra.mxu0 0.0
  %1023 = vmatprep.subr.mxu0 0.0
  %1024 = vmatpush1.msra.mxu0 0.0
  %1025 = vmatprep.subr.mxu0 0.0
  %1026 = vmatpush1.msra.mxu0 0.0
  %1027 = vmatprep.subr.mxu0 0.0
  %1028 = vmatpush1.msra.mxu0 0.0
  %1029 = vmatprep.subr.mxu0 0.0
  %1030 = vmatpush1.msra.mxu0 0.0
  %1031 = vmatprep.subr.mxu0 0.0
  %1032 = vmatpush1.msra.mxu0 0.0
  %1033 = vmatprep.subr.mxu0 0.0
  %1034 = vmatpush1.msra.mxu0 0.0
  %1035 = vmatprep.subr.mxu0 0.0
  %1036 = vmatpush1.msra.mxu0 0.0
  %1037 = vmatprep.subr.mxu0 0.0
  %1038 = vmatpush1.msra.mxu0 0.0
  %1039 = vmatprep.subr.mxu0 0.0
  %1040 = vmatpush1.msra.mxu0 0.0
  %1041 = vmatprep.mubr.f32.mxu0 0.0
  %1042 = vmatmul.mubr.f32.gmra.mrb[0].mxu0 %v975
  %v1043 = vpop.f32.mrb[0].mxu0
  %v1044 = vadd.f32 0.0, %v1043
  %v1045 = vpop.f32.mrb[0].mxu0
  %1046 = vdwg.mxu0
  %v1048 = vsel %vm330, %v638, 0
  %1050 = vmatprep.subr.mxu0 0.0
  %1051 = vmatpush1.msra.mxu0 %v641
  %1052 = vmatprep.subr.mxu0 0.0
  %1053 = vmatpush1.msra.mxu0 %v642
  %1054 = vmatprep.subr.mxu0 0.0
  %1055 = vmatpush1.msra.mxu0 0.0
  %1056 = vmatprep.subr.mxu0 0.0
  %1057 = vmatpush1.msra.mxu0 0.0
  %1058 = vmatprep.subr.mxu0 0.0
  %1059 = vmatpush1.msra.mxu0 0.0
  %1060 = vmatprep.subr.mxu0 0.0
  %1061 = vmatpush1.msra.mxu0 0.0
  %1062 = vmatprep.subr.mxu0 0.0
  %1063 = vmatpush1.msra.mxu0 0.0
  %1064 = vmatprep.subr.mxu0 0.0
  %1065 = vmatpush1.msra.mxu0 0.0
  %1066 = vmatprep.subr.mxu0 0.0
  %1067 = vmatpush1.msra.mxu0 0.0
  %1068 = vmatprep.subr.mxu0 0.0
  %1069 = vmatpush1.msra.mxu0 0.0
  %1070 = vmatprep.subr.mxu0 0.0
  %1071 = vmatpush1.msra.mxu0 0.0
  %1072 = vmatprep.subr.mxu0 0.0
  %1073 = vmatpush1.msra.mxu0 0.0
  %1074 = vmatprep.subr.mxu0 0.0
  %1075 = vmatpush1.msra.mxu0 0.0
  %1076 = vmatprep.subr.mxu0 0.0
  %1077 = vmatpush1.msra.mxu0 0.0
  %1078 = vmatprep.subr.mxu0 0.0
  %1079 = vmatpush1.msra.mxu0 0.0
  %1080 = vmatprep.subr.mxu0 0.0
  %1081 = vmatpush1.msra.mxu0 0.0
  %1082 = vmatprep.subr.mxu0 0.0
  %1083 = vmatpush1.msra.mxu0 0.0
  %1084 = vmatprep.subr.mxu0 0.0
  %1085 = vmatpush1.msra.mxu0 0.0
  %1086 = vmatprep.subr.mxu0 0.0
  %1087 = vmatpush1.msra.mxu0 0.0
  %1088 = vmatprep.subr.mxu0 0.0
  %1089 = vmatpush1.msra.mxu0 0.0
  %1090 = vmatprep.subr.mxu0 0.0
  %1091 = vmatpush1.msra.mxu0 0.0
  %1092 = vmatprep.subr.mxu0 0.0
  %1093 = vmatpush1.msra.mxu0 0.0
  %1094 = vmatprep.subr.mxu0 0.0
  %1095 = vmatpush1.msra.mxu0 0.0
  %1096 = vmatprep.subr.mxu0 0.0
  %1097 = vmatpush1.msra.mxu0 0.0
  %1098 = vmatprep.subr.mxu0 0.0
  %1099 = vmatpush1.msra.mxu0 0.0
  %1100 = vmatprep.subr.mxu0 0.0
  %1101 = vmatpush1.msra.mxu0 0.0
  %1102 = vmatprep.subr.mxu0 0.0
  %1103 = vmatpush1.msra.mxu0 0.0
  %1104 = vmatprep.subr.mxu0 0.0
  %1105 = vmatpush1.msra.mxu0 0.0
  %1106 = vmatprep.subr.mxu0 0.0
  %1107 = vmatpush1.msra.mxu0 0.0
  %1108 = vmatprep.subr.mxu0 0.0
  %1109 = vmatpush1.msra.mxu0 0.0
  %1110 = vmatprep.subr.mxu0 0.0
  %1111 = vmatpush1.msra.mxu0 0.0
  %1112 = vmatprep.subr.mxu0 0.0
  %1113 = vmatpush1.msra.mxu0 0.0
  %1114 = vmatprep.mubr.f32.mxu0 0.0
  %1115 = vmatmul.mubr.f32.gmra.mrb[0].mxu0 %v1048
  %v1116 = vpop.f32.mrb[0].mxu0
  %v1117 = vadd.f32 %v1044, %v1116
  %v1118 = vpop.f32.mrb[0].mxu0
  %1119 = vdwg.mxu0
  %v1121 = vlaneseq
  %v1122 = vshrl.u32 %v1121, 7
  %v1123 = vsub.s32 0, %v1122
  %v1124 = vrot.slane %v88, %v1123
  %v1126 = vadd.f32 %v1117, %v1124
  %v1127 = vadd.f32 %v1126, %v71
  %v1128 = vld [vmem:[%s14] sm:$0x1]
  %v1129 = vld [vmem:[%s15] sm:$0x1]
  %v1130 = vsel %vm95, %v1127, 0.0
  %1131 = vadd.xlane.f32.xlu0 %v1130
  %v1132 = vpop.xlane.xlu0 %1131
  %v1133 = vrcp.pop 32.0
  %v1134 = vmul.f32 %v1132, %v1133
  %v1135 = vsub.f32 %v1127, %v1134
  %v1136 = vmul.f32 %v1135, %v1135
  %v1137 = vsel %vm95, %v1136, 0.0
  %1138 = vadd.xlane.f32.xlu0 %v1137
  %v1139 = vpop.xlane.xlu0 %1138
  %v1140 = vmul.f32 %v1139, %v1133
  %v1141 = vadd.f32 %v1140, 1e-05
  %v1142 = vrsqrt.pop %v1141
  %v1143 = vmul.f32 %v1135, %v1142
  %v1145 = vlaneseq
  %v1146 = vshrl.u32 %v1145, 7
  %v1147 = vsub.s32 0, %v1146
  %v1148 = vrot.slane %v1128, %v1147
  %v1150 = vmul.f32 %v1143, %v1148
  %v1152 = vlaneseq
  %v1153 = vshrl.u32 %v1152, 7
  %v1154 = vsub.s32 0, %v1153
  %v1155 = vrot.slane %v1129, %v1154
  %v1157 = vadd.f32 %v1150, %v1155
  %v1158 = vld [vmem:[%s16] sm:$0xff]
  %v1159 = vld [vmem:[%s16 + $0x8] sm:$0xff]
  %v1160 = vld [vmem:[%s16 + $0x10] sm:$0xff]
  %v1161 = vld [vmem:[%s16 + $0x18] sm:$0xff]
  %v1162 = vld [vmem:[%s17] sm:$0x1]
  %v1164 = vlaneseq
  %v1165 = vshrl.u32 %v1164, 7
  %v1166 = vsub.s32 0, %v1165
  %v1167 = vrot.slane %v1162, %v1166
  %v1170 = vsel %vm95, %v1157, 0
  %1172 = vmatprep.subr.mxu0 0.0
  %1173 = vmatpush1.msra.mxu0 %v1158
  %1174 = vmatprep.subr.mxu0 0.0
  %1175 = vmatpush1.msra.mxu0 %v1159
  %1176 = vmatprep.subr.mxu0 0.0
  %1177 = vmatpush1.msra.mxu0 %v1160
  %1178 = vmatprep.subr.mxu0 0.0
  %1179 = vmatpush1.msra.mxu0 %v1161
  %1180 = vmatprep.subr.mxu0 0.0
  %1181 = vmatpush1.msra.mxu0 0.0
  %1182 = vmatprep.subr.mxu0 0.0
  %1183 = vmatpush1.msra.mxu0 0.0
  %1184 = vmatprep.subr.mxu0 0.0
  %1185 = vmatpush1.msra.mxu0 0.0
  %1186 = vmatprep.subr.mxu0 0.0
  %1187 = vmatpush1.msra.mxu0 0.0
  %1188 = vmatprep.subr.mxu0 0.0
  %1189 = vmatpush1.msra.mxu0 0.0
  %1190 = vmatprep.subr.mxu0 0.0
  %1191 = vmatpush1.msra.mxu0 0.0
  %1192 = vmatprep.subr.mxu0 0.0
  %1193 = vmatpush1.msra.mxu0 0.0
  %1194 = vmatprep.subr.mxu0 0.0
  %1195 = vmatpush1.msra.mxu0 0.0
  %1196 = vmatprep.subr.mxu0 0.0
  %1197 = vmatpush1.msra.mxu0 0.0
  %1198 = vmatprep.subr.mxu0 0.0
  %1199 = vmatpush1.msra.mxu0 0.0
  %1200 = vmatprep.subr.mxu0 0.0
  %1201 = vmatpush1.msra.mxu0 0.0
  %1202 = vmatprep.subr.mxu0 0.0
  %1203 = vmatpush1.msra.mxu0 0.0
  %1204 = vmatprep.subr.mxu0 0.0
  %1205 = vmatpush1.msra.mxu0 0.0
  %1206 = vmatprep.subr.mxu0 0.0
  %1207 = vmatpush1.msra.mxu0 0.0
  %1208 = vmatprep.subr.mxu0 0.0
  %1209 = vmatpush1.msra.mxu0 0.0
  %1210 = vmatprep.subr.mxu0 0.0
  %1211 = vmatpush1.msra.mxu0 0.0
  %1212 = vmatprep.subr.mxu0 0.0
  %1213 = vmatpush1.msra.mxu0 0.0
  %1214 = vmatprep.subr.mxu0 0.0
  %1215 = vmatpush1.msra.mxu0 0.0
  %1216 = vmatprep.subr.mxu0 0.0
  %1217 = vmatpush1.msra.mxu0 0.0
  %1218 = vmatprep.subr.mxu0 0.0
  %1219 = vmatpush1.msra.mxu0 0.0
  %1220 = vmatprep.subr.mxu0 0.0
  %1221 = vmatpush1.msra.mxu0 0.0
  %1222 = vmatprep.subr.mxu0 0.0
  %1223 = vmatpush1.msra.mxu0 0.0
  %1224 = vmatprep.subr.mxu0 0.0
  %1225 = vmatpush1.msra.mxu0 0.0
  %1226 = vmatprep.subr.mxu0 0.0
  %1227 = vmatpush1.msra.mxu0 0.0
  %1228 = vmatprep.subr.mxu0 0.0
  %1229 = vmatpush1.msra.mxu0 0.0
  %1230 = vmatprep.subr.mxu0 0.0
  %1231 = vmatpush1.msra.mxu0 0.0
  %1232 = vmatprep.subr.mxu0 0.0
  %1233 = vmatpush1.msra.mxu0 0.0
  %1234 = vmatprep.subr.mxu0 0.0
  %1235 = vmatpush1.msra.mxu0 0.0
  %1236 = vmatprep.mubr.f32.mxu0 0.0
  %1237 = vmatmul.mubr.f32.gmra.mrb[0].mxu0 %v1170
  %v1238 = vpop.f32.mrb[0].mxu0
  %v1239 = vadd.f32 %v1167, %v1238
  %v1240 = vpop.f32.mrb[0].mxu0
  %1241 = vdwg.mxu0
  %vm1242 = vcmp.gt.f32.partialorder %v1239, 0.0
  %v1243 = vmin.f32 %v1239, 0.0
  %v1244 = vmul.f32 %v1243, 1.442695
  %v1245 = vpow.pop %v1244
  %v1246 = vsub.f32 %v1245, 1.0
  %v1247 = vsel %vm1242, %v1239, %v1246
  %v1248 = vld [vmem:[%s18] sm:$0xff]
  %v1249 = vld [vmem:[%s18 + $0x8] sm:$0xff]
  %v1250 = vld [vmem:[%s18 + $0x10] sm:$0xff]
  %v1251 = vld [vmem:[%s18 + $0x18] sm:$0xff]
  %v1252 = vld [vmem:[%s18 + $0x20] sm:$0xff]
  %v1253 = vld [vmem:[%s18 + $0x28] sm:$0xff]
  %v1254 = vld [vmem:[%s18 + $0x30] sm:$0xff]
  %v1255 = vld [vmem:[%s18 + $0x38] sm:$0xff]
  %v1256 = vld [vmem:[%s18 + $0x40] sm:$0xff]
  %v1257 = vld [vmem:[%s18 + $0x48] sm:$0xff]
  %v1258 = vld [vmem:[%s18 + $0x50] sm:$0xff]
  %v1259 = vld [vmem:[%s18 + $0x58] sm:$0xff]
  %v1260 = vld [vmem:[%s18 + $0x60] sm:$0xff]
  %v1261 = vld [vmem:[%s18 + $0x68] sm:$0xff]
  %v1262 = vld [vmem:[%s18 + $0x70] sm:$0xff]
  %v1263 = vld [vmem:[%s18 + $0x78] sm:$0xff]
  %v1264 = vld [vmem:[%s19] sm:$0x1]
  %v1266 = vlaneseq
  %v1267 = vshrl.u32 %v1266, 7
  %v1268 = vsub.s32 0, %v1267
  %v1269 = vrot.slane %v1264, %v1268
  %1271 = vmatprep.subr.mxu0 0.0
  %1272 = vmatpush1.msra.mxu0 %v1248
  %1273 = vmatprep.subr.mxu0 0.0
  %1274 = vmatpush1.msra.mxu0 %v1249
  %1275 = vmatprep.subr.mxu0 0.0
  %1276 = vmatpush1.msra.mxu0 %v1250
  %1277 = vmatprep.subr.mxu0 0.0
  %1278 = vmatpush1.msra.mxu0 %v1251
  %1279 = vmatprep.subr.mxu0 0.0
  %1280 = vmatpush1.msra.mxu0 %v1252
  %1281 = vmatprep.subr.mxu0 0.0
  %1282 = vmatpush1.msra.mxu0 %v1253
  %1283 = vmatprep.subr.mxu0 0.0
  %1284 = vmatpush1.msra.mxu0 %v1254
  %1285 = vmatprep.subr.mxu0 0.0
  %1286 = vmatpush1.msra.mxu0 %v1255
  %1287 = vmatprep.subr.mxu0 0.0
  %1288 = vmatpush1.msra.mxu0 %v1256
  %1289 = vmatprep.subr.mxu0 0.0
  %1290 = vmatpush1.msra.mxu0 %v1257
  %1291 = vmatprep.subr.mxu0 0.0
  %1292 = vmatpush1.msra.mxu0 %v1258
  %1293 = vmatprep.subr.mxu0 0.0
  %1294 = vmatpush1.msra.mxu0 %v1259
  %1295 = vmatprep.subr.mxu0 0.0
  %1296 = vmatpush1.msra.mxu0 %v1260
  %1297 = vmatprep.subr.mxu0 0.0
  %1298 = vmatpush1.msra.mxu0 %v1261
  %1299 = vmatprep.subr.mxu0 0.0
  %1300 = vmatpush1.msra.mxu0 %v1262
  %1301 = vmatprep.subr.mxu0 0.0
  %1302 = vmatpush1.msra.mxu0 %v1263
  %1303 = vmatprep.subr.mxu0 0.0
  %1304 = vmatpush1.msra.mxu0 0.0
  %1305 = vmatprep.subr.mxu0 0.0
  %1306 = vmatpush1.msra.mxu0 0.0
  %1307 = vmatprep.subr.mxu0 0.0
  %1308 = vmatpush1.msra.mxu0 0.0
  %1309 = vmatprep.subr.mxu0 0.0
  %1310 = vmatpush1.msra.mxu0 0.0
  %1311 = vmatprep.subr.mxu0 0.0
  %1312 = vmatpush1.msra.mxu0 0.0
  %1313 = vmatprep.subr.mxu0 0.0
  %1314 = vmatpush1.msra.mxu0 0.0
  %1315 = vmatprep.subr.mxu0 0.0
  %1316 = vmatpush1.msra.mxu0 0.0
  %1317 = vmatprep.subr.mxu0 0.0
  %1318 = vmatpush1.msra.mxu0 0.0
  %1319 = vmatprep.subr.mxu0 0.0
  %1320 = vmatpush1.msra.mxu0 0.0
  %1321 = vmatprep.subr.mxu0 0.0
  %1322 = vmatpush1.msra.mxu0 0.0
  %1323 = vmatprep.subr.mxu0 0.0
  %1324 = vmatpush1.msra.mxu0 0.0
  %1325 = vmatprep.subr.mxu0 0.0
  %1326 = vmatpush1.msra.mxu0 0.0
  %1327 = vmatprep.subr.mxu0 0.0
  %1328 = vmatpush1.msra.mxu0 0.0
  %1329 = vmatprep.subr.mxu0 0.0
  %1330 = vmatpush1.msra.mxu0 0.0
  %1331 = vmatprep.subr.mxu0 0.0
  %1332 = vmatpush1.msra.mxu0 0.0
  %1333 = vmatprep.subr.mxu0 0.0
  %1334 = vmatpush1.msra.mxu0 0.0
  %1335 = vmatprep.mubr.f32.mxu0 0.0
  %1336 = vmatmul.mubr.f32.gmra.mrb[0].mxu0 %v1247
  %v1337 = vpop.f32.mrb[0].mxu0
  %v1338 = vadd.f32 %v1269, %v1337
  %v1339 = vpop.f32.mrb[0].mxu0
  %1340 = vdwg.mxu0
  %v1341 = vadd.f32 %v1338, %v1157
  %v1342 = vld [vmem:[%s20] sm:$0x1]
  %v1343 = vld [vmem:[%s21] sm:$0x1]
  %v1344 = vsel %vm95, %v1341, 0.0
  %1345 = vadd.xlane.f32.xlu0 %v1344
  %v1346 = vpop.xlane.xlu0 %1345
  %v1347 = vmul.f32 %v1346, %v1133
  %v1348 = vsub.f32 %v1341, %v1347
  %v1349 = vmul.f32 %v1348, %v1348
  %v1350 = vsel %vm95, %v1349, 0.0
  %1351 = vadd.xlane.f32.xlu0 %v1350
  %v1352 = vpop.xlane.xlu0 %1351
  %v1353 = vmul.f32 %v1352, %v1133
  %v1354 = vadd.f32 %v1353, 1e-05
  %v1355 = vrsqrt.pop %v1354
  %v1356 = vmul.f32 %v1348, %v1355
  %v1358 = vlaneseq
  %v1359 = vshrl.u32 %v1358, 7
  %v1360 = vsub.s32 0, %v1359
  %v1361 = vrot.slane %v1342, %v1360
  %v1363 = vmul.f32 %v1356, %v1361
  %v1365 = vlaneseq
  %v1366 = vshrl.u32 %v1365, 7
  %v1367 = vsub.s32 0, %v1366
  %v1368 = vrot.slane %v1343, %v1367
  %v1370 = vadd.f32 %v1363, %v1368
  %1371 = vst.msk [vmem:[%s22] sm:$0xff] %vm95, %v1370
  // Predicated region
  $region90: #{_tener_forward_device.2} parent=0 // pred_check
    _
  $region91: #{_tener_forward_device.2} parent=0 // pred_check_branch
    %1373 = sbr.rel (0) target = $region93
  $region92: #{_tener_forward_device.2} parent=0 // pred_region
    _
  $region93: #{_tener_forward_device.2} parent=0 // pred_fallthru
    _
  // Predicated region
  $region94: #{_tener_forward_device.2} parent=0 // pred_check
    _
  $region95: #{_tener_forward_device.2} parent=0 // pred_check_branch
    %1375 = sbr.rel (0) target = $region97
  $region96: #{_tener_forward_device.2} parent=0 // pred_region
    _
  $region97: #{_tener_forward_device.2} parent=0 // pred_fallthru
    _

// kernel: body.32
$region0: #{body.32}
  #allocation0 [shape = 'u32[]', space=smem, size = 0x4, offset = 0x4, fixed_abs, tag = 'smem constant byte address 0x4 - core index']
  #allocation1 [shape = 'u32[144,128]{1,0:T(1,128)}', space=vmem, size = 0x12000, scoped, tag = 'internal scratch']
  %s0 = inlined_call_operand.vmem [shape: f32[4,32], index: 0, kind: input, shape index: {}]
  %s1 = inlined_call_operand.vmem [shape: f32[32,32], index: 1, kind: input, shape index: {}]
  %s2 = inlined_call_operand.vmem [shape: f32[32,32], index: 2, kind: input, shape index: {}]
  %s3 = inlined_call_operand.vmem [shape: f32[32,32], index: 3, kind: input, shape index: {}]
  %s4 = inlined_call_operand.vmem [shape: f32[1,32], index: 4, kind: input, shape index: {}]
  %s5 = inlined_call_operand.vmem [shape: f32[1,32], index: 5, kind: input, shape index: {}]
  %s6 = inlined_call_operand.vmem [shape: f32[2,16,32], index: 6, kind: input, shape index: {}]
  %s7 = inlined_call_operand.vmem [shape: f32[1,32], index: 7, kind: input, shape index: {}]
  %s8 = inlined_call_operand.vmem [shape: f32[4,16], index: 8, kind: input, shape index: {}]
  %s9 = inlined_call_operand.vmem [shape: f32[4,16], index: 9, kind: input, shape index: {}]
  %s10 = inlined_call_operand.vmem [shape: f32[16,4], index: 10, kind: input, shape index: {}]
  %s11 = inlined_call_operand.vmem [shape: f32[16,4], index: 11, kind: input, shape index: {}]
  %s12 = inlined_call_operand.vmem [shape: f32[1,32], index: 12, kind: input, shape index: {}]
  %s13 = inlined_call_operand.vmem [shape: f32[1,32], index: 13, kind: input, shape index: {}]
  %s14 = inlined_call_operand.vmem [shape: f32[4,32], index: 14, kind: output, shape index: {}]
  %s15 = sld [smem:[#allocation0]]
  $region66: #{body.32} parent=0
    _
  %s17 = ssub.s32 1, %s15
  %s18 = scalar_select 0, %s17, %s15
  // Predicated region
  $region2: #{body.32} parent=0 // pred_check
    _
  $region3: #{body.32} parent=0 // pred_check_branch
    %20 = sbr.rel (0) target = $region5
  $region4: #{body.32} parent=0 // pred_region
    _
  $region5: #{body.32} parent=0 // pred_fallthru
    _
  // Predicated region
  $region6: #{body.32} parent=0 // pred_check
    _
  $region7: #{body.32} parent=0 // pred_check_branch
    %22 = sbr.rel (0) target = $region9
  $region8: #{body.32} parent=0 // pred_region
    _
  $region9: #{body.32} parent=0 // pred_fallthru
    _
  // Predicated region
  $region10: #{body.32} parent=0 // pred_check
    _
  $region11: #{body.32} parent=0 // pred_check_branch
    %24 = sbr.rel (0) target = $region13
  $region12: #{body.32} parent=0 // pred_region
    _
  $region13: #{body.32} parent=0 // pred_fallthru
    _
  // Predicated region
  $region14: #{body.32} parent=0 // pred_check
    _
  $region15: #{body.32} parent=0 // pred_check_branch
    %26 = sbr.rel (0) target = $region17
  $region16: #{body.32} parent=0 // pred_region
    _
  $region17: #{body.32} parent=0 // pred_fallthru
    _
  // Predicated region
  $region18: #{body.32} parent=0 // pred_check
    _
  $region19: #{body.32} parent=0 // pred_check_branch
    %28 = sbr.rel (0) target = $region21
  $region20: #{body.32} parent=0 // pred_region
    _
  $region21: #{body.32} parent=0 // pred_fallthru
    _
  // Predicated region
  $region22: #{body.32} parent=0 // pred_check
    _
  $region23: #{body.32} parent=0 // pred_check_branch
    %30 = sbr.rel (0) target = $region25
  $region24: #{body.32} parent=0 // pred_region
    _
  $region25: #{body.32} parent=0 // pred_fallthru
    _
  // Predicated region
  $region26: #{body.32} parent=0 // pred_check
    _
  $region27: #{body.32} parent=0 // pred_check_branch
    %32 = sbr.rel (0) target = $region29
  $region28: #{body.32} parent=0 // pred_region
    _
  $region29: #{body.32} parent=0 // pred_fallthru
    _
  // Predicated region
  $region30: #{body.32} parent=0 // pred_check
    _
  $region31: #{body.32} parent=0 // pred_check_branch
    %34 = sbr.rel (0) target = $region33
  $region32: #{body.32} parent=0 // pred_region
    _
  $region33: #{body.32} parent=0 // pred_fallthru
    _
  // Predicated region
  $region34: #{body.32} parent=0 // pred_check
    _
  $region35: #{body.32} parent=0 // pred_check_branch
    %36 = sbr.rel (0) target = $region37
  $region36: #{body.32} parent=0 // pred_region
    _
  $region37: #{body.32} parent=0 // pred_fallthru
    _
  // Predicated region
  $region38: #{body.32} parent=0 // pred_check
    _
  $region39: #{body.32} parent=0 // pred_check_branch
    %38 = sbr.rel (0) target = $region41
  $region40: #{body.32} parent=0 // pred_region
    _
  $region41: #{body.32} parent=0 // pred_fallthru
    _
  // Predicated region
  $region42: #{body.32} parent=0 // pred_check
    _
  $region43: #{body.32} parent=0 // pred_check_branch
    %40 = sbr.rel (0) target = $region45
  $region44: #{body.32} parent=0 // pred_region
    _
  $region45: #{body.32} parent=0 // pred_fallthru
    _
  // Predicated region
  $region46: #{body.32} parent=0 // pred_check
    _
  $region47: #{body.32} parent=0 // pred_check_branch
    %42 = sbr.rel (0) target = $region49
  $region48: #{body.32} parent=0 // pred_region
    _
  $region49: #{body.32} parent=0 // pred_fallthru
    _
  // Predicated region
  $region50: #{body.32} parent=0 // pred_check
    _
  $region51: #{body.32} parent=0 // pred_check_branch
    %44 = sbr.rel (0) target = $region53
  $region52: #{body.32} parent=0 // pred_region
    _
  $region53: #{body.32} parent=0 // pred_fallthru
    _
  // Predicated region
  $region54: #{body.32} parent=0 // pred_check
    _
  $region55: #{body.32} parent=0 // pred_check_branch
    %46 = sbr.rel (0) target = $region57
  $region56: #{body.32} parent=0 // pred_region
    _
  $region57: #{body.32} parent=0 // pred_fallthru
    _
  %v47 = vld [vmem:[%s0] sm:$0xf]
  %v48 = vld [vmem:[%s1] sm:$0xff]
  %v49 = vld [vmem:[%s1 + $0x8] sm:$0xff]
  %v50 = vld [vmem:[%s1 + $0x10] sm:$0xff]
  %v51 = vld [vmem:[%s1 + $0x18] sm:$0xff]
  %v52 = vld [vmem:[%s2] sm:$0xff]
  %v53 = vld [vmem:[%s2 + $0x8] sm:$0xff]
  %v54 = vld [vmem:[%s2 + $0x10] sm:$0xff]
  %v55 = vld [vmem:[%s2 + $0x18] sm:$0xff]
  %v56 = vld [vmem:[%s3] sm:$0xff]
  %v57 = vld [vmem:[%s3 + $0x8] sm:$0xff]
  %v58 = vld [vmem:[%s3 + $0x10] sm:$0xff]
  %v59 = vld [vmem:[%s3 + $0x18] sm:$0xff]
  %v60 = vld [vmem:[%s4] sm:$0x1]
  %v61 = vld [vmem:[%s5] sm:$0x1]
  %v62 = vld [vmem:[%s7] sm:$0x1]
  %v63 = vld [vmem:[%s8] sm:$0xf]
  %v64 = vld [vmem:[%s9] sm:$0xf]
  %v65 = vld [vmem:[%s10] sm:$0xff]
  %v66 = vld [vmem:[%s10 + $0x8] sm:$0xff]
  %v67 = vld [vmem:[%s11] sm:$0xff]
  %v68 = vld [vmem:[%s11 + $0x8] sm:$0xff]
  %vm69 = vcmask 261120
  %v71 = vsel %vm69, %v47, 0
  %73 = vmatprep.subr.mxu0 0.0
  %74 = vmatpush1.msra.mxu0 %v48
  %75 = vmatprep.subr.mxu0 0.0
  %76 = vmatpush1.msra.mxu0 %v49
  %77 = vmatprep.subr.mxu0 0.0
  %78 = vmatpush1.msra.mxu0 %v50
  %79 = vmatprep.subr.mxu0 0.0
  %80 = vmatpush1.msra.mxu0 %v51
  %81 = vmatprep.subr.mxu0 0.0
  %82 = vmatpush1.msra.mxu0 0.0
  %83 = vmatprep.subr.mxu0 0.0
  %84 = vmatpush1.msra.mxu0 0.0
  %85 = vmatprep.subr.mxu0 0.0
  %86 = vmatpush1.msra.mxu0 0.0
  %87 = vmatprep.subr.mxu0 0.0
  %88 = vmatpush1.msra.mxu0 0.0
  %89 = vmatprep.subr.mxu0 0.0
  %90 = vmatpush1.msra.mxu0 0.0
  %91 = vmatprep.subr.mxu0 0.0
  %92 = vmatpush1.msra.mxu0 0.0
  %93 = vmatprep.subr.mxu0 0.0
  %94 = vmatpush1.msra.mxu0 0.0
  %95 = vmatprep.subr.mxu0 0.0
  %96 = vmatpush1.msra.mxu0 0.0
  %97 = vmatprep.subr.mxu0 0.0
  %98 = vmatpush1.msra.mxu0 0.0
  %99 = vmatprep.subr.mxu0 0.0
  %100 = vmatpush1.msra.mxu0 0.0
  %101 = vmatprep.subr.mxu0 0.0
  %102 = vmatpush1.msra.mxu0 0.0
  %103 = vmatprep.subr.mxu0 0.0
  %104 = vmatpush1.msra.mxu0 0.0
  %105 = vmatprep.subr.mxu0 0.0
  %106 = vmatpush1.msra.mxu0 0.0
  %107 = vmatprep.subr.mxu0 0.0
  %108 = vmatpush1.msra.mxu0 0.0
  %109 = vmatprep.subr.mxu0 0.0
  %110 = vmatpush1.msra.mxu0 0.0
  %111 = vmatprep.subr.mxu0 0.0
  %112 = vmatpush1.msra.mxu0 0.0
  %113 = vmatprep.subr.mxu0 0.0
  %114 = vmatpush1.msra.mxu0 0.0
  %115 = vmatprep.subr.mxu0 0.0
  %116 = vmatpush1.msra.mxu0 0.0
  %117 = vmatprep.subr.mxu0 0.0
  %118 = vmatpush1.msra.mxu0 0.0
  %119 = vmatprep.subr.mxu0 0.0
  %120 = vmatpush1.msra.mxu0 0.0
  %121 = vmatprep.subr.mxu0 0.0
  %122 = vmatpush1.msra.mxu0 0.0
  %123 = vmatprep.subr.mxu0 0.0
  %124 = vmatpush1.msra.mxu0 0.0
  %125 = vmatprep.subr.mxu0 0.0
  %126 = vmatpush1.msra.mxu0 0.0
  %127 = vmatprep.subr.mxu0 0.0
  %128 = vmatpush1.msra.mxu0 0.0
  %129 = vmatprep.subr.mxu0 0.0
  %130 = vmatpush1.msra.mxu0 0.0
  %131 = vmatprep.subr.mxu0 0.0
  %132 = vmatpush1.msra.mxu0 0.0
  %133 = vmatprep.subr.mxu0 0.0
  %134 = vmatpush1.msra.mxu0 0.0
  %135 = vmatprep.subr.mxu0 0.0
  %136 = vmatpush1.msra.mxu0 0.0
  %137 = vmatprep.mubr.f32.mxu0 0.0
  %138 = vmatmul.mubr.f32.gmra.mrb[0].mxu0 %v71
  %v139 = vpop.f32.mrb[0].mxu0
  %v140 = vadd.f32 0.0, %v139
  %v141 = vpop.f32.mrb[0].mxu0
  %142 = vdwg.mxu0
  %143 = vmatprep.subr.mxu0 0.0
  %144 = vmatpush1.msra.mxu0 %v52
  %145 = vmatprep.subr.mxu0 0.0
  %146 = vmatpush1.msra.mxu0 %v53
  %147 = vmatprep.subr.mxu0 0.0
  %148 = vmatpush1.msra.mxu0 %v54
  %149 = vmatprep.subr.mxu0 0.0
  %150 = vmatpush1.msra.mxu0 %v55
  %151 = vmatprep.subr.mxu0 0.0
  %152 = vmatpush1.msra.mxu0 0.0
  %153 = vmatprep.subr.mxu0 0.0
  %154 = vmatpush1.msra.mxu0 0.0
  %155 = vmatprep.subr.mxu0 0.0
  %156 = vmatpush1.msra.mxu0 0.0
  %157 = vmatprep.subr.mxu0 0.0
  %158 = vmatpush1.msra.mxu0 0.0
  %159 = vmatprep.subr.mxu0 0.0
  %160 = vmatpush1.msra.mxu0 0.0
  %161 = vmatprep.subr.mxu0 0.0
  %162 = vmatpush1.msra.mxu0 0.0
  %163 = vmatprep.subr.mxu0 0.0
  %164 = vmatpush1.msra.mxu0 0.0
  %165 = vmatprep.subr.mxu0 0.0
  %166 = vmatpush1.msra.mxu0 0.0
  %167 = vmatprep.subr.mxu0 0.0
  %168 = vmatpush1.msra.mxu0 0.0
  %169 = vmatprep.subr.mxu0 0.0
  %170 = vmatpush1.msra.mxu0 0.0
  %171 = vmatprep.subr.mxu0 0.0
  %172 = vmatpush1.msra.mxu0 0.0
  %173 = vmatprep.subr.mxu0 0.0
  %174 = vmatpush1.msra.mxu0 0.0
  %175 = vmatprep.subr.mxu0 0.0
  %176 = vmatpush1.msra.mxu0 0.0
  %177 = vmatprep.subr.mxu0 0.0
  %178 = vmatpush1.msra.mxu0 0.0
  %179 = vmatprep.subr.mxu0 0.0
  %180 = vmatpush1.msra.mxu0 0.0
  %181 = vmatprep.subr.mxu0 0.0
  %182 = vmatpush1.msra.mxu0 0.0
  %183 = vmatprep.subr.mxu0 0.0
  %184 = vmatpush1.msra.mxu0 0.0
  %185 = vmatprep.subr.mxu0 0.0
  %186 = vmatpush1.msra.mxu0 0.0
  %187 = vmatprep.subr.mxu0 0.0
  %188 = vmatpush1.msra.mxu0 0.0
  %189 = vmatprep.subr.mxu0 0.0
  %190 = vmatpush1.msra.mxu0 0.0
  %191 = vmatprep.subr.mxu0 0.0
  %192 = vmatpush1.msra.mxu0 0.0
  %193 = vmatprep.subr.mxu0 0.0
  %194 = vmatpush1.msra.mxu0 0.0
  %195 = vmatprep.subr.mxu0 0.0
  %196 = vmatpush1.msra.mxu0 0.0
  %197 = vmatprep.subr.mxu0 0.0
  %198 = vmatpush1.msra.mxu0 0.0
  %199 = vmatprep.subr.mxu0 0.0
  %200 = vmatpush1.msra.mxu0 0.0
  %201 = vmatprep.subr.mxu0 0.0
  %202 = vmatpush1.msra.mxu0 0.0
  %203 = vmatprep.subr.mxu0 0.0
  %204 = vmatpush1.msra.mxu0 0.0
  %205 = vmatprep.subr.mxu0 0.0
  %206 = vmatpush1.msra.mxu0 0.0
  %207 = vmatprep.mubr.f32.mxu0 0.0
  %208 = vmatmul.mubr.f32.gmra.mrb[0].mxu0 %v71
  %v209 = vpop.f32.mrb[0].mxu0
  %v210 = vadd.f32 0.0, %v209
  %v211 = vpop.f32.mrb[0].mxu0
  %212 = vdwg.mxu0
  %213 = vmatprep.subr.mxu0 0.0
  %214 = vmatpush1.msra.mxu0 %v56
  %215 = vmatprep.subr.mxu0 0.0
  %216 = vmatpush1.msra.mxu0 %v57
  %217 = vmatprep.subr.mxu0 0.0
  %218 = vmatpush1.msra.mxu0 %v58
  %219 = vmatprep.subr.mxu0 0.0
  %220 = vmatpush1.msra.mxu0 %v59
  %221 = vmatprep.subr.mxu0 0.0
  %222 = vmatpush1.msra.mxu0 0.0
  %223 = vmatprep.subr.mxu0 0.0
  %224 = vmatpush1.msra.mxu0 0.0
  %225 = vmatprep.subr.mxu0 0.0
  %226 = vmatpush1.msra.mxu0 0.0
  %227 = vmatprep.subr.mxu0 0.0
  %228 = vmatpush1.msra.mxu0 0.0
  %229 = vmatprep.subr.mxu0 0.0
  %230 = vmatpush1.msra.mxu0 0.0
  %231 = vmatprep.subr.mxu0 0.0
  %232 = vmatpush1.msra.mxu0 0.0
  %233 = vmatprep.subr.mxu0 0.0
  %234 = vmatpush1.msra.mxu0 0.0
  %235 = vmatprep.subr.mxu0 0.0
  %236 = vmatpush1.msra.mxu0 0.0
  %237 = vmatprep.subr.mxu0 0.0
  %238 = vmatpush1.msra.mxu0 0.0
  %239 = vmatprep.subr.mxu0 0.0
  %240 = vmatpush1.msra.mxu0 0.0
  %241 = vmatprep.subr.mxu0 0.0
  %242 = vmatpush1.msra.mxu0 0.0
  %243 = vmatprep.subr.mxu0 0.0
  %244 = vmatpush1.msra.mxu0 0.0
  %245 = vmatprep.subr.mxu0 0.0
  %246 = vmatpush1.msra.mxu0 0.0
  %247 = vmatprep.subr.mxu0 0.0
  %248 = vmatpush1.msra.mxu0 0.0
  %249 = vmatprep.subr.mxu0 0.0
  %250 = vmatpush1.msra.mxu0 0.0
  %251 = vmatprep.subr.mxu0 0.0
  %252 = vmatpush1.msra.mxu0 0.0
  %253 = vmatprep.subr.mxu0 0.0
  %254 = vmatpush1.msra.mxu0 0.0
  %255 = vmatprep.subr.mxu0 0.0
  %256 = vmatpush1.msra.mxu0 0.0
  %257 = vmatprep.subr.mxu0 0.0
  %258 = vmatpush1.msra.mxu0 0.0
  %259 = vmatprep.subr.mxu0 0.0
  %260 = vmatpush1.msra.mxu0 0.0
  %261 = vmatprep.subr.mxu0 0.0
  %262 = vmatpush1.msra.mxu0 0.0
  %263 = vmatprep.subr.mxu0 0.0
  %264 = vmatpush1.msra.mxu0 0.0
  %265 = vmatprep.subr.mxu0 0.0
  %266 = vmatpush1.msra.mxu0 0.0
  %267 = vmatprep.subr.mxu0 0.0
  %268 = vmatpush1.msra.mxu0 0.0
  %269 = vmatprep.subr.mxu0 0.0
  %270 = vmatpush1.msra.mxu0 0.0
  %271 = vmatprep.subr.mxu0 0.0
  %272 = vmatpush1.msra.mxu0 0.0
  %273 = vmatprep.subr.mxu0 0.0
  %274 = vmatpush1.msra.mxu0 0.0
  %275 = vmatprep.subr.mxu0 0.0
  %276 = vmatpush1.msra.mxu0 0.0
  %277 = vmatprep.mubr.f32.mxu0 0.0
  %278 = vmatmul.mubr.f32.gmra.mrb[0].mxu0 %v71
  %v279 = vpop.f32.mrb[0].mxu0
  %v280 = vadd.f32 0.0, %v279
  %v281 = vpop.f32.mrb[0].mxu0
  %282 = vdwg.mxu0
  %v284 = vlaneseq
  %v285 = vshrl.u32 %v284, 7
  %v286 = vsub.s32 0, %v285
  %v287 = vrot.slane %v60, %v286
  %v289 = vadd.f32 %v140, %v287
  %v291 = vlaneseq
  %v292 = vshrl.u32 %v291, 7
  %v293 = vsub.s32 0, %v292
  %v294 = vrot.slane %v61, %v293
  %v296 = vadd.f32 %v140, %v294
  %v297 = vlaneseq
  %v298 = vshrl.u32 %v297, 7
  %v299 = vlaneseq
  %v300 = vand.u32 %v299, 127
  %v301 = vmul.f32 %v296, %v63
  %vm302 = vcmask 130048
  %v304 = vsel %vm302, %v301, 0
  %306 = vmatprep.subr.mxu0 0.0
  %307 = vmatpush1.msra.mxu0 %v65
  %308 = vmatprep.subr.mxu0 0.0
  %309 = vmatpush1.msra.mxu0 %v66
  %310 = vmatprep.subr.mxu0 0.0
  %311 = vmatpush1.msra.mxu0 0.0
  %312 = vmatprep.subr.mxu0 0.0
  %313 = vmatpush1.msra.mxu0 0.0
  %314 = vmatprep.subr.mxu0 0.0
  %315 = vmatpush1.msra.mxu0 0.0
  %316 = vmatprep.subr.mxu0 0.0
  %317 = vmatpush1.msra.mxu0 0.0
  %318 = vmatprep.subr.mxu0 0.0
  %319 = vmatpush1.msra.mxu0 0.0
  %320 = vmatprep.subr.mxu0 0.0
  %321 = vmatpush1.msra.mxu0 0.0
  %322 = vmatprep.subr.mxu0 0.0
  %323 = vmatpush1.msra.mxu0 0.0
  %324 = vmatprep.subr.mxu0 0.0
  %325 = vmatpush1.msra.mxu0 0.0
  %326 = vmatprep.subr.mxu0 0.0
  %327 = vmatpush1.msra.mxu0 0.0
  %328 = vmatprep.subr.mxu0 0.0
  %329 = vmatpush1.msra.mxu0 0.0
  %330 = vmatprep.subr.mxu0 0.0
  %331 = vmatpush1.msra.mxu0 0.0
  %332 = vmatprep.subr.mxu0 0.0
  %333 = vmatpush1.msra.mxu0 0.0
  %334 = vmatprep.subr.mxu0 0.0
  %335 = vmatpush1.msra.mxu0 0.0
  %336 = vmatprep.subr.mxu0 0.0
  %337 = vmatpush1.msra.mxu0 0.0
  %338 = vmatprep.subr.mxu0 0.0
  %339 = vmatpush1.msra.mxu0 0.0
  %340 = vmatprep.subr.mxu0 0.0
  %341 = vmatpush1.msra.mxu0 0.0
  %342 = vmatprep.subr.mxu0 0.0
  %343 = vmatpush1.msra.mxu0 0.0
  %344 = vmatprep.subr.mxu0 0.0
  %345 = vmatpush1.msra.mxu0 0.0
  %346 = vmatprep.subr.mxu0 0.0
  %347 = vmatpush1.msra.mxu0 0.0
  %348 = vmatprep.subr.mxu0 0.0
  %349 = vmatpush1.msra.mxu0 0.0
  %350 = vmatprep.subr.mxu0 0.0
  %351 = vmatpush1.msra.mxu0 0.0
  %352 = vmatprep.subr.mxu0 0.0
  %353 = vmatpush1.msra.mxu0 0.0
  %354 = vmatprep.subr.mxu0 0.0
  %355 = vmatpush1.msra.mxu0 0.0
  %356 = vmatprep.subr.mxu0 0.0
  %357 = vmatpush1.msra.mxu0 0.0
  %358 = vmatprep.subr.mxu0 0.0
  %359 = vmatpush1.msra.mxu0 0.0
  %360 = vmatprep.subr.mxu0 0.0
  %361 = vmatpush1.msra.mxu0 0.0
  %362 = vmatprep.subr.mxu0 0.0
  %363 = vmatpush1.msra.mxu0 0.0
  %364 = vmatprep.subr.mxu0 0.0
  %365 = vmatpush1.msra.mxu0 0.0
  %366 = vmatprep.subr.mxu0 0.0
  %367 = vmatpush1.msra.mxu0 0.0
  %368 = vmatprep.subr.mxu0 0.0
  %369 = vmatpush1.msra.mxu0 0.0
  %370 = vmatprep.mubr.f32.mxu0 0.0
  %371 = vmatmul.mubr.f32.gmra.mrb[0].mxu0 %v304
  %v372 = vpop.f32.mrb[0].mxu0
  %v373 = vadd.f32 0.0, %v372
  %v374 = vpop.f32.mrb[0].mxu0
  %375 = vdwg.mxu0
  %v377 = vsel %vm302, %v289, 0
  %v380 = vsel %vm302, %v210, 0
  %382 = vmatprep.subr.mxu0 0.0
  %383 = vmatpush1.xpose.msra.mxu0 %v380
  %384 = vmatprep.subr.mxu0 0.0
  %385 = vmatpush1.xpose.msra.mxu0 0.0
  %386 = vmatprep.subr.mxu0 0.0
  %387 = vmatpush1.xpose.msra.mxu0 0.0
  %388 = vmatprep.subr.mxu0 0.0
  %389 = vmatpush1.xpose.msra.mxu0 0.0
  %390 = vmatprep.subr.mxu0 0.0
  %391 = vmatpush1.xpose.msra.mxu0 0.0
  %392 = vmatprep.subr.mxu0 0.0
  %393 = vmatpush1.xpose.msra.mxu0 0.0
  %394 = vmatprep.subr.mxu0 0.0
  %395 = vmatpush1.xpose.msra.mxu0 0.0
  %396 = vmatprep.subr.mxu0 0.0
  %397 = vmatpush1.xpose.msra.mxu0 0.0
  %398 = vmatprep.subr.mxu0 0.0
  %399 = vmatpush1.xpose.msra.mxu0 0.0
  %400 = vmatprep.subr.mxu0 0.0
  %401 = vmatpush1.xpose.msra.mxu0 0.0
  %402 = vmatprep.subr.mxu0 0.0
  %403 = vmatpush1.xpose.msra.mxu0 0.0
  %404 = vmatprep.subr.mxu0 0.0
  %405 = vmatpush1.xpose.msra.mxu0 0.0
  %406 = vmatprep.subr.mxu0 0.0
  %407 = vmatpush1.xpose.msra.mxu0 0.0
  %408 = vmatprep.subr.mxu0 0.0
  %409 = vmatpush1.xpose.msra.mxu0 0.0
  %410 = vmatprep.subr.mxu0 0.0
  %411 = vmatpush1.xpose.msra.mxu0 0.0
  %412 = vmatprep.subr.mxu0 0.0
  %413 = vmatpush1.xpose.msra.mxu0 0.0
  %414 = vmatprep.subr.mxu0 0.0
  %415 = vmatpush1.xpose.msra.mxu0 0.0
  %416 = vmatprep.subr.mxu0 0.0
  %417 = vmatpush1.xpose.msra.mxu0 0.0
  %418 = vmatprep.subr.mxu0 0.0
  %419 = vmatpush1.xpose.msra.mxu0 0.0
  %420 = vmatprep.subr.mxu0 0.0
  %421 = vmatpush1.xpose.msra.mxu0 0.0
  %422 = vmatprep.subr.mxu0 0.0
  %423 = vmatpush1.xpose.msra.mxu0 0.0
  %424 = vmatprep.subr.mxu0 0.0
  %425 = vmatpush1.xpose.msra.mxu0 0.0
  %426 = vmatprep.subr.mxu0 0.0
  %427 = vmatpush1.xpose.msra.mxu0 0.0
  %428 = vmatprep.subr.mxu0 0.0
  %429 = vmatpush1.xpose.msra.mxu0 0.0
  %430 = vmatprep.subr.mxu0 0.0
  %431 = vmatpush1.xpose.msra.mxu0 0.0
  %432 = vmatprep.subr.mxu0 0.0
  %433 = vmatpush1.xpose.msra.mxu0 0.0
  %434 = vmatprep.subr.mxu0 0.0
  %435 = vmatpush1.xpose.msra.mxu0 0.0
  %436 = vmatprep.subr.mxu0 0.0
  %437 = vmatpush1.xpose.msra.mxu0 0.0
  %438 = vmatprep.subr.mxu0 0.0
  %439 = vmatpush1.xpose.msra.mxu0 0.0
  %440 = vmatprep.subr.mxu0 0.0
  %441 = vmatpush1.xpose.msra.mxu0 0.0
  %442 = vmatprep.subr.mxu0 0.0
  %443 = vmatpush1.xpose.msra.mxu0 0.0
  %444 = vmatprep.subr.mxu0 0.0
  %445 = vmatpush1.xpose.msra.mxu0 0.0
  %446 = vmatprep.mubr.f32.mxu0 0.0
  %447 = vmatmul.mubr.f32.gmra.mrb[0].mxu0 %v377
  %v448 = vpop.f32.mrb[0].mxu0
  %v449 = vadd.f32 %v373, %v448
  %v450 = vpop.f32.mrb[0].mxu0
  %451 = vdwg.mxu0
  %v452 = vmul.f32 %v296, %v64
  %v454 = vsel %vm302, %v452, 0
  %456 = vmatprep.subr.mxu0 0.0
  %457 = vmatpush1.msra.mxu0 %v67
  %458 = vmatprep.subr.mxu0 0.0
  %459 = vmatpush1.msra.mxu0 %v68
  %460 = vmatprep.subr.mxu0 0.0
  %461 = vmatpush1.msra.mxu0 0.0
  %462 = vmatprep.subr.mxu0 0.0
  %463 = vmatpush1.msra.mxu0 0.0
  %464 = vmatprep.subr.mxu0 0.0
  %465 = vmatpush1.msra.mxu0 0.0
  %466 = vmatprep.subr.mxu0 0.0
  %467 = vmatpush1.msra.mxu0 0.0
  %468 = vmatprep.subr.mxu0 0.0
  %469 = vmatpush1.msra.mxu0 0.0
  %470 = vmatprep.subr.mxu0 0.0
  %471 = vmatpush1.msra.mxu0 0.0
  %472 = vmatprep.subr.mxu0 0.0
  %473 = vmatpush1.msra.mxu0 0.0
  %474 = vmatprep.subr.mxu0 0.0
  %475 = vmatpush1.msra.mxu0 0.0
  %476 = vmatprep.subr.mxu0 0.0
  %477 = vmatpush1.msra.mxu0 0.0
  %478 = vmatprep.subr.mxu0 0.0
  %479 = vmatpush1.msra.mxu0 0.0
  %480 = vmatprep.subr.mxu0 0.0
  %481 = vmatpush1.msra.mxu0 0.0
  %482 = vmatprep.subr.mxu0 0.0
  %483 = vmatpush1.msra.mxu0 0.0
  %484 = vmatprep.subr.mxu0 0.0
  %485 = vmatpush1.msra.mxu0 0.0
  %486 = vmatprep.subr.mxu0 0.0
  %487 = vmatpush1.msra.mxu0 0.0
  %488 = vmatprep.subr.mxu0 0.0
  %489 = vmatpush1.msra.mxu0 0.0
  %490 = vmatprep.subr.mxu0 0.0
  %491 = vmatpush1.msra.mxu0 0.0
  %492 = vmatprep.subr.mxu0 0.0
  %493 = vmatpush1.msra.mxu0 0.0
  %494 = vmatprep.subr.mxu0 0.0
  %495 = vmatpush1.msra.mxu0 0.0
  %496 = vmatprep.subr.mxu0 0.0
  %497 = vmatpush1.msra.mxu0 0.0
  %498 = vmatprep.subr.mxu0 0.0
  %499 = vmatpush1.msra.mxu0 0.0
  %500 = vmatprep.subr.mxu0 0.0
  %501 = vmatpush1.msra.mxu0 0.0
  %502 = vmatprep.subr.mxu0 0.0
  %503 = vmatpush1.msra.mxu0 0.0
  %504 = vmatprep.subr.mxu0 0.0
  %505 = vmatpush1.msra.mxu0 0.0
  %506 = vmatprep.subr.mxu0 0.0
  %507 = vmatpush1.msra.mxu0 0.0
  %508 = vmatprep.subr.mxu0 0.0
  %509 = vmatpush1.msra.mxu0 0.0
  %510 = vmatprep.subr.mxu0 0.0
  %511 = vmatpush1.msra.mxu0 0.0
  %512 = vmatprep.subr.mxu0 0.0
  %513 = vmatpush1.msra.mxu0 0.0
  %514 = vmatprep.subr.mxu0 0.0
  %515 = vmatpush1.msra.mxu0 0.0
  %516 = vmatprep.subr.mxu0 0.0
  %517 = vmatpush1.msra.mxu0 0.0
  %518 = vmatprep.subr.mxu0 0.0
  %519 = vmatpush1.msra.mxu0 0.0
  %520 = vmatprep.mubr.f32.mxu0 0.0
  %521 = vmatmul.mubr.f32.gmra.mrb[0].mxu0 %v454
  %v522 = vpop.f32.mrb[0].mxu0
  %v523 = vadd.f32 0.0, %v522
  %v524 = vpop.f32.mrb[0].mxu0
  %525 = vdwg.mxu0
  %v526 = vadd.f32 %v449, %v523
  %vm527 = vcmp.le.s32.totalorder %v300, %v298
  %v528 = vsel %vm527, %v526, -1e+18
  %vm529 = vcmask 27648
  %v530 = vsel %vm529, %v528, -inf
  %531 = vmax.xlane.f32.xlu0 %v530
  %v532 = vpop.xlane.xlu0 %531
  %v533 = vsub.f32 %v528, %v532
  %v534 = vmul.f32 %v533, 1.442695
  %v535 = vpow.pop %v534
  %v536 = vsel %vm529, %v535, 0.0
  %537 = vadd.xlane.f32.xlu0 %v536
  %v538 = vpop.xlane.xlu0 %537
  %v539 = vrcp.pop %v538
  %v540 = vmul.f32 %v535, %v539
  %vm541 = vcmask 31744
  %v543 = vsel %vm541, %v540, 0
  %vm545 = vcmask 1043456
  %v547 = vsel %vm545, %v280, 0
  %549 = vmatprep.subr.mxu0 0.0
  %550 = vmatpush1.msra.mxu0 %v547
  %551 = vmatprep.subr.mxu0 0.0
  %552 = vmatpush1.msra.mxu0 0.0
  %553 = vmatprep.subr.mxu0 0.0
  %554 = vmatpush1.msra.mxu0 0.0
  %555 = vmatprep.subr.mxu0 0.0
  %556 = vmatpush1.msra.mxu0 0.0
  %557 = vmatprep.subr.mxu0 0.0
  %558 = vmatpush1.msra.mxu0 0.0
  %559 = vmatprep.subr.mxu0 0.0
  %560 = vmatpush1.msra.mxu0 0.0
  %561 = vmatprep.subr.mxu0 0.0
  %562 = vmatpush1.msra.mxu0 0.0
  %563 = vmatprep.subr.mxu0 0.0
  %564 = vmatpush1.msra.mxu0 0.0
  %565 = vmatprep.subr.mxu0 0.0
  %566 = vmatpush1.msra.mxu0 0.0
  %567 = vmatprep.subr.mxu0 0.0
  %568 = vmatpush1.msra.mxu0 0.0
  %569 = vmatprep.subr.mxu0 0.0
  %570 = vmatpush1.msra.mxu0 0.0
  %571 = vmatprep.subr.mxu0 0.0
  %572 = vmatpush1.msra.mxu0 0.0
  %573 = vmatprep.subr.mxu0 0.0
  %574 = vmatpush1.msra.mxu0 0.0
  %575 = vmatprep.subr.mxu0 0.0
  %576 = vmatpush1.msra.mxu0 0.0
  %577 = vmatprep.subr.mxu0 0.0
  %578 = vmatpush1.msra.mxu0 0.0
  %579 = vmatprep.subr.mxu0 0.0
  %580 = vmatpush1.msra.mxu0 0.0
  %581 = vmatprep.subr.mxu0 0.0
  %582 = vmatpush1.msra.mxu0 0.0
  %583 = vmatprep.subr.mxu0 0.0
  %584 = vmatpush1.msra.mxu0 0.0
  %585 = vmatprep.subr.mxu0 0.0
  %586 = vmatpush1.msra.mxu0 0.0
  %587 = vmatprep.subr.mxu0 0.0
  %588 = vmatpush1.msra.mxu0 0.0
  %589 = vmatprep.subr.mxu0 0.0
  %590 = vmatpush1.msra.mxu0 0.0
  %591 = vmatprep.subr.mxu0 0.0
  %592 = vmatpush1.msra.mxu0 0.0
  %593 = vmatprep.subr.mxu0 0.0
  %594 = vmatpush1.msra.mxu0 0.0
  %595 = vmatprep.subr.mxu0 0.0
  %596 = vmatpush1.msra.mxu0 0.0
  %597 = vmatprep.subr.mxu0 0.0
  %598 = vmatpush1.msra.mxu0 0.0
  %599 = vmatprep.subr.mxu0 0.0
  %600 = vmatpush1.msra.mxu0 0.0
  %601 = vmatprep.subr.mxu0 0.0
  %602 = vmatpush1.msra.mxu0 0.0
  %603 = vmatprep.subr.mxu0 0.0
  %604 = vmatpush1.msra.mxu0 0.0
  %605 = vmatprep.subr.mxu0 0.0
  %606 = vmatpush1.msra.mxu0 0.0
  %607 = vmatprep.subr.mxu0 0.0
  %608 = vmatpush1.msra.mxu0 0.0
  %609 = vmatprep.subr.mxu0 0.0
  %610 = vmatpush1.msra.mxu0 0.0
  %611 = vmatprep.subr.mxu0 0.0
  %612 = vmatpush1.msra.mxu0 0.0
  %613 = vmatprep.mubr.f32.mxu0 0.0
  %614 = vmatmul.mubr.f32.gmra.mrb[0].mxu0 %v543
  %v615 = vpop.f32.mrb[0].mxu0
  %v616 = vadd.f32 0.0, %v615
  %v617 = vpop.f32.mrb[0].mxu0
  %618 = vdwg.mxu0
  %v619 = vld [vmem:[%s6] sm:$0xff]
  %v620 = vld [vmem:[%s6 + $0x8] sm:$0xff]
  %622 = vrot.lane.b32.xlu0 %v63, 16
  %v623 = vpop.permute.xlu0 %622
  %v625 = vmul.f32 %v296, %v623
  %627 = vrot.lane.b32.xlu0 %v625, 112
  %v628 = vpop.permute.xlu0 %627
  %v629 = vsel %vm302, %v628, 0
  %631 = vmatprep.subr.mxu0 0.0
  %632 = vmatpush1.msra.mxu0 %v65
  %633 = vmatprep.subr.mxu0 0.0
  %634 = vmatpush1.msra.mxu0 %v66
  %635 = vmatprep.subr.mxu0 0.0
  %636 = vmatpush1.msra.mxu0 0.0
  %637 = vmatprep.subr.mxu0 0.0
  %638 = vmatpush1.msra.mxu0 0.0
  %639 = vmatprep.subr.mxu0 0.0
  %640 = vmatpush1.msra.mxu0 0.0
  %641 = vmatprep.subr.mxu0 0.0
  %642 = vmatpush1.msra.mxu0 0.0
  %643 = vmatprep.subr.mxu0 0.0
  %644 = vmatpush1.msra.mxu0 0.0
  %645 = vmatprep.subr.mxu0 0.0
  %646 = vmatpush1.msra.mxu0 0.0
  %647 = vmatprep.subr.mxu0 0.0
  %648 = vmatpush1.msra.mxu0 0.0
  %649 = vmatprep.subr.mxu0 0.0
  %650 = vmatpush1.msra.mxu0 0.0
  %651 = vmatprep.subr.mxu0 0.0
  %652 = vmatpush1.msra.mxu0 0.0
  %653 = vmatprep.subr.mxu0 0.0
  %654 = vmatpush1.msra.mxu0 0.0
  %655 = vmatprep.subr.mxu0 0.0
  %656 = vmatpush1.msra.mxu0 0.0
  %657 = vmatprep.subr.mxu0 0.0
  %658 = vmatpush1.msra.mxu0 0.0
  %659 = vmatprep.subr.mxu0 0.0
  %660 = vmatpush1.msra.mxu0 0.0
  %661 = vmatprep.subr.mxu0 0.0
  %662 = vmatpush1.msra.mxu0 0.0
  %663 = vmatprep.subr.mxu0 0.0
  %664 = vmatpush1.msra.mxu0 0.0
  %665 = vmatprep.subr.mxu0 0.0
  %666 = vmatpush1.msra.mxu0 0.0
  %667 = vmatprep.subr.mxu0 0.0
  %668 = vmatpush1.msra.mxu0 0.0
  %669 = vmatprep.subr.mxu0 0.0
  %670 = vmatpush1.msra.mxu0 0.0
  %671 = vmatprep.subr.mxu0 0.0
  %672 = vmatpush1.msra.mxu0 0.0
  %673 = vmatprep.subr.mxu0 0.0
  %674 = vmatpush1.msra.mxu0 0.0
  %675 = vmatprep.subr.mxu0 0.0
  %676 = vmatpush1.msra.mxu0 0.0
  %677 = vmatprep.subr.mxu0 0.0
  %678 = vmatpush1.msra.mxu0 0.0
  %679 = vmatprep.subr.mxu0 0.0
  %680 = vmatpush1.msra.mxu0 0.0
  %681 = vmatprep.subr.mxu0 0.0
  %682 = vmatpush1.msra.mxu0 0.0
  %683 = vmatprep.subr.mxu0 0.0
  %684 = vmatpush1.msra.mxu0 0.0
  %685 = vmatprep.subr.mxu0 0.0
  %686 = vmatpush1.msra.mxu0 0.0
  %687 = vmatprep.subr.mxu0 0.0
  %688 = vmatpush1.msra.mxu0 0.0
  %689 = vmatprep.subr.mxu0 0.0
  %690 = vmatpush1.msra.mxu0 0.0
  %691 = vmatprep.subr.mxu0 0.0
  %692 = vmatpush1.msra.mxu0 0.0
  %693 = vmatprep.subr.mxu0 0.0
  %694 = vmatpush1.msra.mxu0 0.0
  %695 = vmatprep.mubr.f32.mxu0 0.0
  %696 = vmatmul.mubr.f32.gmra.mrb[0].mxu0 %v629
  %v697 = vpop.f32.mrb[0].mxu0
  %v698 = vadd.f32 0.0, %v697
  %v699 = vpop.f32.mrb[0].mxu0
  %700 = vdwg.mxu0
  %701 = vrot.lane.b32.xlu0 %v289, 112
  %v702 = vpop.permute.xlu0 %701
  %703 = vrot.lane.b32.xlu0 %v210, 112
  %v704 = vpop.permute.xlu0 %703
  %v705 = vsel %vm302, %v702, 0
  %v707 = vsel %vm302, %v704, 0
  %709 = vmatprep.subr.mxu0 0.0
  %710 = vmatpush1.xpose.msra.mxu0 %v707
  %711 = vmatprep.subr.mxu0 0.0
  %712 = vmatpush1.xpose.msra.mxu0 0.0
  %713 = vmatprep.subr.mxu0 0.0
  %714 = vmatpush1.xpose.msra.mxu0 0.0
  %715 = vmatprep.subr.mxu0 0.0
  %716 = vmatpush1.xpose.msra.mxu0 0.0
  %717 = vmatprep.subr.mxu0 0.0
  %718 = vmatpush1.xpose.msra.mxu0 0.0
  %719 = vmatprep.subr.mxu0 0.0
  %720 = vmatpush1.xpose.msra.mxu0 0.0
  %721 = vmatprep.subr.mxu0 0.0
  %722 = vmatpush1.xpose.msra.mxu0 0.0
  %723 = vmatprep.subr.mxu0 0.0
  %724 = vmatpush1.xpose.msra.mxu0 0.0
  %725 = vmatprep.subr.mxu0 0.0
  %726 = vmatpush1.xpose.msra.mxu0 0.0
  %727 = vmatprep.subr.mxu0 0.0
  %728 = vmatpush1.xpose.msra.mxu0 0.0
  %729 = vmatprep.subr.mxu0 0.0
  %730 = vmatpush1.xpose.msra.mxu0 0.0
  %731 = vmatprep.subr.mxu0 0.0
  %732 = vmatpush1.xpose.msra.mxu0 0.0
  %733 = vmatprep.subr.mxu0 0.0
  %734 = vmatpush1.xpose.msra.mxu0 0.0
  %735 = vmatprep.subr.mxu0 0.0
  %736 = vmatpush1.xpose.msra.mxu0 0.0
  %737 = vmatprep.subr.mxu0 0.0
  %738 = vmatpush1.xpose.msra.mxu0 0.0
  %739 = vmatprep.subr.mxu0 0.0
  %740 = vmatpush1.xpose.msra.mxu0 0.0
  %741 = vmatprep.subr.mxu0 0.0
  %742 = vmatpush1.xpose.msra.mxu0 0.0
  %743 = vmatprep.subr.mxu0 0.0
  %744 = vmatpush1.xpose.msra.mxu0 0.0
  %745 = vmatprep.subr.mxu0 0.0
  %746 = vmatpush1.xpose.msra.mxu0 0.0
  %747 = vmatprep.subr.mxu0 0.0
  %748 = vmatpush1.xpose.msra.mxu0 0.0
  %749 = vmatprep.subr.mxu0 0.0
  %750 = vmatpush1.xpose.msra.mxu0 0.0
  %751 = vmatprep.subr.mxu0 0.0
  %752 = vmatpush1.xpose.msra.mxu0 0.0
  %753 = vmatprep.subr.mxu0 0.0
  %754 = vmatpush1.xpose.msra.mxu0 0.0
  %755 = vmatprep.subr.mxu0 0.0
  %756 = vmatpush1.xpose.msra.mxu0 0.0
  %757 = vmatprep.subr.mxu0 0.0
  %758 = vmatpush1.xpose.msra.mxu0 0.0
  %759 = vmatprep.subr.mxu0 0.0
  %760 = vmatpush1.xpose.msra.mxu0 0.0
  %761 = vmatprep.subr.mxu0 0.0
  %762 = vmatpush1.xpose.msra.mxu0 0.0
  %763 = vmatprep.subr.mxu0 0.0
  %764 = vmatpush1.xpose.msra.mxu0 0.0
  %765 = vmatprep.subr.mxu0 0.0
  %766 = vmatpush1.xpose.msra.mxu0 0.0
  %767 = vmatprep.subr.mxu0 0.0
  %768 = vmatpush1.xpose.msra.mxu0 0.0
  %769 = vmatprep.subr.mxu0 0.0
  %770 = vmatpush1.xpose.msra.mxu0 0.0
  %771 = vmatprep.subr.mxu0 0.0
  %772 = vmatpush1.xpose.msra.mxu0 0.0
  %773 = vmatprep.mubr.f32.mxu0 0.0
  %774 = vmatmul.mubr.f32.gmra.mrb[0].mxu0 %v705
  %v775 = vpop.f32.mrb[0].mxu0
  %v776 = vadd.f32 %v698, %v775
  %v777 = vpop.f32.mrb[0].mxu0
  %778 = vdwg.mxu0
  %780 = vrot.lane.b32.xlu0 %v64, 16
  %v781 = vpop.permute.xlu0 %780
  %v783 = vmul.f32 %v296, %v781
  %785 = vrot.lane.b32.xlu0 %v783, 112
  %v786 = vpop.permute.xlu0 %785
  %v787 = vsel %vm302, %v786, 0
  %789 = vmatprep.subr.mxu0 0.0
  %790 = vmatpush1.msra.mxu0 %v67
  %791 = vmatprep.subr.mxu0 0.0
  %792 = vmatpush1.msra.mxu0 %v68
  %793 = vmatprep.subr.mxu0 0.0
  %794 = vmatpush1.msra.mxu0 0.0
  %795 = vmatprep.subr.mxu0 0.0
  %796 = vmatpush1.msra.mxu0 0.0
  %797 = vmatprep.subr.mxu0 0.0
  %798 = vmatpush1.msra.mxu0 0.0
  %799 = vmatprep.subr.mxu0 0.0
  %800 = vmatpush1.msra.mxu0 0.0
  %801 = vmatprep.subr.mxu0 0.0
  %802 = vmatpush1.msra.mxu0 0.0
  %803 = vmatprep.subr.mxu0 0.0
  %804 = vmatpush1.msra.mxu0 0.0
  %805 = vmatprep.subr.mxu0 0.0
  %806 = vmatpush1.msra.mxu0 0.0
  %807 = vmatprep.subr.mxu0 0.0
  %808 = vmatpush1.msra.mxu0 0.0
  %809 = vmatprep.subr.mxu0 0.0
  %810 = vmatpush1.msra.mxu0 0.0
  %811 = vmatprep.subr.mxu0 0.0
  %812 = vmatpush1.msra.mxu0 0.0
  %813 = vmatprep.subr.mxu0 0.0
  %814 = vmatpush1.msra.mxu0 0.0
  %815 = vmatprep.subr.mxu0 0.0
  %816 = vmatpush1.msra.mxu0 0.0
  %817 = vmatprep.subr.mxu0 0.0
  %818 = vmatpush1.msra.mxu0 0.0
  %819 = vmatprep.subr.mxu0 0.0
  %820 = vmatpush1.msra.mxu0 0.0
  %821 = vmatprep.subr.mxu0 0.0
  %822 = vmatpush1.msra.mxu0 0.0
  %823 = vmatprep.subr.mxu0 0.0
  %824 = vmatpush1.msra.mxu0 0.0
  %825 = vmatprep.subr.mxu0 0.0
  %826 = vmatpush1.msra.mxu0 0.0
  %827 = vmatprep.subr.mxu0 0.0
  %828 = vmatpush1.msra.mxu0 0.0
  %829 = vmatprep.subr.mxu0 0.0
  %830 = vmatpush1.msra.mxu0 0.0
  %831 = vmatprep.subr.mxu0 0.0
  %832 = vmatpush1.msra.mxu0 0.0
  %833 = vmatprep.subr.mxu0 0.0
  %834 = vmatpush1.msra.mxu0 0.0
  %835 = vmatprep.subr.mxu0 0.0
  %836 = vmatpush1.msra.mxu0 0.0
  %837 = vmatprep.subr.mxu0 0.0
  %838 = vmatpush1.msra.mxu0 0.0
  %839 = vmatprep.subr.mxu0 0.0
  %840 = vmatpush1.msra.mxu0 0.0
  %841 = vmatprep.subr.mxu0 0.0
  %842 = vmatpush1.msra.mxu0 0.0
  %843 = vmatprep.subr.mxu0 0.0
  %844 = vmatpush1.msra.mxu0 0.0
  %845 = vmatprep.subr.mxu0 0.0
  %846 = vmatpush1.msra.mxu0 0.0
  %847 = vmatprep.subr.mxu0 0.0
  %848 = vmatpush1.msra.mxu0 0.0
  %849 = vmatprep.subr.mxu0 0.0
  %850 = vmatpush1.msra.mxu0 0.0
  %851 = vmatprep.subr.mxu0 0.0
  %852 = vmatpush1.msra.mxu0 0.0
  %853 = vmatprep.mubr.f32.mxu0 0.0
  %854 = vmatmul.mubr.f32.gmra.mrb[0].mxu0 %v787
  %v855 = vpop.f32.mrb[0].mxu0
  %v856 = vadd.f32 0.0, %v855
  %v857 = vpop.f32.mrb[0].mxu0
  %858 = vdwg.mxu0
  %v859 = vadd.f32 %v776, %v856
  %v860 = vsel %vm527, %v859, -1e+18
  %v861 = vsel %vm529, %v860, -inf
  %862 = vmax.xlane.f32.xlu0 %v861
  %v863 = vpop.xlane.xlu0 %862
  %v864 = vsub.f32 %v860, %v863
  %v865 = vmul.f32 %v864, 1.442695
  %v866 = vpow.pop %v865
  %v867 = vsel %vm529, %v866, 0.0
  %868 = vadd.xlane.f32.xlu0 %v867
  %v869 = vpop.xlane.xlu0 %868
  %v870 = vrcp.pop %v869
  %v871 = vmul.f32 %v866, %v870
  %872 = vrot.lane.b32.xlu0 %v280, 112
  %v873 = vpop.permute.xlu0 %872
  %v875 = vsel %vm541, %v871, 0
  %v877 = vsel %vm545, %v873, 0
  %879 = vmatprep.subr.mxu0 0.0
  %880 = vmatpush1.msra.mxu0 %v877
  %881 = vmatprep.subr.mxu0 0.0
  %882 = vmatpush1.msra.mxu0 0.0
  %883 = vmatprep.subr.mxu0 0.0
  %884 = vmatpush1.msra.mxu0 0.0
  %885 = vmatprep.subr.mxu0 0.0
  %886 = vmatpush1.msra.mxu0 0.0
  %887 = vmatprep.subr.mxu0 0.0
  %888 = vmatpush1.msra.mxu0 0.0
  %889 = vmatprep.subr.mxu0 0.0
  %890 = vmatpush1.msra.mxu0 0.0
  %891 = vmatprep.subr.mxu0 0.0
  %892 = vmatpush1.msra.mxu0 0.0
  %893 = vmatprep.subr.mxu0 0.0
  %894 = vmatpush1.msra.mxu0 0.0
  %895 = vmatprep.subr.mxu0 0.0
  %896 = vmatpush1.msra.mxu0 0.0
  %897 = vmatprep.subr.mxu0 0.0
  %898 = vmatpush1.msra.mxu0 0.0
  %899 = vmatprep.subr.mxu0 0.0
  %900 = vmatpush1.msra.mxu0 0.0
  %901 = vmatprep.subr.mxu0 0.0
  %902 = vmatpush1.msra.mxu0 0.0
  %903 = vmatprep.subr.mxu0 0.0
  %904 = vmatpush1.msra.mxu0 0.0
  %905 = vmatprep.subr.mxu0 0.0
  %906 = vmatpush1.msra.mxu0 0.0
  %907 = vmatprep.subr.mxu0 0.0
  %908 = vmatpush1.msra.mxu0 0.0
  %909 = vmatprep.subr.mxu0 0.0
  %910 = vmatpush1.msra.mxu0 0.0
  %911 = vmatprep.subr.mxu0 0.0
  %912 = vmatpush1.msra.mxu0 0.0
  %913 = vmatprep.subr.mxu0 0.0
  %914 = vmatpush1.msra.mxu0 0.0
  %915 = vmatprep.subr.mxu0 0.0
  %916 = vmatpush1.msra.mxu0 0.0
  %917 = vmatprep.subr.mxu0 0.0
  %918 = vmatpush1.msra.mxu0 0.0
  %919 = vmatprep.subr.mxu0 0.0
  %920 = vmatpush1.msra.mxu0 0.0
  %921 = vmatprep.subr.mxu0 0.0
  %922 = vmatpush1.msra.mxu0 0.0
  %923 = vmatprep.subr.mxu0 0.0
  %924 = vmatpush1.msra.mxu0 0.0
  %925 = vmatprep.subr.mxu0 0.0
  %926 = vmatpush1.msra.mxu0 0.0
  %927 = vmatprep.subr.mxu0 0.0
  %928 = vmatpush1.msra.mxu0 0.0
  %929 = vmatprep.subr.mxu0 0.0
  %930 = vmatpush1.msra.mxu0 0.0
  %931 = vmatprep.subr.mxu0 0.0
  %932 = vmatpush1.msra.mxu0 0.0
  %933 = vmatprep.subr.mxu0 0.0
  %934 = vmatpush1.msra.mxu0 0.0
  %935 = vmatprep.subr.mxu0 0.0
  %936 = vmatpush1.msra.mxu0 0.0
  %937 = vmatprep.subr.mxu0 0.0
  %938 = vmatpush1.msra.mxu0 0.0
  %939 = vmatprep.subr.mxu0 0.0
  %940 = vmatpush1.msra.mxu0 0.0
  %941 = vmatprep.subr.mxu0 0.0
  %942 = vmatpush1.msra.mxu0 0.0
  %943 = vmatprep.mubr.f32.mxu0 0.0
  %944 = vmatmul.mubr.f32.gmra.mrb[0].mxu0 %v875
  %v945 = vpop.f32.mrb[0].mxu0
  %v946 = vadd.f32 0.0, %v945
  %v947 = vpop.f32.mrb[0].mxu0
  %948 = vdwg.mxu0
  %s949 = scalar_lea.vmem %s6, 16
  %v950 = vld [vmem:[%s949] sm:$0xff]
  %v951 = vld [vmem:[%s949 + $0x8] sm:$0xff]
  %v953 = vsel %vm302, %v946, 0
  %955 = vmatprep.subr.mxu0 0.0
  %956 = vmatpush1.msra.mxu0 %v950
  %957 = vmatprep.subr.mxu0 0.0
  %958 = vmatpush1.msra.mxu0 %v951
  %959 = vmatprep.subr.mxu0 0.0
  %960 = vmatpush1.msra.mxu0 0.0
  %961 = vmatprep.subr.mxu0 0.0
  %962 = vmatpush1.msra.mxu0 0.0
  %963 = vmatprep.subr.mxu0 0.0
  %964 = vmatpush1.msra.mxu0 0.0
  %965 = vmatprep.subr.mxu0 0.0
  %966 = vmatpush1.msra.mxu0 0.0
  %967 = vmatprep.subr.mxu0 0.0
  %968 = vmatpush1.msra.mxu0 0.0
  %969 = vmatprep.subr.mxu0 0.0
  %970 = vmatpush1.msra.mxu0 0.0
  %971 = vmatprep.subr.mxu0 0.0
  %972 = vmatpush1.msra.mxu0 0.0
  %973 = vmatprep.subr.mxu0 0.0
  %974 = vmatpush1.msra.mxu0 0.0
  %975 = vmatprep.subr.mxu0 0.0
  %976 = vmatpush1.msra.mxu0 0.0
  %977 = vmatprep.subr.mxu0 0.0
  %978 = vmatpush1.msra.mxu0 0.0
  %979 = vmatprep.subr.mxu0 0.0
  %980 = vmatpush1.msra.mxu0 0.0
  %981 = vmatprep.subr.mxu0 0.0
  %982 = vmatpush1.msra.mxu0 0.0
  %983 = vmatprep.subr.mxu0 0.0
  %984 = vmatpush1.msra.mxu0 0.0
  %985 = vmatprep.subr.mxu0 0.0
  %986 = vmatpush1.msra.mxu0 0.0
  %987 = vmatprep.subr.mxu0 0.0
  %988 = vmatpush1.msra.mxu0 0.0
  %989 = vmatprep.subr.mxu0 0.0
  %990 = vmatpush1.msra.mxu0 0.0
  %991 = vmatprep.subr.mxu0 0.0
  %992 = vmatpush1.msra.mxu0 0.0
  %993 = vmatprep.subr.mxu0 0.0
  %994 = vmatpush1.msra.mxu0 0.0
  %995 = vmatprep.subr.mxu0 0.0
  %996 = vmatpush1.msra.mxu0 0.0
  %997 = vmatprep.subr.mxu0 0.0
  %998 = vmatpush1.msra.mxu0 0.0
  %999 = vmatprep.subr.mxu0 0.0
  %1000 = vmatpush1.msra.mxu0 0.0
  %1001 = vmatprep.subr.mxu0 0.0
  %1002 = vmatpush1.msra.mxu0 0.0
  %1003 = vmatprep.subr.mxu0 0.0
  %1004 = vmatpush1.msra.mxu0 0.0
  %1005 = vmatprep.subr.mxu0 0.0
  %1006 = vmatpush1.msra.mxu0 0.0
  %1007 = vmatprep.subr.mxu0 0.0
  %1008 = vmatpush1.msra.mxu0 0.0
  %1009 = vmatprep.subr.mxu0 0.0
  %1010 = vmatpush1.msra.mxu0 0.0
  %1011 = vmatprep.subr.mxu0 0.0
  %1012 = vmatpush1.msra.mxu0 0.0
  %1013 = vmatprep.subr.mxu0 0.0
  %1014 = vmatpush1.msra.mxu0 0.0
  %1015 = vmatprep.subr.mxu0 0.0
  %1016 = vmatpush1.msra.mxu0 0.0
  %1017 = vmatprep.subr.mxu0 0.0
  %1018 = vmatpush1.msra.mxu0 0.0
  %1019 = vmatprep.mubr.f32.mxu0 0.0
  %1020 = vmatmul.mubr.f32.gmra.mrb[0].mxu0 %v953
  %v1021 = vpop.f32.mrb[0].mxu0
  %v1022 = vadd.f32 0.0, %v1021
  %v1023 = vpop.f32.mrb[0].mxu0
  %1024 = vdwg.mxu0
  %v1026 = vsel %vm302, %v616, 0
  %1028 = vmatprep.subr.mxu0 0.0
  %1029 = vmatpush1.msra.mxu0 %v619
  %1030 = vmatprep.subr.mxu0 0.0
  %1031 = vmatpush1.msra.mxu0 %v620
  %1032 = vmatprep.subr.mxu0 0.0
  %1033 = vmatpush1.msra.mxu0 0.0
  %1034 = vmatprep.subr.mxu0 0.0
  %1035 = vmatpush1.msra.mxu0 0.0
  %1036 = vmatprep.subr.mxu0 0.0
  %1037 = vmatpush1.msra.mxu0 0.0
  %1038 = vmatprep.subr.mxu0 0.0
  %1039 = vmatpush1.msra.mxu0 0.0
  %1040 = vmatprep.subr.mxu0 0.0
  %1041 = vmatpush1.msra.mxu0 0.0
  %1042 = vmatprep.subr.mxu0 0.0
  %1043 = vmatpush1.msra.mxu0 0.0
  %1044 = vmatprep.subr.mxu0 0.0
  %1045 = vmatpush1.msra.mxu0 0.0
  %1046 = vmatprep.subr.mxu0 0.0
  %1047 = vmatpush1.msra.mxu0 0.0
  %1048 = vmatprep.subr.mxu0 0.0
  %1049 = vmatpush1.msra.mxu0 0.0
  %1050 = vmatprep.subr.mxu0 0.0
  %1051 = vmatpush1.msra.mxu0 0.0
  %1052 = vmatprep.subr.mxu0 0.0
  %1053 = vmatpush1.msra.mxu0 0.0
  %1054 = vmatprep.subr.mxu0 0.0
  %1055 = vmatpush1.msra.mxu0 0.0
  %1056 = vmatprep.subr.mxu0 0.0
  %1057 = vmatpush1.msra.mxu0 0.0
  %1058 = vmatprep.subr.mxu0 0.0
  %1059 = vmatpush1.msra.mxu0 0.0
  %1060 = vmatprep.subr.mxu0 0.0
  %1061 = vmatpush1.msra.mxu0 0.0
  %1062 = vmatprep.subr.mxu0 0.0
  %1063 = vmatpush1.msra.mxu0 0.0
  %1064 = vmatprep.subr.mxu0 0.0
  %1065 = vmatpush1.msra.mxu0 0.0
  %1066 = vmatprep.subr.mxu0 0.0
  %1067 = vmatpush1.msra.mxu0 0.0
  %1068 = vmatprep.subr.mxu0 0.0
  %1069 = vmatpush1.msra.mxu0 0.0
  %1070 = vmatprep.subr.mxu0 0.0
  %1071 = vmatpush1.msra.mxu0 0.0
  %1072 = vmatprep.subr.mxu0 0.0
  %1073 = vmatpush1.msra.mxu0 0.0
  %1074 = vmatprep.subr.mxu0 0.0
  %1075 = vmatpush1.msra.mxu0 0.0
  %1076 = vmatprep.subr.mxu0 0.0
  %1077 = vmatpush1.msra.mxu0 0.0
  %1078 = vmatprep.subr.mxu0 0.0
  %1079 = vmatpush1.msra.mxu0 0.0
  %1080 = vmatprep.subr.mxu0 0.0
  %1081 = vmatpush1.msra.mxu0 0.0
  %1082 = vmatprep.subr.mxu0 0.0
  %1083 = vmatpush1.msra.mxu0 0.0
  %1084 = vmatprep.subr.mxu0 0.0
  %1085 = vmatpush1.msra.mxu0 0.0
  %1086 = vmatprep.subr.mxu0 0.0
  %1087 = vmatpush1.msra.mxu0 0.0
  %1088 = vmatprep.subr.mxu0 0.0
  %1089 = vmatpush1.msra.mxu0 0.0
  %1090 = vmatprep.subr.mxu0 0.0
  %1091 = vmatpush1.msra.mxu0 0.0
  %1092 = vmatprep.mubr.f32.mxu0 0.0
  %1093 = vmatmul.mubr.f32.gmra.mrb[0].mxu0 %v1026
  %v1094 = vpop.f32.mrb[0].mxu0
  %v1095 = vadd.f32 %v1022, %v1094
  %v1096 = vpop.f32.mrb[0].mxu0
  %1097 = vdwg.mxu0
  %v1099 = vlaneseq
  %v1100 = vshrl.u32 %v1099, 7
  %v1101 = vsub.s32 0, %v1100
  %v1102 = vrot.slane %v62, %v1101
  %v1104 = vadd.f32 %v1095, %v1102
  %v1105 = vadd.f32 %v1104, %v47
  %v1106 = vld [vmem:[%s12] sm:$0x1]
  %v1107 = vld [vmem:[%s13] sm:$0x1]
  %vm1108 = vcmask 257024
  %v1109 = vsel %vm1108, %v1105, 0.0
  %1110 = vadd.xlane.f32.xlu0 %v1109
  %v1111 = vpop.xlane.xlu0 %1110
  %v1112 = vrcp.pop 32.0
  %v1113 = vmul.f32 %v1111, %v1112
  %v1114 = vsub.f32 %v1105, %v1113
  %v1115 = vmul.f32 %v1114, %v1114
  %v1116 = vsel %vm1108, %v1115, 0.0
  %1117 = vadd.xlane.f32.xlu0 %v1116
  %v1118 = vpop.xlane.xlu0 %1117
  %v1119 = vmul.f32 %v1118, %v1112
  %v1120 = vadd.f32 %v1119, 1e-05
  %v1121 = vrsqrt.pop %v1120
  %v1122 = vmul.f32 %v1114, %v1121
  %v1124 = vlaneseq
  %v1125 = vshrl.u32 %v1124, 7
  %v1126 = vsub.s32 0, %v1125
  %v1127 = vrot.slane %v1106, %v1126
  %v1129 = vmul.f32 %v1122, %v1127
  %v1131 = vlaneseq
  %v1132 = vshrl.u32 %v1131, 7
  %v1133 = vsub.s32 0, %v1132
  %v1134 = vrot.slane %v1107, %v1133
  %v1136 = vadd.f32 %v1129, %v1134
  %1137 = vst.msk [vmem:[%s14] sm:$0xf] %vm1108, %v1136
  // Predicated region
  $region58: #{body.32} parent=0 // pred_check
    _
  $region59: #{body.32} parent=0 // pred_check_branch
    %1139 = sbr.rel (0) target = $region61
  $region60: #{body.32} parent=0 // pred_region
    _
  $region61: #{body.32} parent=0 // pred_fallthru
    _
  // Predicated region
  $region62: #{body.32} parent=0 // pred_check
    _
  $region63: #{body.32} parent=0 // pred_check_branch
    %1141 = sbr.rel (0) target = $region65
  $region64: #{body.32} parent=0 // pred_region
    _
  $region65: #{body.32} parent=0 // pred_fallthru
    _

// kernel: body.33
$region0: #{body.33}
  #allocation0 [shape = 'u32[]', space=smem, size = 0x4, offset = 0x4, fixed_abs, tag = 'smem constant byte address 0x4 - core index']
  #allocation1 [shape = 'u32[144,128]{1,0:T(1,128)}', space=vmem, size = 0x12000, scoped, tag = 'internal scratch']
  %s0 = inlined_call_operand.vmem [shape: f32[8,32], index: 0, kind: input, shape index: {}, may-alias: {0,1}]
  %s1 = inlined_call_operand.vmem [shape: f32[8,32], index: 1, kind: input, shape index: {}, may-alias: {0,1}]
  %s2 = inlined_call_operand.vmem [shape: f32[4,32], index: 2, kind: input, shape index: {}]
  %s3 = inlined_call_operand.vmem [shape: f32[32,32], index: 3, kind: input, shape index: {}]
  %s4 = inlined_call_operand.vmem [shape: f32[32,32], index: 4, kind: input, shape index: {}]
  %s5 = inlined_call_operand.vmem [shape: f32[32,32], index: 5, kind: input, shape index: {}]
  %s6 = inlined_call_operand.vmem [shape: f32[1,32], index: 6, kind: input, shape index: {}]
  %s7 = inlined_call_operand.vmem [shape: f32[1,32], index: 7, kind: input, shape index: {}]
  %s8 = inlined_call_operand.vmem [shape: f32[2,16,32], index: 8, kind: input, shape index: {}]
  %s9 = inlined_call_operand.vmem [shape: f32[1,32], index: 9, kind: input, shape index: {}]
  %s10 = inlined_call_operand.vmem [shape: f32[4,16], index: 10, kind: input, shape index: {}]
  %s11 = inlined_call_operand.vmem [shape: f32[4,16], index: 11, kind: input, shape index: {}]
  %s12 = inlined_call_operand.vmem [shape: f32[16,8], index: 12, kind: input, shape index: {}]
  %s13 = inlined_call_operand.vmem [shape: f32[16,8], index: 13, kind: input, shape index: {}]
  %s14 = inlined_call_operand.vmem [shape: f32[1,32], index: 14, kind: input, shape index: {}]
  %s15 = inlined_call_operand.vmem [shape: f32[1,32], index: 15, kind: input, shape index: {}]
  %s16 = inlined_call_operand.vmem [shape: f32[32,128], index: 16, kind: input, shape index: {}]
  %s17 = inlined_call_operand.vmem [shape: f32[1,128], index: 17, kind: input, shape index: {}]
  %s18 = inlined_call_operand.vmem [shape: f32[128,32], index: 18, kind: input, shape index: {}]
  %s19 = inlined_call_operand.vmem [shape: f32[1,32], index: 19, kind: input, shape index: {}]
  %s20 = inlined_call_operand.vmem [shape: f32[1,32], index: 20, kind: input, shape index: {}]
  %s21 = inlined_call_operand.vmem [shape: f32[1,32], index: 21, kind: input, shape index: {}]
  %s22 = inlined_call_operand.vmem [shape: f32[4,32], index: 22, kind: output, shape index: {}]
  %s23 = sld [smem:[#allocation0]]
  $region98: #{body.33} parent=0
    _
  %s25 = ssub.s32 1, %s23
  %s26 = scalar_select 0, %s25, %s23
  // Predicated region
  $region2: #{body.33} parent=0 // pred_check
    _
  $region3: #{body.33} parent=0 // pred_check_branch
    %28 = sbr.rel (0) target = $region5
  $region4: #{body.33} parent=0 // pred_region
    _
  $region5: #{body.33} parent=0 // pred_fallthru
    _
  // Predicated region
  $region6: #{body.33} parent=0 // pred_check
    _
  $region7: #{body.33} parent=0 // pred_check_branch
    %30 = sbr.rel (0) target = $region9
  $region8: #{body.33} parent=0 // pred_region
    _
  $region9: #{body.33} parent=0 // pred_fallthru
    _
  // Predicated region
  $region10: #{body.33} parent=0 // pred_check
    _
  $region11: #{body.33} parent=0 // pred_check_branch
    %32 = sbr.rel (0) target = $region13
  $region12: #{body.33} parent=0 // pred_region
    _
  $region13: #{body.33} parent=0 // pred_fallthru
    _
  // Predicated region
  $region14: #{body.33} parent=0 // pred_check
    _
  $region15: #{body.33} parent=0 // pred_check_branch
    %34 = sbr.rel (0) target = $region17
  $region16: #{body.33} parent=0 // pred_region
    _
  $region17: #{body.33} parent=0 // pred_fallthru
    _
  // Predicated region
  $region18: #{body.33} parent=0 // pred_check
    _
  $region19: #{body.33} parent=0 // pred_check_branch
    %36 = sbr.rel (0) target = $region21
  $region20: #{body.33} parent=0 // pred_region
    _
  $region21: #{body.33} parent=0 // pred_fallthru
    _
  // Predicated region
  $region22: #{body.33} parent=0 // pred_check
    _
  $region23: #{body.33} parent=0 // pred_check_branch
    %38 = sbr.rel (0) target = $region25
  $region24: #{body.33} parent=0 // pred_region
    _
  $region25: #{body.33} parent=0 // pred_fallthru
    _
  // Predicated region
  $region26: #{body.33} parent=0 // pred_check
    _
  $region27: #{body.33} parent=0 // pred_check_branch
    %40 = sbr.rel (0) target = $region29
  $region28: #{body.33} parent=0 // pred_region
    _
  $region29: #{body.33} parent=0 // pred_fallthru
    _
  // Predicated region
  $region30: #{body.33} parent=0 // pred_check
    _
  $region31: #{body.33} parent=0 // pred_check_branch
    %42 = sbr.rel (0) target = $region33
  $region32: #{body.33} parent=0 // pred_region
    _
  $region33: #{body.33} parent=0 // pred_fallthru
    _
  // Predicated region
  $region34: #{body.33} parent=0 // pred_check
    _
  $region35: #{body.33} parent=0 // pred_check_branch
    %44 = sbr.rel (0) target = $region37
  $region36: #{body.33} parent=0 // pred_region
    _
  $region37: #{body.33} parent=0 // pred_fallthru
    _
  // Predicated region
  $region38: #{body.33} parent=0 // pred_check
    _
  $region39: #{body.33} parent=0 // pred_check_branch
    %46 = sbr.rel (0) target = $region41
  $region40: #{body.33} parent=0 // pred_region
    _
  $region41: #{body.33} parent=0 // pred_fallthru
    _
  // Predicated region
  $region42: #{body.33} parent=0 // pred_check
    _
  $region43: #{body.33} parent=0 // pred_check_branch
    %48 = sbr.rel (0) target = $region45
  $region44: #{body.33} parent=0 // pred_region
    _
  $region45: #{body.33} parent=0 // pred_fallthru
    _
  // Predicated region
  $region46: #{body.33} parent=0 // pred_check
    _
  $region47: #{body.33} parent=0 // pred_check_branch
    %50 = sbr.rel (0) target = $region49
  $region48: #{body.33} parent=0 // pred_region
    _
  $region49: #{body.33} parent=0 // pred_fallthru
    _
  // Predicated region
  $region50: #{body.33} parent=0 // pred_check
    _
  $region51: #{body.33} parent=0 // pred_check_branch
    %52 = sbr.rel (0) target = $region53
  $region52: #{body.33} parent=0 // pred_region
    _
  $region53: #{body.33} parent=0 // pred_fallthru
    _
  // Predicated region
  $region54: #{body.33} parent=0 // pred_check
    _
  $region55: #{body.33} parent=0 // pred_check_branch
    %54 = sbr.rel (0) target = $region57
  $region56: #{body.33} parent=0 // pred_region
    _
  $region57: #{body.33} parent=0 // pred_fallthru
    _
  // Predicated region
  $region58: #{body.33} parent=0 // pred_check
    _
  $region59: #{body.33} parent=0 // pred_check_branch
    %56 = sbr.rel (0) target = $region61
  $region60: #{body.33} parent=0 // pred_region
    _
  $region61: #{body.33} parent=0 // pred_fallthru
    _
  // Predicated region
  $region62: #{body.33} parent=0 // pred_check
    _
  $region63: #{body.33} parent=0 // pred_check_branch
    %58 = sbr.rel (0) target = $region65
  $region64: #{body.33} parent=0 // pred_region
    _
  $region65: #{body.33} parent=0 // pred_fallthru
    _
  // Predicated region
  $region66: #{body.33} parent=0 // pred_check
    _
  $region67: #{body.33} parent=0 // pred_check_branch
    %60 = sbr.rel (0) target = $region69
  $region68: #{body.33} parent=0 // pred_region
    _
  $region69: #{body.33} parent=0 // pred_fallthru
    _
  // Predicated region
  $region70: #{body.33} parent=0 // pred_check
    _
  $region71: #{body.33} parent=0 // pred_check_branch
    %62 = sbr.rel (0) target = $region73
  $region72: #{body.33} parent=0 // pred_region
    _
  $region73: #{body.33} parent=0 // pred_fallthru
    _
  // Predicated region
  $region74: #{body.33} parent=0 // pred_check
    _
  $region75: #{body.33} parent=0 // pred_check_branch
    %64 = sbr.rel (0) target = $region77
  $region76: #{body.33} parent=0 // pred_region
    _
  $region77: #{body.33} parent=0 // pred_fallthru
    _
  // Predicated region
  $region78: #{body.33} parent=0 // pred_check
    _
  $region79: #{body.33} parent=0 // pred_check_branch
    %66 = sbr.rel (0) target = $region81
  $region80: #{body.33} parent=0 // pred_region
    _
  $region81: #{body.33} parent=0 // pred_fallthru
    _
  // Predicated region
  $region82: #{body.33} parent=0 // pred_check
    _
  $region83: #{body.33} parent=0 // pred_check_branch
    %68 = sbr.rel (0) target = $region85
  $region84: #{body.33} parent=0 // pred_region
    _
  $region85: #{body.33} parent=0 // pred_fallthru
    _
  // Predicated region
  $region86: #{body.33} parent=0 // pred_check
    _
  $region87: #{body.33} parent=0 // pred_check_branch
    %70 = sbr.rel (0) target = $region89
  $region88: #{body.33} parent=0 // pred_region
    _
  $region89: #{body.33} parent=0 // pred_fallthru
    _
  %v71 = vld [vmem:[%s2] sm:$0xf]
  %v72 = vld [vmem:[%s0] sm:$0xff]
  %v73 = vld [vmem:[%s1] sm:$0xff]
  %v74 = vld [vmem:[%s3] sm:$0xff]
  %v75 = vld [vmem:[%s3 + $0x8] sm:$0xff]
  %v76 = vld [vmem:[%s3 + $0x10] sm:$0xff]
  %v77 = vld [vmem:[%s3 + $0x18] sm:$0xff]
  %v78 = vld [vmem:[%s4] sm:$0xff]
  %v79 = vld [vmem:[%s4 + $0x8] sm:$0xff]
  %v80 = vld [vmem:[%s4 + $0x10] sm:$0xff]
  %v81 = vld [vmem:[%s4 + $0x18] sm:$0xff]
  %v82 = vld [vmem:[%s5] sm:$0xff]
  %v83 = vld [vmem:[%s5 + $0x8] sm:$0xff]
  %v84 = vld [vmem:[%s5 + $0x10] sm:$0xff]
  %v85 = vld [vmem:[%s5 + $0x18] sm:$0xff]
  %v86 = vld [vmem:[%s6] sm:$0x1]
  %v87 = vld [vmem:[%s7] sm:$0x1]
  %v88 = vld [vmem:[%s9] sm:$0x1]
  %v89 = vld [vmem:[%s10] sm:$0xf]
  %v90 = vld [vmem:[%s11] sm:$0xf]
  %v91 = vld [vmem:[%s12] sm:$0xff]
  %v92 = vld [vmem:[%s12 + $0x8] sm:$0xff]
  %v93 = vld [vmem:[%s13] sm:$0xff]
  %v94 = vld [vmem:[%s13 + $0x8] sm:$0xff]
  %vm95 = vcmask 261120
  %v97 = vsel %vm95, %v71, 0
  %99 = vmatprep.subr.mxu0 0.0
  %100 = vmatpush1.msra.mxu0 %v74
  %101 = vmatprep.subr.mxu0 0.0
  %102 = vmatpush1.msra.mxu0 %v75
  %103 = vmatprep.subr.mxu0 0.0
  %104 = vmatpush1.msra.mxu0 %v76
  %105 = vmatprep.subr.mxu0 0.0
  %106 = vmatpush1.msra.mxu0 %v77
  %107 = vmatprep.subr.mxu0 0.0
  %108 = vmatpush1.msra.mxu0 0.0
  %109 = vmatprep.subr.mxu0 0.0
  %110 = vmatpush1.msra.mxu0 0.0
  %111 = vmatprep.subr.mxu0 0.0
  %112 = vmatpush1.msra.mxu0 0.0
  %113 = vmatprep.subr.mxu0 0.0
  %114 = vmatpush1.msra.mxu0 0.0
  %115 = vmatprep.subr.mxu0 0.0
  %116 = vmatpush1.msra.mxu0 0.0
  %117 = vmatprep.subr.mxu0 0.0
  %118 = vmatpush1.msra.mxu0 0.0
  %119 = vmatprep.subr.mxu0 0.0
  %120 = vmatpush1.msra.mxu0 0.0
  %121 = vmatprep.subr.mxu0 0.0
  %122 = vmatpush1.msra.mxu0 0.0
  %123 = vmatprep.subr.mxu0 0.0
  %124 = vmatpush1.msra.mxu0 0.0
  %125 = vmatprep.subr.mxu0 0.0
  %126 = vmatpush1.msra.mxu0 0.0
  %127 = vmatprep.subr.mxu0 0.0
  %128 = vmatpush1.msra.mxu0 0.0
  %129 = vmatprep.subr.mxu0 0.0
  %130 = vmatpush1.msra.mxu0 0.0
  %131 = vmatprep.subr.mxu0 0.0
  %132 = vmatpush1.msra.mxu0 0.0
  %133 = vmatprep.subr.mxu0 0.0
  %134 = vmatpush1.msra.mxu0 0.0
  %135 = vmatprep.subr.mxu0 0.0
  %136 = vmatpush1.msra.mxu0 0.0
  %137 = vmatprep.subr.mxu0 0.0
  %138 = vmatpush1.msra.mxu0 0.0
  %139 = vmatprep.subr.mxu0 0.0
  %140 = vmatpush1.msra.mxu0 0.0
  %141 = vmatprep.subr.mxu0 0.0
  %142 = vmatpush1.msra.mxu0 0.0
  %143 = vmatprep.subr.mxu0 0.0
  %144 = vmatpush1.msra.mxu0 0.0
  %145 = vmatprep.subr.mxu0 0.0
  %146 = vmatpush1.msra.mxu0 0.0
  %147 = vmatprep.subr.mxu0 0.0
  %148 = vmatpush1.msra.mxu0 0.0
  %149 = vmatprep.subr.mxu0 0.0
  %150 = vmatpush1.msra.mxu0 0.0
  %151 = vmatprep.subr.mxu0 0.0
  %152 = vmatpush1.msra.mxu0 0.0
  %153 = vmatprep.subr.mxu0 0.0
  %154 = vmatpush1.msra.mxu0 0.0
  %155 = vmatprep.subr.mxu0 0.0
  %156 = vmatpush1.msra.mxu0 0.0
  %157 = vmatprep.subr.mxu0 0.0
  %158 = vmatpush1.msra.mxu0 0.0
  %159 = vmatprep.subr.mxu0 0.0
  %160 = vmatpush1.msra.mxu0 0.0
  %161 = vmatprep.subr.mxu0 0.0
  %162 = vmatpush1.msra.mxu0 0.0
  %163 = vmatprep.mubr.f32.mxu0 0.0
  %164 = vmatmul.mubr.f32.gmra.mrb[0].mxu0 %v97
  %v165 = vpop.f32.mrb[0].mxu0
  %v166 = vadd.f32 0.0, %v165
  %v167 = vpop.f32.mrb[0].mxu0
  %168 = vdwg.mxu0
  %v170 = vsel %vm95, %v73, 0
  %172 = vmatprep.subr.mxu0 0.0
  %173 = vmatpush1.msra.mxu0 %v78
  %174 = vmatprep.subr.mxu0 0.0
  %175 = vmatpush1.msra.mxu0 %v79
  %176 = vmatprep.subr.mxu0 0.0
  %177 = vmatpush1.msra.mxu0 %v80
  %178 = vmatprep.subr.mxu0 0.0
  %179 = vmatpush1.msra.mxu0 %v81
  %180 = vmatprep.subr.mxu0 0.0
  %181 = vmatpush1.msra.mxu0 0.0
  %182 = vmatprep.subr.mxu0 0.0
  %183 = vmatpush1.msra.mxu0 0.0
  %184 = vmatprep.subr.mxu0 0.0
  %185 = vmatpush1.msra.mxu0 0.0
  %186 = vmatprep.subr.mxu0 0.0
  %187 = vmatpush1.msra.mxu0 0.0
  %188 = vmatprep.subr.mxu0 0.0
  %189 = vmatpush1.msra.mxu0 0.0
  %190 = vmatprep.subr.mxu0 0.0
  %191 = vmatpush1.msra.mxu0 0.0
  %192 = vmatprep.subr.mxu0 0.0
  %193 = vmatpush1.msra.mxu0 0.0
  %194 = vmatprep.subr.mxu0 0.0
  %195 = vmatpush1.msra.mxu0 0.0
  %196 = vmatprep.subr.mxu0 0.0
  %197 = vmatpush1.msra.mxu0 0.0
  %198 = vmatprep.subr.mxu0 0.0
  %199 = vmatpush1.msra.mxu0 0.0
  %200 = vmatprep.subr.mxu0 0.0
  %201 = vmatpush1.msra.mxu0 0.0
  %202 = vmatprep.subr.mxu0 0.0
  %203 = vmatpush1.msra.mxu0 0.0
  %204 = vmatprep.subr.mxu0 0.0
  %205 = vmatpush1.msra.mxu0 0.0
  %206 = vmatprep.subr.mxu0 0.0
  %207 = vmatpush1.msra.mxu0 0.0
  %208 = vmatprep.subr.mxu0 0.0
  %209 = vmatpush1.msra.mxu0 0.0
  %210 = vmatprep.subr.mxu0 0.0
  %211 = vmatpush1.msra.mxu0 0.0
  %212 = vmatprep.subr.mxu0 0.0
  %213 = vmatpush1.msra.mxu0 0.0
  %214 = vmatprep.subr.mxu0 0.0
  %215 = vmatpush1.msra.mxu0 0.0
  %216 = vmatprep.subr.mxu0 0.0
  %217 = vmatpush1.msra.mxu0 0.0
  %218 = vmatprep.subr.mxu0 0.0
  %219 = vmatpush1.msra.mxu0 0.0
  %220 = vmatprep.subr.mxu0 0.0
  %221 = vmatpush1.msra.mxu0 0.0
  %222 = vmatprep.subr.mxu0 0.0
  %223 = vmatpush1.msra.mxu0 0.0
  %224 = vmatprep.subr.mxu0 0.0
  %225 = vmatpush1.msra.mxu0 0.0
  %226 = vmatprep.subr.mxu0 0.0
  %227 = vmatpush1.msra.mxu0 0.0
  %228 = vmatprep.subr.mxu0 0.0
  %229 = vmatpush1.msra.mxu0 0.0
  %230 = vmatprep.subr.mxu0 0.0
  %231 = vmatpush1.msra.mxu0 0.0
  %232 = vmatprep.subr.mxu0 0.0
  %233 = vmatpush1.msra.mxu0 0.0
  %234 = vmatprep.subr.mxu0 0.0
  %235 = vmatpush1.msra.mxu0 0.0
  %236 = vmatprep.mubr.f32.mxu0 0.0
  %237 = vmatmul.mubr.f32.gmra.mrb[0].mxu0 %v170
  %v238 = vpop.f32.mrb[0].mxu0
  %v239 = vadd.f32 0.0, %v238
  %v240 = vpop.f32.mrb[0].mxu0
  %241 = vdwg.mxu0
  %v243 = vsel %vm95, %v72, 0
  %245 = vmatprep.subr.mxu0 0.0
  %246 = vmatpush1.msra.mxu0 %v82
  %247 = vmatprep.subr.mxu0 0.0
  %248 = vmatpush1.msra.mxu0 %v83
  %249 = vmatprep.subr.mxu0 0.0
  %250 = vmatpush1.msra.mxu0 %v84
  %251 = vmatprep.subr.mxu0 0.0
  %252 = vmatpush1.msra.mxu0 %v85
  %253 = vmatprep.subr.mxu0 0.0
  %254 = vmatpush1.msra.mxu0 0.0
  %255 = vmatprep.subr.mxu0 0.0
  %256 = vmatpush1.msra.mxu0 0.0
  %257 = vmatprep.subr.mxu0 0.0
  %258 = vmatpush1.msra.mxu0 0.0
  %259 = vmatprep.subr.mxu0 0.0
  %260 = vmatpush1.msra.mxu0 0.0
  %261 = vmatprep.subr.mxu0 0.0
  %262 = vmatpush1.msra.mxu0 0.0
  %263 = vmatprep.subr.mxu0 0.0
  %264 = vmatpush1.msra.mxu0 0.0
  %265 = vmatprep.subr.mxu0 0.0
  %266 = vmatpush1.msra.mxu0 0.0
  %267 = vmatprep.subr.mxu0 0.0
  %268 = vmatpush1.msra.mxu0 0.0
  %269 = vmatprep.subr.mxu0 0.0
  %270 = vmatpush1.msra.mxu0 0.0
  %271 = vmatprep.subr.mxu0 0.0
  %272 = vmatpush1.msra.mxu0 0.0
  %273 = vmatprep.subr.mxu0 0.0
  %274 = vmatpush1.msra.mxu0 0.0
  %275 = vmatprep.subr.mxu0 0.0
  %276 = vmatpush1.msra.mxu0 0.0
  %277 = vmatprep.subr.mxu0 0.0
  %278 = vmatpush1.msra.mxu0 0.0
  %279 = vmatprep.subr.mxu0 0.0
  %280 = vmatpush1.msra.mxu0 0.0
  %281 = vmatprep.subr.mxu0 0.0
  %282 = vmatpush1.msra.mxu0 0.0
  %283 = vmatprep.subr.mxu0 0.0
  %284 = vmatpush1.msra.mxu0 0.0
  %285 = vmatprep.subr.mxu0 0.0
  %286 = vmatpush1.msra.mxu0 0.0
  %287 = vmatprep.subr.mxu0 0.0
  %288 = vmatpush1.msra.mxu0 0.0
  %289 = vmatprep.subr.mxu0 0.0
  %290 = vmatpush1.msra.mxu0 0.0
  %291 = vmatprep.subr.mxu0 0.0
  %292 = vmatpush1.msra.mxu0 0.0
  %293 = vmatprep.subr.mxu0 0.0
  %294 = vmatpush1.msra.mxu0 0.0
  %295 = vmatprep.subr.mxu0 0.0
  %296 = vmatpush1.msra.mxu0 0.0
  %297 = vmatprep.subr.mxu0 0.0
  %298 = vmatpush1.msra.mxu0 0.0
  %299 = vmatprep.subr.mxu0 0.0
  %300 = vmatpush1.msra.mxu0 0.0
  %301 = vmatprep.subr.mxu0 0.0
  %302 = vmatpush1.msra.mxu0 0.0
  %303 = vmatprep.subr.mxu0 0.0
  %304 = vmatpush1.msra.mxu0 0.0
  %305 = vmatprep.subr.mxu0 0.0
  %306 = vmatpush1.msra.mxu0 0.0
  %307 = vmatprep.subr.mxu0 0.0
  %308 = vmatpush1.msra.mxu0 0.0
  %309 = vmatprep.mubr.f32.mxu0 0.0
  %310 = vmatmul.mubr.f32.gmra.mrb[0].mxu0 %v243
  %v311 = vpop.f32.mrb[0].mxu0
  %v312 = vadd.f32 0.0, %v311
  %v313 = vpop.f32.mrb[0].mxu0
  %314 = vdwg.mxu0
  %v316 = vlaneseq
  %v317 = vshrl.u32 %v316, 7
  %v318 = vsub.s32 0, %v317
  %v319 = vrot.slane %v86, %v318
  %v321 = vadd.f32 %v166, %v319
  %v323 = vlaneseq
  %v324 = vshrl.u32 %v323, 7
  %v325 = vsub.s32 0, %v324
  %v326 = vrot.slane %v87, %v325
  %v328 = vadd.f32 %v166, %v326
  %v329 = vmul.f32 %v328, %v89
  %vm330 = vcmask 130048
  %v332 = vsel %vm330, %v329, 0
  %334 = vmatprep.subr.mxu0 0.0
  %335 = vmatpush1.msra.mxu0 %v91
  %336 = vmatprep.subr.mxu0 0.0
  %337 = vmatpush1.msra.mxu0 %v92
  %338 = vmatprep.subr.mxu0 0.0
  %339 = vmatpush1.msra.mxu0 0.0
  %340 = vmatprep.subr.mxu0 0.0
  %341 = vmatpush1.msra.mxu0 0.0
  %342 = vmatprep.subr.mxu0 0.0
  %343 = vmatpush1.msra.mxu0 0.0
  %344 = vmatprep.subr.mxu0 0.0
  %345 = vmatpush1.msra.mxu0 0.0
  %346 = vmatprep.subr.mxu0 0.0
  %347 = vmatpush1.msra.mxu0 0.0
  %348 = vmatprep.subr.mxu0 0.0
  %349 = vmatpush1.msra.mxu0 0.0
  %350 = vmatprep.subr.mxu0 0.0
  %351 = vmatpush1.msra.mxu0 0.0
  %352 = vmatprep.subr.mxu0 0.0
  %353 = vmatpush1.msra.mxu0 0.0
  %354 = vmatprep.subr.mxu0 0.0
  %355 = vmatpush1.msra.mxu0 0.0
  %356 = vmatprep.subr.mxu0 0.0
  %357 = vmatpush1.msra.mxu0 0.0
  %358 = vmatprep.subr.mxu0 0.0
  %359 = vmatpush1.msra.mxu0 0.0
  %360 = vmatprep.subr.mxu0 0.0
  %361 = vmatpush1.msra.mxu0 0.0
  %362 = vmatprep.subr.mxu0 0.0
  %363 = vmatpush1.msra.mxu0 0.0
  %364 = vmatprep.subr.mxu0 0.0
  %365 = vmatpush1.msra.mxu0 0.0
  %366 = vmatprep.subr.mxu0 0.0
  %367 = vmatpush1.msra.mxu0 0.0
  %368 = vmatprep.subr.mxu0 0.0
  %369 = vmatpush1.msra.mxu0 0.0
  %370 = vmatprep.subr.mxu0 0.0
  %371 = vmatpush1.msra.mxu0 0.0
  %372 = vmatprep.subr.mxu0 0.0
  %373 = vmatpush1.msra.mxu0 0.0
  %374 = vmatprep.subr.mxu0 0.0
  %375 = vmatpush1.msra.mxu0 0.0
  %376 = vmatprep.subr.mxu0 0.0
  %377 = vmatpush1.msra.mxu0 0.0
  %378 = vmatprep.subr.mxu0 0.0
  %379 = vmatpush1.msra.mxu0 0.0
  %380 = vmatprep.subr.mxu0 0.0
  %381 = vmatpush1.msra.mxu0 0.0
  %382 = vmatprep.subr.mxu0 0.0
  %383 = vmatpush1.msra.mxu0 0.0
  %384 = vmatprep.subr.mxu0 0.0
  %385 = vmatpush1.msra.mxu0 0.0
  %386 = vmatprep.subr.mxu0 0.0
  %387 = vmatpush1.msra.mxu0 0.0
  %388 = vmatprep.subr.mxu0 0.0
  %389 = vmatpush1.msra.mxu0 0.0
  %390 = vmatprep.subr.mxu0 0.0
  %391 = vmatpush1.msra.mxu0 0.0
  %392 = vmatprep.subr.mxu0 0.0
  %393 = vmatpush1.msra.mxu0 0.0
  %394 = vmatprep.subr.mxu0 0.0
  %395 = vmatpush1.msra.mxu0 0.0
  %396 = vmatprep.subr.mxu0 0.0
  %397 = vmatpush1.msra.mxu0 0.0
  %398 = vmatprep.mubr.f32.mxu0 0.0
  %399 = vmatmul.mubr.f32.gmra.mrb[0].mxu0 %v332
  %v400 = vpop.f32.mrb[0].mxu0
  %v401 = vadd.f32 0.0, %v400
  %v402 = vpop.f32.mrb[0].mxu0
  %403 = vdwg.mxu0
  %v405 = vsel %vm330, %v321, 0
  %v408 = vsel %vm330, %v239, 0
  %410 = vmatprep.subr.mxu0 0.0
  %411 = vmatpush1.xpose.msra.mxu0 %v408
  %412 = vmatprep.subr.mxu0 0.0
  %413 = vmatpush1.xpose.msra.mxu0 0.0
  %414 = vmatprep.subr.mxu0 0.0
  %415 = vmatpush1.xpose.msra.mxu0 0.0
  %416 = vmatprep.subr.mxu0 0.0
  %417 = vmatpush1.xpose.msra.mxu0 0.0
  %418 = vmatprep.subr.mxu0 0.0
  %419 = vmatpush1.xpose.msra.mxu0 0.0
  %420 = vmatprep.subr.mxu0 0.0
  %421 = vmatpush1.xpose.msra.mxu0 0.0
  %422 = vmatprep.subr.mxu0 0.0
  %423 = vmatpush1.xpose.msra.mxu0 0.0
  %424 = vmatprep.subr.mxu0 0.0
  %425 = vmatpush1.xpose.msra.mxu0 0.0
  %426 = vmatprep.subr.mxu0 0.0
  %427 = vmatpush1.xpose.msra.mxu0 0.0
  %428 = vmatprep.subr.mxu0 0.0
  %429 = vmatpush1.xpose.msra.mxu0 0.0
  %430 = vmatprep.subr.mxu0 0.0
  %431 = vmatpush1.xpose.msra.mxu0 0.0
  %432 = vmatprep.subr.mxu0 0.0
  %433 = vmatpush1.xpose.msra.mxu0 0.0
  %434 = vmatprep.subr.mxu0 0.0
  %435 = vmatpush1.xpose.msra.mxu0 0.0
  %436 = vmatprep.subr.mxu0 0.0
  %437 = vmatpush1.xpose.msra.mxu0 0.0
  %438 = vmatprep.subr.mxu0 0.0
  %439 = vmatpush1.xpose.msra.mxu0 0.0
  %440 = vmatprep.subr.mxu0 0.0
  %441 = vmatpush1.xpose.msra.mxu0 0.0
  %442 = vmatprep.subr.mxu0 0.0
  %443 = vmatpush1.xpose.msra.mxu0 0.0
  %444 = vmatprep.subr.mxu0 0.0
  %445 = vmatpush1.xpose.msra.mxu0 0.0
  %446 = vmatprep.subr.mxu0 0.0
  %447 = vmatpush1.xpose.msra.mxu0 0.0
  %448 = vmatprep.subr.mxu0 0.0
  %449 = vmatpush1.xpose.msra.mxu0 0.0
  %450 = vmatprep.subr.mxu0 0.0
  %451 = vmatpush1.xpose.msra.mxu0 0.0
  %452 = vmatprep.subr.mxu0 0.0
  %453 = vmatpush1.xpose.msra.mxu0 0.0
  %454 = vmatprep.subr.mxu0 0.0
  %455 = vmatpush1.xpose.msra.mxu0 0.0
  %456 = vmatprep.subr.mxu0 0.0
  %457 = vmatpush1.xpose.msra.mxu0 0.0
  %458 = vmatprep.subr.mxu0 0.0
  %459 = vmatpush1.xpose.msra.mxu0 0.0
  %460 = vmatprep.subr.mxu0 0.0
  %461 = vmatpush1.xpose.msra.mxu0 0.0
  %462 = vmatprep.subr.mxu0 0.0
  %463 = vmatpush1.xpose.msra.mxu0 0.0
  %464 = vmatprep.subr.mxu0 0.0
  %465 = vmatpush1.xpose.msra.mxu0 0.0
  %466 = vmatprep.subr.mxu0 0.0
  %467 = vmatpush1.xpose.msra.mxu0 0.0
  %468 = vmatprep.subr.mxu0 0.0
  %469 = vmatpush1.xpose.msra.mxu0 0.0
  %470 = vmatprep.subr.mxu0 0.0
  %471 = vmatpush1.xpose.msra.mxu0 0.0
  %472 = vmatprep.subr.mxu0 0.0
  %473 = vmatpush1.xpose.msra.mxu0 0.0
  %474 = vmatprep.mubr.f32.mxu0 0.0
  %475 = vmatmul.mubr.f32.gmra.mrb[0].mxu0 %v405
  %v476 = vpop.f32.mrb[0].mxu0
  %v477 = vadd.f32 %v401, %v476
  %v478 = vpop.f32.mrb[0].mxu0
  %479 = vdwg.mxu0
  %v480 = vmul.f32 %v328, %v90
  %v482 = vsel %vm330, %v480, 0
  %484 = vmatprep.subr.mxu0 0.0
  %485 = vmatpush1.msra.mxu0 %v93
  %486 = vmatprep.subr.mxu0 0.0
  %487 = vmatpush1.msra.mxu0 %v94
  %488 = vmatprep.subr.mxu0 0.0
  %489 = vmatpush1.msra.mxu0 0.0
  %490 = vmatprep.subr.mxu0 0.0
  %491 = vmatpush1.msra.mxu0 0.0
  %492 = vmatprep.subr.mxu0 0.0
  %493 = vmatpush1.msra.mxu0 0.0
  %494 = vmatprep.subr.mxu0 0.0
  %495 = vmatpush1.msra.mxu0 0.0
  %496 = vmatprep.subr.mxu0 0.0
  %497 = vmatpush1.msra.mxu0 0.0
  %498 = vmatprep.subr.mxu0 0.0
  %499 = vmatpush1.msra.mxu0 0.0
  %500 = vmatprep.subr.mxu0 0.0
  %501 = vmatpush1.msra.mxu0 0.0
  %502 = vmatprep.subr.mxu0 0.0
  %503 = vmatpush1.msra.mxu0 0.0
  %504 = vmatprep.subr.mxu0 0.0
  %505 = vmatpush1.msra.mxu0 0.0
  %506 = vmatprep.subr.mxu0 0.0
  %507 = vmatpush1.msra.mxu0 0.0
  %508 = vmatprep.subr.mxu0 0.0
  %509 = vmatpush1.msra.mxu0 0.0
  %510 = vmatprep.subr.mxu0 0.0
  %511 = vmatpush1.msra.mxu0 0.0
  %512 = vmatprep.subr.mxu0 0.0
  %513 = vmatpush1.msra.mxu0 0.0
  %514 = vmatprep.subr.mxu0 0.0
  %515 = vmatpush1.msra.mxu0 0.0
  %516 = vmatprep.subr.mxu0 0.0
  %517 = vmatpush1.msra.mxu0 0.0
  %518 = vmatprep.subr.mxu0 0.0
  %519 = vmatpush1.msra.mxu0 0.0
  %520 = vmatprep.subr.mxu0 0.0
  %521 = vmatpush1.msra.mxu0 0.0
  %522 = vmatprep.subr.mxu0 0.0
  %523 = vmatpush1.msra.mxu0 0.0
  %524 = vmatprep.subr.mxu0 0.0
  %525 = vmatpush1.msra.mxu0 0.0
  %526 = vmatprep.subr.mxu0 0.0
  %527 = vmatpush1.msra.mxu0 0.0
  %528 = vmatprep.subr.mxu0 0.0
  %529 = vmatpush1.msra.mxu0 0.0
  %530 = vmatprep.subr.mxu0 0.0
  %531 = vmatpush1.msra.mxu0 0.0
  %532 = vmatprep.subr.mxu0 0.0
  %533 = vmatpush1.msra.mxu0 0.0
  %534 = vmatprep.subr.mxu0 0.0
  %535 = vmatpush1.msra.mxu0 0.0
  %536 = vmatprep.subr.mxu0 0.0
  %537 = vmatpush1.msra.mxu0 0.0
  %538 = vmatprep.subr.mxu0 0.0
  %539 = vmatpush1.msra.mxu0 0.0
  %540 = vmatprep.subr.mxu0 0.0
  %541 = vmatpush1.msra.mxu0 0.0
  %542 = vmatprep.subr.mxu0 0.0
  %543 = vmatpush1.msra.mxu0 0.0
  %544 = vmatprep.subr.mxu0 0.0
  %545 = vmatpush1.msra.mxu0 0.0
  %546 = vmatprep.subr.mxu0 0.0
  %547 = vmatpush1.msra.mxu0 0.0
  %548 = vmatprep.mubr.f32.mxu0 0.0
  %549 = vmatmul.mubr.f32.gmra.mrb[0].mxu0 %v482
  %v550 = vpop.f32.mrb[0].mxu0
  %v551 = vadd.f32 0.0, %v550
  %v552 = vpop.f32.mrb[0].mxu0
  %553 = vdwg.mxu0
  %v554 = vadd.f32 %v477, %v551
  %vm555 = vcmask 60416
  %v556 = vsel %vm555, %v554, -inf
  %557 = vmax.xlane.f32.xlu0 %v556
  %v558 = vpop.xlane.xlu0 %557
  %v559 = vsub.f32 %v554, %v558
  %v560 = vmul.f32 %v559, 1.442695
  %v561 = vpow.pop %v560
  %v562 = vsel %vm555, %v561, 0.0
  %563 = vadd.xlane.f32.xlu0 %v562
  %v564 = vpop.xlane.xlu0 %563
  %v565 = vrcp.pop %v564
  %v566 = vmul.f32 %v561, %v565
  %vm567 = vcmask 64512
  %v569 = vsel %vm567, %v566, 0
  %571 = vmatprep.subr.mxu0 0.0
  %572 = vmatpush1.msra.mxu0 %v312
  %573 = vmatprep.subr.mxu0 0.0
  %574 = vmatpush1.msra.mxu0 0.0
  %575 = vmatprep.subr.mxu0 0.0
  %576 = vmatpush1.msra.mxu0 0.0
  %577 = vmatprep.subr.mxu0 0.0
  %578 = vmatpush1.msra.mxu0 0.0
  %579 = vmatprep.subr.mxu0 0.0
  %580 = vmatpush1.msra.mxu0 0.0
  %581 = vmatprep.subr.mxu0 0.0
  %582 = vmatpush1.msra.mxu0 0.0
  %583 = vmatprep.subr.mxu0 0.0
  %584 = vmatpush1.msra.mxu0 0.0
  %585 = vmatprep.subr.mxu0 0.0
  %586 = vmatpush1.msra.mxu0 0.0
  %587 = vmatprep.subr.mxu0 0.0
  %588 = vmatpush1.msra.mxu0 0.0
  %589 = vmatprep.subr.mxu0 0.0
  %590 = vmatpush1.msra.mxu0 0.0
  %591 = vmatprep.subr.mxu0 0.0
  %592 = vmatpush1.msra.mxu0 0.0
  %593 = vmatprep.subr.mxu0 0.0
  %594 = vmatpush1.msra.mxu0 0.0
  %595 = vmatprep.subr.mxu0 0.0
  %596 = vmatpush1.msra.mxu0 0.0
  %597 = vmatprep.subr.mxu0 0.0
  %598 = vmatpush1.msra.mxu0 0.0
  %599 = vmatprep.subr.mxu0 0.0
  %600 = vmatpush1.msra.mxu0 0.0
  %601 = vmatprep.subr.mxu0 0.0
  %602 = vmatpush1.msra.mxu0 0.0
  %603 = vmatprep.subr.mxu0 0.0
  %604 = vmatpush1.msra.mxu0 0.0
  %605 = vmatprep.subr.mxu0 0.0
  %606 = vmatpush1.msra.mxu0 0.0
  %607 = vmatprep.subr.mxu0 0.0
  %608 = vmatpush1.msra.mxu0 0.0
  %609 = vmatprep.subr.mxu0 0.0
  %610 = vmatpush1.msra.mxu0 0.0
  %611 = vmatprep.subr.mxu0 0.0
  %612 = vmatpush1.msra.mxu0 0.0
  %613 = vmatprep.subr.mxu0 0.0
  %614 = vmatpush1.msra.mxu0 0.0
  %615 = vmatprep.subr.mxu0 0.0
  %616 = vmatpush1.msra.mxu0 0.0
  %617 = vmatprep.subr.mxu0 0.0
  %618 = vmatpush1.msra.mxu0 0.0
  %619 = vmatprep.subr.mxu0 0.0
  %620 = vmatpush1.msra.mxu0 0.0
  %621 = vmatprep.subr.mxu0 0.0
  %622 = vmatpush1.msra.mxu0 0.0
  %623 = vmatprep.subr.mxu0 0.0
  %624 = vmatpush1.msra.mxu0 0.0
  %625 = vmatprep.subr.mxu0 0.0
  %626 = vmatpush1.msra.mxu0 0.0
  %627 = vmatprep.subr.mxu0 0.0
  %628 = vmatpush1.msra.mxu0 0.0
  %629 = vmatprep.subr.mxu0 0.0
  %630 = vmatpush1.msra.mxu0 0.0
  %631 = vmatprep.subr.mxu0 0.0
  %632 = vmatpush1.msra.mxu0 0.0
  %633 = vmatprep.subr.mxu0 0.0
  %634 = vmatpush1.msra.mxu0 0.0
  %635 = vmatprep.mubr.f32.mxu0 0.0
  %636 = vmatmul.mubr.f32.gmra.mrb[0].mxu0 %v569
  %v637 = vpop.f32.mrb[0].mxu0
  %v638 = vadd.f32 0.0, %v637
  %v639 = vpop.f32.mrb[0].mxu0
  %640 = vdwg.mxu0
  %v641 = vld [vmem:[%s8] sm:$0xff]
  %v642 = vld [vmem:[%s8 + $0x8] sm:$0xff]
  %644 = vrot.lane.b32.xlu0 %v89, 16
  %v645 = vpop.permute.xlu0 %644
  %v647 = vmul.f32 %v328, %v645
  %649 = vrot.lane.b32.xlu0 %v647, 112
  %v650 = vpop.permute.xlu0 %649
  %v651 = vsel %vm330, %v650, 0
  %653 = vmatprep.subr.mxu0 0.0
  %654 = vmatpush1.msra.mxu0 %v91
  %655 = vmatprep.subr.mxu0 0.0
  %656 = vmatpush1.msra.mxu0 %v92
  %657 = vmatprep.subr.mxu0 0.0
  %658 = vmatpush1.msra.mxu0 0.0
  %659 = vmatprep.subr.mxu0 0.0
  %660 = vmatpush1.msra.mxu0 0.0
  %661 = vmatprep.subr.mxu0 0.0
  %662 = vmatpush1.msra.mxu0 0.0
  %663 = vmatprep.subr.mxu0 0.0
  %664 = vmatpush1.msra.mxu0 0.0
  %665 = vmatprep.subr.mxu0 0.0
  %666 = vmatpush1.msra.mxu0 0.0
  %667 = vmatprep.subr.mxu0 0.0
  %668 = vmatpush1.msra.mxu0 0.0
  %669 = vmatprep.subr.mxu0 0.0
  %670 = vmatpush1.msra.mxu0 0.0
  %671 = vmatprep.subr.mxu0 0.0
  %672 = vmatpush1.msra.mxu0 0.0
  %673 = vmatprep.subr.mxu0 0.0
  %674 = vmatpush1.msra.mxu0 0.0
  %675 = vmatprep.subr.mxu0 0.0
  %676 = vmatpush1.msra.mxu0 0.0
  %677 = vmatprep.subr.mxu0 0.0
  %678 = vmatpush1.msra.mxu0 0.0
  %679 = vmatprep.subr.mxu0 0.0
  %680 = vmatpush1.msra.mxu0 0.0
  %681 = vmatprep.subr.mxu0 0.0
  %682 = vmatpush1.msra.mxu0 0.0
  %683 = vmatprep.subr.mxu0 0.0
  %684 = vmatpush1.msra.mxu0 0.0
  %685 = vmatprep.subr.mxu0 0.0
  %686 = vmatpush1.msra.mxu0 0.0
  %687 = vmatprep.subr.mxu0 0.0
  %688 = vmatpush1.msra.mxu0 0.0
  %689 = vmatprep.subr.mxu0 0.0
  %690 = vmatpush1.msra.mxu0 0.0
  %691 = vmatprep.subr.mxu0 0.0
  %692 = vmatpush1.msra.mxu0 0.0
  %693 = vmatprep.subr.mxu0 0.0
  %694 = vmatpush1.msra.mxu0 0.0
  %695 = vmatprep.subr.mxu0 0.0
  %696 = vmatpush1.msra.mxu0 0.0
  %697 = vmatprep.subr.mxu0 0.0
  %698 = vmatpush1.msra.mxu0 0.0
  %699 = vmatprep.subr.mxu0 0.0
  %700 = vmatpush1.msra.mxu0 0.0
  %701 = vmatprep.subr.mxu0 0.0
  %702 = vmatpush1.msra.mxu0 0.0
  %703 = vmatprep.subr.mxu0 0.0
  %704 = vmatpush1.msra.mxu0 0.0
  %705 = vmatprep.subr.mxu0 0.0
  %706 = vmatpush1.msra.mxu0 0.0
  %707 = vmatprep.subr.mxu0 0.0
  %708 = vmatpush1.msra.mxu0 0.0
  %709 = vmatprep.subr.mxu0 0.0
  %710 = vmatpush1.msra.mxu0 0.0
  %711 = vmatprep.subr.mxu0 0.0
  %712 = vmatpush1.msra.mxu0 0.0
  %713 = vmatprep.subr.mxu0 0.0
  %714 = vmatpush1.msra.mxu0 0.0
  %715 = vmatprep.subr.mxu0 0.0
  %716 = vmatpush1.msra.mxu0 0.0
  %717 = vmatprep.mubr.f32.mxu0 0.0
  %718 = vmatmul.mubr.f32.gmra.mrb[0].mxu0 %v651
  %v719 = vpop.f32.mrb[0].mxu0
  %v720 = vadd.f32 0.0, %v719
  %v721 = vpop.f32.mrb[0].mxu0
  %722 = vdwg.mxu0
  %723 = vrot.lane.b32.xlu0 %v321, 112
  %v724 = vpop.permute.xlu0 %723
  %725 = vrot.lane.b32.xlu0 %v239, 112
  %v726 = vpop.permute.xlu0 %725
  %v727 = vsel %vm330, %v724, 0
  %v729 = vsel %vm330, %v726, 0
  %731 = vmatprep.subr.mxu0 0.0
  %732 = vmatpush1.xpose.msra.mxu0 %v729
  %733 = vmatprep.subr.mxu0 0.0
  %734 = vmatpush1.xpose.msra.mxu0 0.0
  %735 = vmatprep.subr.mxu0 0.0
  %736 = vmatpush1.xpose.msra.mxu0 0.0
  %737 = vmatprep.subr.mxu0 0.0
  %738 = vmatpush1.xpose.msra.mxu0 0.0
  %739 = vmatprep.subr.mxu0 0.0
  %740 = vmatpush1.xpose.msra.mxu0 0.0
  %741 = vmatprep.subr.mxu0 0.0
  %742 = vmatpush1.xpose.msra.mxu0 0.0
  %743 = vmatprep.subr.mxu0 0.0
  %744 = vmatpush1.xpose.msra.mxu0 0.0
  %745 = vmatprep.subr.mxu0 0.0
  %746 = vmatpush1.xpose.msra.mxu0 0.0
  %747 = vmatprep.subr.mxu0 0.0
  %748 = vmatpush1.xpose.msra.mxu0 0.0
  %749 = vmatprep.subr.mxu0 0.0
  %750 = vmatpush1.xpose.msra.mxu0 0.0
  %751 = vmatprep.subr.mxu0 0.0
  %752 = vmatpush1.xpose.msra.mxu0 0.0
  %753 = vmatprep.subr.mxu0 0.0
  %754 = vmatpush1.xpose.msra.mxu0 0.0
  %755 = vmatprep.subr.mxu0 0.0
  %756 = vmatpush1.xpose.msra.mxu0 0.0
  %757 = vmatprep.subr.mxu0 0.0
  %758 = vmatpush1.xpose.msra.mxu0 0.0
  %759 = vmatprep.subr.mxu0 0.0
  %760 = vmatpush1.xpose.msra.mxu0 0.0
  %761 = vmatprep.subr.mxu0 0.0
  %762 = vmatpush1.xpose.msra.mxu0 0.0
  %763 = vmatprep.subr.mxu0 0.0
  %764 = vmatpush1.xpose.msra.mxu0 0.0
  %765 = vmatprep.subr.mxu0 0.0
  %766 = vmatpush1.xpose.msra.mxu0 0.0
  %767 = vmatprep.subr.mxu0 0.0
  %768 = vmatpush1.xpose.msra.mxu0 0.0
  %769 = vmatprep.subr.mxu0 0.0
  %770 = vmatpush1.xpose.msra.mxu0 0.0
  %771 = vmatprep.subr.mxu0 0.0
  %772 = vmatpush1.xpose.msra.mxu0 0.0
  %773 = vmatprep.subr.mxu0 0.0
  %774 = vmatpush1.xpose.msra.mxu0 0.0
  %775 = vmatprep.subr.mxu0 0.0
  %776 = vmatpush1.xpose.msra.mxu0 0.0
  %777 = vmatprep.subr.mxu0 0.0
  %778 = vmatpush1.xpose.msra.mxu0 0.0
  %779 = vmatprep.subr.mxu0 0.0
  %780 = vmatpush1.xpose.msra.mxu0 0.0
  %781 = vmatprep.subr.mxu0 0.0
  %782 = vmatpush1.xpose.msra.mxu0 0.0
  %783 = vmatprep.subr.mxu0 0.0
  %784 = vmatpush1.xpose.msra.mxu0 0.0
  %785 = vmatprep.subr.mxu0 0.0
  %786 = vmatpush1.xpose.msra.mxu0 0.0
  %787 = vmatprep.subr.mxu0 0.0
  %788 = vmatpush1.xpose.msra.mxu0 0.0
  %789 = vmatprep.subr.mxu0 0.0
  %790 = vmatpush1.xpose.msra.mxu0 0.0
  %791 = vmatprep.subr.mxu0 0.0
  %792 = vmatpush1.xpose.msra.mxu0 0.0
  %793 = vmatprep.subr.mxu0 0.0
  %794 = vmatpush1.xpose.msra.mxu0 0.0
  %795 = vmatprep.mubr.f32.mxu0 0.0
  %796 = vmatmul.mubr.f32.gmra.mrb[0].mxu0 %v727
  %v797 = vpop.f32.mrb[0].mxu0
  %v798 = vadd.f32 %v720, %v797
  %v799 = vpop.f32.mrb[0].mxu0
  %800 = vdwg.mxu0
  %802 = vrot.lane.b32.xlu0 %v90, 16
  %v803 = vpop.permute.xlu0 %802
  %v805 = vmul.f32 %v328, %v803
  %807 = vrot.lane.b32.xlu0 %v805, 112
  %v808 = vpop.permute.xlu0 %807
  %v809 = vsel %vm330, %v808, 0
  %811 = vmatprep.subr.mxu0 0.0
  %812 = vmatpush1.msra.mxu0 %v93
  %813 = vmatprep.subr.mxu0 0.0
  %814 = vmatpush1.msra.mxu0 %v94
  %815 = vmatprep.subr.mxu0 0.0
  %816 = vmatpush1.msra.mxu0 0.0
  %817 = vmatprep.subr.mxu0 0.0
  %818 = vmatpush1.msra.mxu0 0.0
  %819 = vmatprep.subr.mxu0 0.0
  %820 = vmatpush1.msra.mxu0 0.0
  %821 = vmatprep.subr.mxu0 0.0
  %822 = vmatpush1.msra.mxu0 0.0
  %823 = vmatprep.subr.mxu0 0.0
  %824 = vmatpush1.msra.mxu0 0.0
  %825 = vmatprep.subr.mxu0 0.0
  %826 = vmatpush1.msra.mxu0 0.0
  %827 = vmatprep.subr.mxu0 0.0
  %828 = vmatpush1.msra.mxu0 0.0
  %829 = vmatprep.subr.mxu0 0.0
  %830 = vmatpush1.msra.mxu0 0.0
  %831 = vmatprep.subr.mxu0 0.0
  %832 = vmatpush1.msra.mxu0 0.0
  %833 = vmatprep.subr.mxu0 0.0
  %834 = vmatpush1.msra.mxu0 0.0
  %835 = vmatprep.subr.mxu0 0.0
  %836 = vmatpush1.msra.mxu0 0.0
  %837 = vmatprep.subr.mxu0 0.0
  %838 = vmatpush1.msra.mxu0 0.0
  %839 = vmatprep.subr.mxu0 0.0
  %840 = vmatpush1.msra.mxu0 0.0
  %841 = vmatprep.subr.mxu0 0.0
  %842 = vmatpush1.msra.mxu0 0.0
  %843 = vmatprep.subr.mxu0 0.0
  %844 = vmatpush1.msra.mxu0 0.0
  %845 = vmatprep.subr.mxu0 0.0
  %846 = vmatpush1.msra.mxu0 0.0
  %847 = vmatprep.subr.mxu0 0.0
  %848 = vmatpush1.msra.mxu0 0.0
  %849 = vmatprep.subr.mxu0 0.0
  %850 = vmatpush1.msra.mxu0 0.0
  %851 = vmatprep.subr.mxu0 0.0
  %852 = vmatpush1.msra.mxu0 0.0
  %853 = vmatprep.subr.mxu0 0.0
  %854 = vmatpush1.msra.mxu0 0.0
  %855 = vmatprep.subr.mxu0 0.0
  %856 = vmatpush1.msra.mxu0 0.0
  %857 = vmatprep.subr.mxu0 0.0
  %858 = vmatpush1.msra.mxu0 0.0
  %859 = vmatprep.subr.mxu0 0.0
  %860 = vmatpush1.msra.mxu0 0.0
  %861 = vmatprep.subr.mxu0 0.0
  %862 = vmatpush1.msra.mxu0 0.0
  %863 = vmatprep.subr.mxu0 0.0
  %864 = vmatpush1.msra.mxu0 0.0
  %865 = vmatprep.subr.mxu0 0.0
  %866 = vmatpush1.msra.mxu0 0.0
  %867 = vmatprep.subr.mxu0 0.0
  %868 = vmatpush1.msra.mxu0 0.0
  %869 = vmatprep.subr.mxu0 0.0
  %870 = vmatpush1.msra.mxu0 0.0
  %871 = vmatprep.subr.mxu0 0.0
  %872 = vmatpush1.msra.mxu0 0.0
  %873 = vmatprep.subr.mxu0 0.0
  %874 = vmatpush1.msra.mxu0 0.0
  %875 = vmatprep.mubr.f32.mxu0 0.0
  %876 = vmatmul.mubr.f32.gmra.mrb[0].mxu0 %v809
  %v877 = vpop.f32.mrb[0].mxu0
  %v878 = vadd.f32 0.0, %v877
  %v879 = vpop.f32.mrb[0].mxu0
  %880 = vdwg.mxu0
  %v881 = vadd.f32 %v798, %v878
  %v882 = vsel %vm555, %v881, -inf
  %883 = vmax.xlane.f32.xlu0 %v882
  %v884 = vpop.xlane.xlu0 %883
  %v885 = vsub.f32 %v881, %v884
  %v886 = vmul.f32 %v885, 1.442695
  %v887 = vpow.pop %v886
  %v888 = vsel %vm555, %v887, 0.0
  %889 = vadd.xlane.f32.xlu0 %v888
  %v890 = vpop.xlane.xlu0 %889
  %v891 = vrcp.pop %v890
  %v892 = vmul.f32 %v887, %v891
  %894 = vrot.lane.b32.xlu0 %v312, 112
  %v895 = vpop.permute.xlu0 %894
  %v898 = vsel %vm567, %v892, 0
  %900 = vmatprep.subr.mxu0 0.0
  %901 = vmatpush1.msra.mxu0 %v895
  %902 = vmatprep.subr.mxu0 0.0
  %903 = vmatpush1.msra.mxu0 0.0
  %904 = vmatprep.subr.mxu0 0.0
  %905 = vmatpush1.msra.mxu0 0.0
  %906 = vmatprep.subr.mxu0 0.0
  %907 = vmatpush1.msra.mxu0 0.0
  %908 = vmatprep.subr.mxu0 0.0
  %909 = vmatpush1.msra.mxu0 0.0
  %910 = vmatprep.subr.mxu0 0.0
  %911 = vmatpush1.msra.mxu0 0.0
  %912 = vmatprep.subr.mxu0 0.0
  %913 = vmatpush1.msra.mxu0 0.0
  %914 = vmatprep.subr.mxu0 0.0
  %915 = vmatpush1.msra.mxu0 0.0
  %916 = vmatprep.subr.mxu0 0.0
  %917 = vmatpush1.msra.mxu0 0.0
  %918 = vmatprep.subr.mxu0 0.0
  %919 = vmatpush1.msra.mxu0 0.0
  %920 = vmatprep.subr.mxu0 0.0
  %921 = vmatpush1.msra.mxu0 0.0
  %922 = vmatprep.subr.mxu0 0.0
  %923 = vmatpush1.msra.mxu0 0.0
  %924 = vmatprep.subr.mxu0 0.0
  %925 = vmatpush1.msra.mxu0 0.0
  %926 = vmatprep.subr.mxu0 0.0
  %927 = vmatpush1.msra.mxu0 0.0
  %928 = vmatprep.subr.mxu0 0.0
  %929 = vmatpush1.msra.mxu0 0.0
  %930 = vmatprep.subr.mxu0 0.0
  %931 = vmatpush1.msra.mxu0 0.0
  %932 = vmatprep.subr.mxu0 0.0
  %933 = vmatpush1.msra.mxu0 0.0
  %934 = vmatprep.subr.mxu0 0.0
  %935 = vmatpush1.msra.mxu0 0.0
  %936 = vmatprep.subr.mxu0 0.0
  %937 = vmatpush1.msra.mxu0 0.0
  %938 = vmatprep.subr.mxu0 0.0
  %939 = vmatpush1.msra.mxu0 0.0
  %940 = vmatprep.subr.mxu0 0.0
  %941 = vmatpush1.msra.mxu0 0.0
  %942 = vmatprep.subr.mxu0 0.0
  %943 = vmatpush1.msra.mxu0 0.0
  %944 = vmatprep.subr.mxu0 0.0
  %945 = vmatpush1.msra.mxu0 0.0
  %946 = vmatprep.subr.mxu0 0.0
  %947 = vmatpush1.msra.mxu0 0.0
  %948 = vmatprep.subr.mxu0 0.0
  %949 = vmatpush1.msra.mxu0 0.0
  %950 = vmatprep.subr.mxu0 0.0
  %951 = vmatpush1.msra.mxu0 0.0
  %952 = vmatprep.subr.mxu0 0.0
  %953 = vmatpush1.msra.mxu0 0.0
  %954 = vmatprep.subr.mxu0 0.0
  %955 = vmatpush1.msra.mxu0 0.0
  %956 = vmatprep.subr.mxu0 0.0
  %957 = vmatpush1.msra.mxu0 0.0
  %958 = vmatprep.subr.mxu0 0.0
  %959 = vmatpush1.msra.mxu0 0.0
  %960 = vmatprep.subr.mxu0 0.0
  %961 = vmatpush1.msra.mxu0 0.0
  %962 = vmatprep.subr.mxu0 0.0
  %963 = vmatpush1.msra.mxu0 0.0
  %964 = vmatprep.mubr.f32.mxu0 0.0
  %965 = vmatmul.mubr.f32.gmra.mrb[0].mxu0 %v898
  %v966 = vpop.f32.mrb[0].mxu0
  %v967 = vadd.f32 0.0, %v966
  %v968 = vpop.f32.mrb[0].mxu0
  %969 = vdwg.mxu0
  %s970 = scalar_lea.vmem %s8, 16
  %v971 = vld [vmem:[%s970] sm:$0xff]
  %v972 = vld [vmem:[%s970 + $0x8] sm:$0xff]
  %v974 = vsel %vm330, %v967, 0
  %976 = vmatprep.subr.mxu0 0.0
  %977 = vmatpush1.msra.mxu0 %v971
  %978 = vmatprep.subr.mxu0 0.0
  %979 = vmatpush1.msra.mxu0 %v972
  %980 = vmatprep.subr.mxu0 0.0
  %981 = vmatpush1.msra.mxu0 0.0
  %982 = vmatprep.subr.mxu0 0.0
  %983 = vmatpush1.msra.mxu0 0.0
  %984 = vmatprep.subr.mxu0 0.0
  %985 = vmatpush1.msra.mxu0 0.0
  %986 = vmatprep.subr.mxu0 0.0
  %987 = vmatpush1.msra.mxu0 0.0
  %988 = vmatprep.subr.mxu0 0.0
  %989 = vmatpush1.msra.mxu0 0.0
  %990 = vmatprep.subr.mxu0 0.0
  %991 = vmatpush1.msra.mxu0 0.0
  %992 = vmatprep.subr.mxu0 0.0
  %993 = vmatpush1.msra.mxu0 0.0
  %994 = vmatprep.subr.mxu0 0.0
  %995 = vmatpush1.msra.mxu0 0.0
  %996 = vmatprep.subr.mxu0 0.0
  %997 = vmatpush1.msra.mxu0 0.0
  %998 = vmatprep.subr.mxu0 0.0
  %999 = vmatpush1.msra.mxu0 0.0
  %1000 = vmatprep.subr.mxu0 0.0
  %1001 = vmatpush1.msra.mxu0 0.0
  %1002 = vmatprep.subr.mxu0 0.0
  %1003 = vmatpush1.msra.mxu0 0.0
  %1004 = vmatprep.subr.mxu0 0.0
  %1005 = vmatpush1.msra.mxu0 0.0
  %1006 = vmatprep.subr.mxu0 0.0
  %1007 = vmatpush1.msra.mxu0 0.0
  %1008 = vmatprep.subr.mxu0 0.0
  %1009 = vmatpush1.msra.mxu0 0.0
  %1010 = vmatprep.subr.mxu0 0.0
  %1011 = vmatpush1.msra.mxu0 0.0
  %1012 = vmatprep.subr.mxu0 0.0
  %1013 = vmatpush1.msra.mxu0 0.0
  %1014 = vmatprep.subr.mxu0 0.0
  %1015 = vmatpush1.msra.mxu0 0.0
  %1016 = vmatprep.subr.mxu0 0.0
  %1017 = vmatpush1.msra.mxu0 0.0
  %1018 = vmatprep.subr.mxu0 0.0
  %1019 = vmatpush1.msra.mxu0 0.0
  %1020 = vmatprep.subr.mxu0 0.0
  %1021 = vmatpush1.msra.mxu0 0.0
  %1022 = vmatprep.subr.mxu0 0.0
  %1023 = vmatpush1.msra.mxu0 0.0
  %1024 = vmatprep.subr.mxu0 0.0
  %1025 = vmatpush1.msra.mxu0 0.0
  %1026 = vmatprep.subr.mxu0 0.0
  %1027 = vmatpush1.msra.mxu0 0.0
  %1028 = vmatprep.subr.mxu0 0.0
  %1029 = vmatpush1.msra.mxu0 0.0
  %1030 = vmatprep.subr.mxu0 0.0
  %1031 = vmatpush1.msra.mxu0 0.0
  %1032 = vmatprep.subr.mxu0 0.0
  %1033 = vmatpush1.msra.mxu0 0.0
  %1034 = vmatprep.subr.mxu0 0.0
  %1035 = vmatpush1.msra.mxu0 0.0
  %1036 = vmatprep.subr.mxu0 0.0
  %1037 = vmatpush1.msra.mxu0 0.0
  %1038 = vmatprep.subr.mxu0 0.0
  %1039 = vmatpush1.msra.mxu0 0.0
  %1040 = vmatprep.mubr.f32.mxu0 0.0
  %1041 = vmatmul.mubr.f32.gmra.mrb[0].mxu0 %v974
  %v1042 = vpop.f32.mrb[0].mxu0
  %v1043 = vadd.f32 0.0, %v1042
  %v1044 = vpop.f32.mrb[0].mxu0
  %1045 = vdwg.mxu0
  %v1047 = vsel %vm330, %v638, 0
  %1049 = vmatprep.subr.mxu0 0.0
  %1050 = vmatpush1.msra.mxu0 %v641
  %1051 = vmatprep.subr.mxu0 0.0
  %1052 = vmatpush1.msra.mxu0 %v642
  %1053 = vmatprep.subr.mxu0 0.0
  %1054 = vmatpush1.msra.mxu0 0.0
  %1055 = vmatprep.subr.mxu0 0.0
  %1056 = vmatpush1.msra.mxu0 0.0
  %1057 = vmatprep.subr.mxu0 0.0
  %1058 = vmatpush1.msra.mxu0 0.0
  %1059 = vmatprep.subr.mxu0 0.0
  %1060 = vmatpush1.msra.mxu0 0.0
  %1061 = vmatprep.subr.mxu0 0.0
  %1062 = vmatpush1.msra.mxu0 0.0
  %1063 = vmatprep.subr.mxu0 0.0
  %1064 = vmatpush1.msra.mxu0 0.0
  %1065 = vmatprep.subr.mxu0 0.0
  %1066 = vmatpush1.msra.mxu0 0.0
  %1067 = vmatprep.subr.mxu0 0.0
  %1068 = vmatpush1.msra.mxu0 0.0
  %1069 = vmatprep.subr.mxu0 0.0
  %1070 = vmatpush1.msra.mxu0 0.0
  %1071 = vmatprep.subr.mxu0 0.0
  %1072 = vmatpush1.msra.mxu0 0.0
  %1073 = vmatprep.subr.mxu0 0.0
  %1074 = vmatpush1.msra.mxu0 0.0
  %1075 = vmatprep.subr.mxu0 0.0
  %1076 = vmatpush1.msra.mxu0 0.0
  %1077 = vmatprep.subr.mxu0 0.0
  %1078 = vmatpush1.msra.mxu0 0.0
  %1079 = vmatprep.subr.mxu0 0.0
  %1080 = vmatpush1.msra.mxu0 0.0
  %1081 = vmatprep.subr.mxu0 0.0
  %1082 = vmatpush1.msra.mxu0 0.0
  %1083 = vmatprep.subr.mxu0 0.0
  %1084 = vmatpush1.msra.mxu0 0.0
  %1085 = vmatprep.subr.mxu0 0.0
  %1086 = vmatpush1.msra.mxu0 0.0
  %1087 = vmatprep.subr.mxu0 0.0
  %1088 = vmatpush1.msra.mxu0 0.0
  %1089 = vmatprep.subr.mxu0 0.0
  %1090 = vmatpush1.msra.mxu0 0.0
  %1091 = vmatprep.subr.mxu0 0.0
  %1092 = vmatpush1.msra.mxu0 0.0
  %1093 = vmatprep.subr.mxu0 0.0
  %1094 = vmatpush1.msra.mxu0 0.0
  %1095 = vmatprep.subr.mxu0 0.0
  %1096 = vmatpush1.msra.mxu0 0.0
  %1097 = vmatprep.subr.mxu0 0.0
  %1098 = vmatpush1.msra.mxu0 0.0
  %1099 = vmatprep.subr.mxu0 0.0
  %1100 = vmatpush1.msra.mxu0 0.0
  %1101 = vmatprep.subr.mxu0 0.0
  %1102 = vmatpush1.msra.mxu0 0.0
  %1103 = vmatprep.subr.mxu0 0.0
  %1104 = vmatpush1.msra.mxu0 0.0
  %1105 = vmatprep.subr.mxu0 0.0
  %1106 = vmatpush1.msra.mxu0 0.0
  %1107 = vmatprep.subr.mxu0 0.0
  %1108 = vmatpush1.msra.mxu0 0.0
  %1109 = vmatprep.subr.mxu0 0.0
  %1110 = vmatpush1.msra.mxu0 0.0
  %1111 = vmatprep.subr.mxu0 0.0
  %1112 = vmatpush1.msra.mxu0 0.0
  %1113 = vmatprep.mubr.f32.mxu0 0.0
  %1114 = vmatmul.mubr.f32.gmra.mrb[0].mxu0 %v1047
  %v1115 = vpop.f32.mrb[0].mxu0
  %v1116 = vadd.f32 %v1043, %v1115
  %v1117 = vpop.f32.mrb[0].mxu0
  %1118 = vdwg.mxu0
  %v1120 = vlaneseq
  %v1121 = vshrl.u32 %v1120, 7
  %v1122 = vsub.s32 0, %v1121
  %v1123 = vrot.slane %v88, %v1122
  %v1125 = vadd.f32 %v1116, %v1123
  %v1126 = vadd.f32 %v1125, %v71
  %v1127 = vld [vmem:[%s14] sm:$0x1]
  %v1128 = vld [vmem:[%s15] sm:$0x1]
  %vm1129 = vcmask 257024
  %v1130 = vsel %vm1129, %v1126, 0.0
  %1131 = vadd.xlane.f32.xlu0 %v1130
  %v1132 = vpop.xlane.xlu0 %1131
  %v1133 = vrcp.pop 32.0
  %v1134 = vmul.f32 %v1132, %v1133
  %v1135 = vsub.f32 %v1126, %v1134
  %v1136 = vmul.f32 %v1135, %v1135
  %v1137 = vsel %vm1129, %v1136, 0.0
  %1138 = vadd.xlane.f32.xlu0 %v1137
  %v1139 = vpop.xlane.xlu0 %1138
  %v1140 = vmul.f32 %v1139, %v1133
  %v1141 = vadd.f32 %v1140, 1e-05
  %v1142 = vrsqrt.pop %v1141
  %v1143 = vmul.f32 %v1135, %v1142
  %v1145 = vlaneseq
  %v1146 = vshrl.u32 %v1145, 7
  %v1147 = vsub.s32 0, %v1146
  %v1148 = vrot.slane %v1127, %v1147
  %v1150 = vmul.f32 %v1143, %v1148
  %v1152 = vlaneseq
  %v1153 = vshrl.u32 %v1152, 7
  %v1154 = vsub.s32 0, %v1153
  %v1155 = vrot.slane %v1128, %v1154
  %v1157 = vadd.f32 %v1150, %v1155
  %v1158 = vld [vmem:[%s16] sm:$0xff]
  %v1159 = vld [vmem:[%s16 + $0x8] sm:$0xff]
  %v1160 = vld [vmem:[%s16 + $0x10] sm:$0xff]
  %v1161 = vld [vmem:[%s16 + $0x18] sm:$0xff]
  %v1162 = vld [vmem:[%s17] sm:$0x1]
  %v1164 = vlaneseq
  %v1165 = vshrl.u32 %v1164, 7
  %v1166 = vsub.s32 0, %v1165
  %v1167 = vrot.slane %v1162, %v1166
  %v1170 = vsel %vm95, %v1157, 0
  %1172 = vmatprep.subr.mxu0 0.0
  %1173 = vmatpush1.msra.mxu0 %v1158
  %1174 = vmatprep.subr.mxu0 0.0
  %1175 = vmatpush1.msra.mxu0 %v1159
  %1176 = vmatprep.subr.mxu0 0.0
  %1177 = vmatpush1.msra.mxu0 %v1160
  %1178 = vmatprep.subr.mxu0 0.0
  %1179 = vmatpush1.msra.mxu0 %v1161
  %1180 = vmatprep.subr.mxu0 0.0
  %1181 = vmatpush1.msra.mxu0 0.0
  %1182 = vmatprep.subr.mxu0 0.0
  %1183 = vmatpush1.msra.mxu0 0.0
  %1184 = vmatprep.subr.mxu0 0.0
  %1185 = vmatpush1.msra.mxu0 0.0
  %1186 = vmatprep.subr.mxu0 0.0
  %1187 = vmatpush1.msra.mxu0 0.0
  %1188 = vmatprep.subr.mxu0 0.0
  %1189 = vmatpush1.msra.mxu0 0.0
  %1190 = vmatprep.subr.mxu0 0.0
  %1191 = vmatpush1.msra.mxu0 0.0
  %1192 = vmatprep.subr.mxu0 0.0
  %1193 = vmatpush1.msra.mxu0 0.0
  %1194 = vmatprep.subr.mxu0 0.0
  %1195 = vmatpush1.msra.mxu0 0.0
  %1196 = vmatprep.subr.mxu0 0.0
  %1197 = vmatpush1.msra.mxu0 0.0
  %1198 = vmatprep.subr.mxu0 0.0
  %1199 = vmatpush1.msra.mxu0 0.0
  %1200 = vmatprep.subr.mxu0 0.0
  %1201 = vmatpush1.msra.mxu0 0.0
  %1202 = vmatprep.subr.mxu0 0.0
  %1203 = vmatpush1.msra.mxu0 0.0
  %1204 = vmatprep.subr.mxu0 0.0
  %1205 = vmatpush1.msra.mxu0 0.0
  %1206 = vmatprep.subr.mxu0 0.0
  %1207 = vmatpush1.msra.mxu0 0.0
  %1208 = vmatprep.subr.mxu0 0.0
  %1209 = vmatpush1.msra.mxu0 0.0
  %1210 = vmatprep.subr.mxu0 0.0
  %1211 = vmatpush1.msra.mxu0 0.0
  %1212 = vmatprep.subr.mxu0 0.0
  %1213 = vmatpush1.msra.mxu0 0.0
  %1214 = vmatprep.subr.mxu0 0.0
  %1215 = vmatpush1.msra.mxu0 0.0
  %1216 = vmatprep.subr.mxu0 0.0
  %1217 = vmatpush1.msra.mxu0 0.0
  %1218 = vmatprep.subr.mxu0 0.0
  %1219 = vmatpush1.msra.mxu0 0.0
  %1220 = vmatprep.subr.mxu0 0.0
  %1221 = vmatpush1.msra.mxu0 0.0
  %1222 = vmatprep.subr.mxu0 0.0
  %1223 = vmatpush1.msra.mxu0 0.0
  %1224 = vmatprep.subr.mxu0 0.0
  %1225 = vmatpush1.msra.mxu0 0.0
  %1226 = vmatprep.subr.mxu0 0.0
  %1227 = vmatpush1.msra.mxu0 0.0
  %1228 = vmatprep.subr.mxu0 0.0
  %1229 = vmatpush1.msra.mxu0 0.0
  %1230 = vmatprep.subr.mxu0 0.0
  %1231 = vmatpush1.msra.mxu0 0.0
  %1232 = vmatprep.subr.mxu0 0.0
  %1233 = vmatpush1.msra.mxu0 0.0
  %1234 = vmatprep.subr.mxu0 0.0
  %1235 = vmatpush1.msra.mxu0 0.0
  %1236 = vmatprep.mubr.f32.mxu0 0.0
  %1237 = vmatmul.mubr.f32.gmra.mrb[0].mxu0 %v1170
  %v1238 = vpop.f32.mrb[0].mxu0
  %v1239 = vadd.f32 %v1167, %v1238
  %v1240 = vpop.f32.mrb[0].mxu0
  %1241 = vdwg.mxu0
  %vm1242 = vcmp.gt.f32.partialorder %v1239, 0.0
  %v1243 = vmin.f32 %v1239, 0.0
  %v1244 = vmul.f32 %v1243, 1.442695
  %v1245 = vpow.pop %v1244
  %v1246 = vsub.f32 %v1245, 1.0
  %v1247 = vsel %vm1242, %v1239, %v1246
  %v1248 = vld [vmem:[%s18] sm:$0xff]
  %v1249 = vld [vmem:[%s18 + $0x8] sm:$0xff]
  %v1250 = vld [vmem:[%s18 + $0x10] sm:$0xff]
  %v1251 = vld [vmem:[%s18 + $0x18] sm:$0xff]
  %v1252 = vld [vmem:[%s18 + $0x20] sm:$0xff]
  %v1253 = vld [vmem:[%s18 + $0x28] sm:$0xff]
  %v1254 = vld [vmem:[%s18 + $0x30] sm:$0xff]
  %v1255 = vld [vmem:[%s18 + $0x38] sm:$0xff]
  %v1256 = vld [vmem:[%s18 + $0x40] sm:$0xff]
  %v1257 = vld [vmem:[%s18 + $0x48] sm:$0xff]
  %v1258 = vld [vmem:[%s18 + $0x50] sm:$0xff]
  %v1259 = vld [vmem:[%s18 + $0x58] sm:$0xff]
  %v1260 = vld [vmem:[%s18 + $0x60] sm:$0xff]
  %v1261 = vld [vmem:[%s18 + $0x68] sm:$0xff]
  %v1262 = vld [vmem:[%s18 + $0x70] sm:$0xff]
  %v1263 = vld [vmem:[%s18 + $0x78] sm:$0xff]
  %v1264 = vld [vmem:[%s19] sm:$0x1]
  %v1266 = vlaneseq
  %v1267 = vshrl.u32 %v1266, 7
  %v1268 = vsub.s32 0, %v1267
  %v1269 = vrot.slane %v1264, %v1268
  %1271 = vmatprep.subr.mxu0 0.0
  %1272 = vmatpush1.msra.mxu0 %v1248
  %1273 = vmatprep.subr.mxu0 0.0
  %1274 = vmatpush1.msra.mxu0 %v1249
  %1275 = vmatprep.subr.mxu0 0.0
  %1276 = vmatpush1.msra.mxu0 %v1250
  %1277 = vmatprep.subr.mxu0 0.0
  %1278 = vmatpush1.msra.mxu0 %v1251
  %1279 = vmatprep.subr.mxu0 0.0
  %1280 = vmatpush1.msra.mxu0 %v1252
  %1281 = vmatprep.subr.mxu0 0.0
  %1282 = vmatpush1.msra.mxu0 %v1253
  %1283 = vmatprep.subr.mxu0 0.0
  %1284 = vmatpush1.msra.mxu0 %v1254
  %1285 = vmatprep.subr.mxu0 0.0
  %1286 = vmatpush1.msra.mxu0 %v1255
  %1287 = vmatprep.subr.mxu0 0.0
  %1288 = vmatpush1.msra.mxu0 %v1256
  %1289 = vmatprep.subr.mxu0 0.0
  %1290 = vmatpush1.msra.mxu0 %v1257
  %1291 = vmatprep.subr.mxu0 0.0
  %1292 = vmatpush1.msra.mxu0 %v1258
  %1293 = vmatprep.subr.mxu0 0.0
  %1294 = vmatpush1.msra.mxu0 %v1259
  %1295 = vmatprep.subr.mxu0 0.0
  %1296 = vmatpush1.msra.mxu0 %v1260
  %1297 = vmatprep.subr.mxu0 0.0
  %1298 = vmatpush1.msra.mxu0 %v1261
  %1299 = vmatprep.subr.mxu0 0.0
  %1300 = vmatpush1.msra.mxu0 %v1262
  %1301 = vmatprep.subr.mxu0 0.0
  %1302 = vmatpush1.msra.mxu0 %v1263
  %1303 = vmatprep.subr.mxu0 0.0
  %1304 = vmatpush1.msra.mxu0 0.0
  %1305 = vmatprep.subr.mxu0 0.0
  %1306 = vmatpush1.msra.mxu0 0.0
  %1307 = vmatprep.subr.mxu0 0.0
  %1308 = vmatpush1.msra.mxu0 0.0
  %1309 = vmatprep.subr.mxu0 0.0
  %1310 = vmatpush1.msra.mxu0 0.0
  %1311 = vmatprep.subr.mxu0 0.0
  %1312 = vmatpush1.msra.mxu0 0.0
  %1313 = vmatprep.subr.mxu0 0.0
  %1314 = vmatpush1.msra.mxu0 0.0
  %1315 = vmatprep.subr.mxu0 0.0
  %1316 = vmatpush1.msra.mxu0 0.0
  %1317 = vmatprep.subr.mxu0 0.0
  %1318 = vmatpush1.msra.mxu0 0.0
  %1319 = vmatprep.subr.mxu0 0.0
  %1320 = vmatpush1.msra.mxu0 0.0
  %1321 = vmatprep.subr.mxu0 0.0
  %1322 = vmatpush1.msra.mxu0 0.0
  %1323 = vmatprep.subr.mxu0 0.0
  %1324 = vmatpush1.msra.mxu0 0.0
  %1325 = vmatprep.subr.mxu0 0.0
  %1326 = vmatpush1.msra.mxu0 0.0
  %1327 = vmatprep.subr.mxu0 0.0
  %1328 = vmatpush1.msra.mxu0 0.0
  %1329 = vmatprep.subr.mxu0 0.0
  %1330 = vmatpush1.msra.mxu0 0.0
  %1331 = vmatprep.subr.mxu0 0.0
  %1332 = vmatpush1.msra.mxu0 0.0
  %1333 = vmatprep.subr.mxu0 0.0
  %1334 = vmatpush1.msra.mxu0 0.0
  %1335 = vmatprep.mubr.f32.mxu0 0.0
  %1336 = vmatmul.mubr.f32.gmra.mrb[0].mxu0 %v1247
  %v1337 = vpop.f32.mrb[0].mxu0
  %v1338 = vadd.f32 %v1269, %v1337
  %v1339 = vpop.f32.mrb[0].mxu0
  %1340 = vdwg.mxu0
  %v1341 = vadd.f32 %v1338, %v1157
  %v1342 = vld [vmem:[%s20] sm:$0x1]
  %v1343 = vld [vmem:[%s21] sm:$0x1]
  %v1344 = vsel %vm1129, %v1341, 0.0
  %1345 = vadd.xlane.f32.xlu0 %v1344
  %v1346 = vpop.xlane.xlu0 %1345
  %v1347 = vmul.f32 %v1346, %v1133
  %v1348 = vsub.f32 %v1341, %v1347
  %v1349 = vmul.f32 %v1348, %v1348
  %v1350 = vsel %vm1129, %v1349, 0.0
  %1351 = vadd.xlane.f32.xlu0 %v1350
  %v1352 = vpop.xlane.xlu0 %1351
  %v1353 = vmul.f32 %v1352, %v1133
  %v1354 = vadd.f32 %v1353, 1e-05
  %v1355 = vrsqrt.pop %v1354
  %v1356 = vmul.f32 %v1348, %v1355
  %v1358 = vlaneseq
  %v1359 = vshrl.u32 %v1358, 7
  %v1360 = vsub.s32 0, %v1359
  %v1361 = vrot.slane %v1342, %v1360
  %v1363 = vmul.f32 %v1356, %v1361
  %v1365 = vlaneseq
  %v1366 = vshrl.u32 %v1365, 7
  %v1367 = vsub.s32 0, %v1366
  %v1368 = vrot.slane %v1343, %v1367
  %v1370 = vadd.f32 %v1363, %v1368
  %1371 = vst.msk [vmem:[%s22] sm:$0xf] %vm1129, %v1370
  // Predicated region
  $region90: #{body.33} parent=0 // pred_check
    _
  $region91: #{body.33} parent=0 // pred_check_branch
    %1373 = sbr.rel (0) target = $region93
  $region92: #{body.33} parent=0 // pred_region
    _
  $region93: #{body.33} parent=0 // pred_fallthru
    _
  // Predicated region
  $region94: #{body.33} parent=0 // pred_check
    _
  $region95: #{body.33} parent=0 // pred_check_branch
    %1375 = sbr.rel (0) target = $region97
  $region96: #{body.33} parent=0 // pred_region
    _
  $region97: #{body.33} parent=0 // pred_fallthru
    _

</llo_original>
